<compile_context>
chip_gen: v5e
topology: v5e:2x2
jax: 0.10.0
libtpu: 0.0.40
codegen_flags: <defaults>
</compile_context>

<pallas_src>
import jax
import jax.numpy as jnp
from jax.experimental import pallas as pl
from jax.experimental.pallas import tpu as pltpu

# ----------------------------- model hyper-params -----------------------------
EMB_DIM = 32           # emb_dim (small synthetic size; 768 for real BERT)
SEQ_LEN = 16           # sequence length (>= max conv kernel size 10)
BATCH = 2
BATCH_TILE = 2         # per-grid-step batch tile; ~8-16 on v7x (64 MiB VMEM), 32-64 on v6e
MLP_DIMS = (64,)       # mlp_dims
DOMAIN_NUM = 3
NUM_EXPERT = 5
KERNEL_SIZES = (1, 2, 3, 5, 10)   # feature_kernel keys
CONV_CH = 64                      # 64 channels per kernel size
FEA_DIM = CONV_CH * len(KERNEL_SIZES)   # 320 (classifier input width)
EXP_CH = NUM_EXPERT * CONV_CH           # 320 (fused expert*channel lane width)
BN_EPS = 1e-5


# --------------------------------- the kernel ---------------------------------
def mdfend_kernel(x_ref, dom_ref,
                  gw1_ref, gb1_ref, gw2_ref, gb2_ref, gexp_ref,
                  cw1_ref, cb1_ref, pw1_ref,
                  cw2_ref, cb2_ref, pw2_ref,
                  cw3_ref, cb3_ref, pw3_ref,
                  cw5_ref, cb5_ref, pw5_ref,
                  cw10_ref, cb10_ref, pw10_ref,
                  mb1_ref, bns_ref, bnb_ref, mw2_ref, mb2_ref,
                  out_ref):
    x = x_ref[...]                              # [TB, L, E] bf16 (BERT last_hidden_state tile)
    TB, L, E = x.shape
    dom = dom_ref[...]                          # [TB, E] f32 (domain embedding)
    mlp = MLP_DIMS[0]

    # ---- gate = Softmax(Linear(ReLU(Linear(domain_embedding)))) over experts ----
    # (tiny; kept f32 for exact parity, elementwise math f32 for v5e)
    h = jnp.dot(dom, gw1_ref[...], preferred_element_type=jnp.float32) + gb1_ref[...]
    h = jnp.maximum(h, 0.0)
    logits = jnp.dot(h, gw2_ref[...], preferred_element_type=jnp.float32) + gb2_ref[...]
    logits = logits - jnp.max(logits, axis=1, keepdims=True)
    ez = jnp.exp(logits)
    gate = ez / jnp.sum(ez, axis=1, keepdims=True)              # [TB, NE], exact reciprocal
    # lane-dense gate: column e*64+c of (gate @ expander) == gate[:, e]  -> [TB, 320]
    gate_t = jnp.dot(gate, gexp_ref[...], preferred_element_type=jnp.float32)

    # ---- experts: 5 cnn_extractors fused along N; tap-accumulated matmuls ----
    x2d = x.reshape(TB * L, E)                  # built once, reused for every tap of every k
    conv = ((1, cw1_ref, cb1_ref, pw1_ref), (2, cw2_ref, cb2_ref, pw2_ref),
            (3, cw3_ref, cb3_ref, pw3_ref), (5, cw5_ref, cb5_ref, pw5_ref),
            (10, cw10_ref, cb10_ref, pw10_ref))

    h1 = jnp.zeros((TB, mlp), jnp.float32)      # classifier hidden, accumulated per kernel size
    for k, w_ref, b_ref, pw_ref in conv:
        lout = L - k + 1
        acc = None
        for j in range(k):
            # full-length product for tap j: [TB*L, E] @ [E, NE*C] (f32 acc on MXU)
            yj = jnp.dot(x2d, w_ref[j], preferred_element_type=jnp.float32)
            # align tap j by a static sublane slice, then running-sum (valid conv positions)
            yj = yj.reshape(TB, L, EXP_CH)[:, j:j + lout, :]
            acc = yj if acc is None else acc + yj
        # global max-pool over time; conv bias added AFTER the pool (exact)
        feat = jnp.max(acc, axis=1) + b_ref[...]                # [TB, NE*C]
        # lane-dense gating; expert-sum + concat folded into the classifier matmul
        gated = feat * gate_t                                   # [TB, NE*C]
        h1 = h1 + jnp.dot(gated.astype(jnp.bfloat16), pw_ref[...],
                          preferred_element_type=jnp.float32)   # [TB, mlp]

    # ---- classifier MLP(320, mlp_dims): (+b) -> BN(eval) -> ReLU -> Dropout(id) -> Linear ----
    h1 = h1 + mb1_ref[...]
    h1 = h1 * bns_ref[...] + bnb_ref[...]                        # folded BatchNorm1d (eval mode)
    h1 = jnp.maximum(h1, 0.0)
    # final Linear(mlp, 1) as a VPU/XLU row-dot (avoids an N=1 MXU matmul)
    logit = jnp.sum(h1 * mw2_ref[...], axis=1, keepdims=True) + mb2_ref[...]   # [TB, 1]
    out_ref[...] = jax.nn.sigmoid(logit)                         # sigmoid(label_pred)


# --------------------------------- wrapper -------------------------------------
def mdfend_forward(init_feature, content_masks, category, params, *, batch_tile=BATCH_TILE):
    del content_masks   # only feeds the unused-output MaskAttention branch
    B, L, E = init_feature.shape
    TB = min(batch_tile, B)
    assert B % TB == 0, (B, TB)
    assert TB == B or TB % 8 == 0, "batch tile must be the full batch or a multiple of 8"
    assert L >= max(KERNEL_SIZES)
    mlp = MLP_DIMS[0]

    # bf16 end-to-end activation path (no separate full-array cast pass at real dims)
    x = init_feature if init_feature.dtype == jnp.bfloat16 else init_feature.astype(jnp.bfloat16)
    dom = params['domain_table'][category].astype(jnp.float32)            # [B, E]

    # ---- host-side (weight-only, one-time) re-layouts ----
    const2d = lambda i: (0, 0)
    conv_args, conv_specs = [], []
    for ki, k in enumerate(KERNEL_SIZES):
        w = params['conv_w'][k]                                            # [NE, k, E, C]
        wf = jnp.transpose(w, (1, 2, 0, 3)).reshape(k, E, EXP_CH)          # (tap, emb, expert*ch)
        bf = params['conv_b'][k].reshape(1, EXP_CH)                        # (expert*ch)
        # expert-sum folded into the classifier: tile this kernel-size's cls_w1 rows over experts
        w1k = jnp.tile(params['cls_w1'][ki * CONV_CH:(ki + 1) * CONV_CH], (NUM_EXPERT, 1))
        conv_args += [wf.astype(jnp.bfloat16), bf.astype(jnp.float32), w1k.astype(jnp.bfloat16)]
        conv_specs += [pl.BlockSpec((k, E, EXP_CH), lambda i: (0, 0, 0)),
                       pl.BlockSpec((1, EXP_CH), const2d),
                       pl.BlockSpec((EXP_CH, mlp), const2d)]
    # gate expander: column e*64+c of (gate @ expander) equals gate[:, e]
    gate_expand = jnp.kron(jnp.eye(NUM_EXPERT, dtype=jnp.float32),
                           jnp.ones((1, CONV_CH), jnp.float32))            # [NE, EXP_CH]

    args = [x, dom,
            params['gate_w1'], params['gate_b1'].reshape(1, mlp),
            params['gate_w2'], params['gate_b2'].reshape(1, NUM_EXPERT),
            gate_expand,
            *conv_args,
            params['cls_b1'].reshape(1, mlp),
            params['bn_scale'].reshape(1, mlp), params['bn_shift'].reshape(1, mlp),
            params['cls_w2'].reshape(1, mlp), params['cls_b2'].reshape(1, 1)]

    in_specs = [pl.BlockSpec((TB, L, E), lambda i: (i, 0, 0)),             # streamed per batch tile
                pl.BlockSpec((TB, E), lambda i: (i, 0)),
                pl.BlockSpec((E, mlp), const2d),                           # weights: resident
                pl.BlockSpec((1, mlp), const2d),
                pl.BlockSpec((mlp, NUM_EXPERT), const2d),
                pl.BlockSpec((1, NUM_EXPERT), const2d),
                pl.BlockSpec((NUM_EXPERT, EXP_CH), const2d),
                *conv_specs,
                pl.BlockSpec((1, mlp), const2d),
                pl.BlockSpec((1, mlp), const2d),
                pl.BlockSpec((1, mlp), const2d),
                pl.BlockSpec((1, mlp), const2d),
                pl.BlockSpec((1, 1), const2d)]
    out_spec = pl.BlockSpec((TB, 1), lambda i: (i, 0))

    # advisory cost estimate so XLA can overlap the gather/layout glue with the kernel
    conv_flops = 2 * B * L * E * EXP_CH * sum(KERNEL_SIZES)
    cls_flops = 2 * B * (EXP_CH * mlp * len(KERNEL_SIZES) + mlp)
    gate_flops = 2 * B * (E * mlp + mlp * NUM_EXPERT + NUM_EXPERT * EXP_CH)
    bytes_accessed = sum(int(a.size) * a.dtype.itemsize for a in args) + B * 4
    cost = pl.CostEstimate(flops=int(conv_flops + cls_flops + gate_flops),
                           transcendentals=int(B * (NUM_EXPERT + 2)),
                           bytes_accessed=int(bytes_accessed))

    # scoped-VMEM sizing: only raised when the per-step working set outgrows the
    # conservative per-chip defaults (real E=768/L=512 dims); no-op at toy size
    weight_bytes = sum(int(a.size) * a.dtype.itemsize for a in args[2:])
    step_vmem = (2 * weight_bytes                       # blocked resident weights (2 buffers)
                 + 2 * (TB * L * E * 2 + TB * E * 4)    # double-buffered activation tiles
                 + 3 * TB * L * EXP_CH * 4)             # per-tap product / accumulator / slice
    cp_kwargs = dict(dimension_semantics=("parallel",))  # megacore-shard the batch axis (v7x)
    if step_vmem > 16 * 1024 * 1024:
        # TODO(synk): at real dims pick TB so this stays below the chip's VMEM (64 MiB on v7x).
        cp_kwargs["vmem_limit_bytes"] = int(min(step_vmem * 3 // 2, 60 * 1024 * 1024))

    out = pl.pallas_call(
        mdfend_kernel,
        out_shape=jax.ShapeDtypeStruct((B, 1), jnp.float32),
        grid=(B // TB,),
        in_specs=in_specs,
        out_specs=out_spec,
        compiler_params=pltpu.CompilerParams(**cp_kwargs),
        cost_estimate=cost,
    )(*args)
    return out[:, 0]                                      # .squeeze(1)


# ------------------------------ parameter init ---------------------------------
def init_params(key):
    keys = jax.random.split(key, 32)
    it = iter(keys)

    def nrm(shape, scale=0.05):
        return (scale * jax.random.normal(next(it), shape)).astype(jnp.float32)

    p = {}
    p['domain_table'] = nrm((DOMAIN_NUM, EMB_DIM), 0.5)       # nn.Embedding(domain_num, emb_dim)
    # gate: Linear(emb_dim, mlp_dims[-1]) -> ReLU -> Linear(mlp_dims[-1], num_expert) -> Softmax
    p['gate_w1'] = nrm((EMB_DIM, MLP_DIMS[-1])); p['gate_b1'] = nrm((MLP_DIMS[-1],))
    p['gate_w2'] = nrm((MLP_DIMS[-1], NUM_EXPERT)); p['gate_b2'] = nrm((NUM_EXPERT,))
    # experts: 5 x cnn_extractor, Conv1d(emb_dim, 64, k) for k in {1,2,3,5,10}
    p['conv_w'] = {}; p['conv_b'] = {}
    for k in KERNEL_SIZES:
        p['conv_w'][k] = nrm((NUM_EXPERT, k, EMB_DIM, CONV_CH))
        p['conv_b'][k] = nrm((NUM_EXPERT, CONV_CH))
    # classifier: MLP(320, mlp_dims, dropout)
    p['cls_w1'] = nrm((FEA_DIM, MLP_DIMS[0])); p['cls_b1'] = nrm((MLP_DIMS[0],))
    # BatchNorm1d (eval): running_mean=0, running_var=1, gamma=1, beta=0 folded to scale/shift
    p['bn_scale'] = (jnp.ones((MLP_DIMS[0],)) / jnp.sqrt(1.0 + BN_EPS)).astype(jnp.float32)
    p['bn_shift'] = jnp.zeros((MLP_DIMS[0],), jnp.float32)
    p['cls_w2'] = nrm((MLP_DIMS[0], 1)); p['cls_b2'] = nrm((1,))
    return p


# ------------------------------ pure-JAX reference ------------------------------
def mdfend_reference(init_feature, category, params):
    x = init_feature
    dom = params['domain_table'][category]
    h = jnp.maximum(dom @ params['gate_w1'] + params['gate_b1'], 0.0)
    gate = jax.nn.softmax(h @ params['gate_w2'] + params['gate_b2'], axis=1)
    B, L, E = x.shape
    feats = []
    for k in KERNEL_SIZES:
        w, b = params['conv_w'][k], params['conv_b'][k]
        lout = L - k + 1
        shared_k = jnp.zeros((B, CONV_CH))
        for ei in range(NUM_EXPERT):
            acc = jnp.zeros((B, lout, CONV_CH))
            for j in range(k):
                acc = acc + jnp.einsum('ble,ec->blc', x[:, j:j + lout, :], w[ei, j])
            acc = acc + b[ei]
            shared_k = shared_k + jnp.max(acc, axis=1) * gate[:, ei][:, None]
        feats.append(shared_k)
    shared = jnp.concatenate(feats, axis=1)
    h1 = shared @ params['cls_w1'] + params['cls_b1']
    h1 = jnp.maximum(h1 * params['bn_scale'] + params['bn_shift'], 0.0)
    logit = h1 @ params['cls_w2'] + params['cls_b2']
    return jax.nn.sigmoid(logit[:, 0])


# ------------------------------------ main --------------------------------------
if __name__ == "__main__":
    key = jax.random.PRNGKey(0)
    kp, kx, kc = jax.random.split(key, 3)
    params = init_params(kp)

    x_f32 = jax.random.normal(kx, (BATCH, SEQ_LEN, EMB_DIM), jnp.float32)
    init_feature = x_f32.astype(jnp.bfloat16)      # frozen-BERT activations fed bf16 end-to-end
    content_masks = jnp.ones((BATCH, SEQ_LEN), jnp.int32)
    category = jax.random.randint(kc, (BATCH,), 0, DOMAIN_NUM)

    out = mdfend_forward(init_feature, content_masks, category, params)
    out = jax.block_until_ready(out)

    ref = mdfend_reference(init_feature.astype(jnp.float32), category, params)
    assert out.shape == (BATCH,), out.shape
    assert jnp.allclose(out, ref, atol=2e-2, rtol=2e-2), (out, ref)
    print("KERNEL_OK")
</pallas_src>

<mosaic_0001>
module attributes {stable_mosaic.version = 11 : i64} {
  func.func @mdfend_kernel(%arg0: i32, %arg1: memref<2x16x32xbf16, #tpu.memory_space<vmem>>, %arg2: memref<2x32xf32, #tpu.memory_space<vmem>>, %arg3: memref<32x64xf32, #tpu.memory_space<vmem>>, %arg4: memref<1x64xf32, #tpu.memory_space<vmem>>, %arg5: memref<64x5xf32, #tpu.memory_space<vmem>>, %arg6: memref<1x5xf32, #tpu.memory_space<vmem>>, %arg7: memref<5x320xf32, #tpu.memory_space<vmem>>, %arg8: memref<1x32x320xbf16, #tpu.memory_space<vmem>>, %arg9: memref<1x320xf32, #tpu.memory_space<vmem>>, %arg10: memref<320x64xbf16, #tpu.memory_space<vmem>>, %arg11: memref<2x32x320xbf16, #tpu.memory_space<vmem>>, %arg12: memref<1x320xf32, #tpu.memory_space<vmem>>, %arg13: memref<320x64xbf16, #tpu.memory_space<vmem>>, %arg14: memref<3x32x320xbf16, #tpu.memory_space<vmem>>, %arg15: memref<1x320xf32, #tpu.memory_space<vmem>>, %arg16: memref<320x64xbf16, #tpu.memory_space<vmem>>, %arg17: memref<5x32x320xbf16, #tpu.memory_space<vmem>>, %arg18: memref<1x320xf32, #tpu.memory_space<vmem>>, %arg19: memref<320x64xbf16, #tpu.memory_space<vmem>>, %arg20: memref<10x32x320xbf16, #tpu.memory_space<vmem>>, %arg21: memref<1x320xf32, #tpu.memory_space<vmem>>, %arg22: memref<320x64xbf16, #tpu.memory_space<vmem>>, %arg23: memref<1x64xf32, #tpu.memory_space<vmem>>, %arg24: memref<1x64xf32, #tpu.memory_space<vmem>>, %arg25: memref<1x64xf32, #tpu.memory_space<vmem>>, %arg26: memref<1x64xf32, #tpu.memory_space<vmem>>, %arg27: memref<1x1xf32, #tpu.memory_space<vmem>>, %arg28: memref<2x1xf32, #tpu.memory_space<vmem>>) attributes {dimension_semantics = [#tpu.dimension_semantics<parallel>], iteration_bounds = array<i64: 1>, scalar_prefetch = 0 : i64, scratch_operands = 0 : i64, tpu.core_type = #tpu.core_type<tc>, window_params = [{transform_indices = @transform_0, window_bounds = array<i64: 2, 16, 32>}, {transform_indices = @transform_1, window_bounds = array<i64: 2, 32>}, {pipeline_mode = #tpu.pipeline_mode<synchronous>, transform_indices = @transform_2, window_bounds = array<i64: 32, 64>}, {pipeline_mode = #tpu.pipeline_mode<synchronous>, transform_indices = @transform_3, window_bounds = array<i64: 1, 64>}, {pipeline_mode = #tpu.pipeline_mode<synchronous>, transform_indices = @transform_4, window_bounds = array<i64: 64, 5>}, {pipeline_mode = #tpu.pipeline_mode<synchronous>, transform_indices = @transform_5, window_bounds = array<i64: 1, 5>}, {pipeline_mode = #tpu.pipeline_mode<synchronous>, transform_indices = @transform_6, window_bounds = array<i64: 5, 320>}, {pipeline_mode = #tpu.pipeline_mode<synchronous>, transform_indices = @transform_7, window_bounds = array<i64: 1, 32, 320>}, {pipeline_mode = #tpu.pipeline_mode<synchronous>, transform_indices = @transform_8, window_bounds = array<i64: 1, 320>}, {pipeline_mode = #tpu.pipeline_mode<synchronous>, transform_indices = @transform_9, window_bounds = array<i64: 320, 64>}, {pipeline_mode = #tpu.pipeline_mode<synchronous>, transform_indices = @transform_10, window_bounds = array<i64: 2, 32, 320>}, {pipeline_mode = #tpu.pipeline_mode<synchronous>, transform_indices = @transform_11, window_bounds = array<i64: 1, 320>}, {pipeline_mode = #tpu.pipeline_mode<synchronous>, transform_indices = @transform_12, window_bounds = array<i64: 320, 64>}, {pipeline_mode = #tpu.pipeline_mode<synchronous>, transform_indices = @transform_13, window_bounds = array<i64: 3, 32, 320>}, {pipeline_mode = #tpu.pipeline_mode<synchronous>, transform_indices = @transform_14, window_bounds = array<i64: 1, 320>}, {pipeline_mode = #tpu.pipeline_mode<synchronous>, transform_indices = @transform_15, window_bounds = array<i64: 320, 64>}, {pipeline_mode = #tpu.pipeline_mode<synchronous>, transform_indices = @transform_16, window_bounds = array<i64: 5, 32, 320>}, {pipeline_mode = #tpu.pipeline_mode<synchronous>, transform_indices = @transform_17, window_bounds = array<i64: 1, 320>}, {pipeline_mode = #tpu.pipeline_mode<synchronous>, transform_indices = @transform_18, window_bounds = array<i64: 320, 64>}, {pipeline_mode = #tpu.pipeline_mode<synchronous>, transform_indices = @transform_19, window_bounds = array<i64: 10, 32, 320>}, {pipeline_mode = #tpu.pipeline_mode<synchronous>, transform_indices = @transform_20, window_bounds = array<i64: 1, 320>}, {pipeline_mode = #tpu.pipeline_mode<synchronous>, transform_indices = @transform_21, window_bounds = array<i64: 320, 64>}, {pipeline_mode = #tpu.pipeline_mode<synchronous>, transform_indices = @transform_22, window_bounds = array<i64: 1, 64>}, {pipeline_mode = #tpu.pipeline_mode<synchronous>, transform_indices = @transform_23, window_bounds = array<i64: 1, 64>}, {pipeline_mode = #tpu.pipeline_mode<synchronous>, transform_indices = @transform_24, window_bounds = array<i64: 1, 64>}, {pipeline_mode = #tpu.pipeline_mode<synchronous>, transform_indices = @transform_25, window_bounds = array<i64: 1, 64>}, {pipeline_mode = #tpu.pipeline_mode<synchronous>, transform_indices = @transform_26, window_bounds = array<i64: 1, 1>}, {transform_indices = @transform_27, window_bounds = array<i64: 2, 1>}]} {
    %c0 = arith.constant 0 : index
    %c0_0 = arith.constant 0 : index
    %c0_1 = arith.constant 0 : index
    %0 = vector.load %arg1[%c0, %c0_0, %c0_1] : memref<2x16x32xbf16, #tpu.memory_space<vmem>>, vector<2x16x32xbf16>
    %c0_2 = arith.constant 0 : index
    %c0_3 = arith.constant 0 : index
    %1 = vector.load %arg2[%c0_2, %c0_3] : memref<2x32xf32, #tpu.memory_space<vmem>>, vector<2x32xf32>
    %c0_4 = arith.constant 0 : index
    %c0_5 = arith.constant 0 : index
    %2 = vector.load %arg3[%c0_4, %c0_5] : memref<32x64xf32, #tpu.memory_space<vmem>>, vector<32x64xf32>
    %cst = arith.constant dense<0.000000e+00> : vector<2x64xf32>
    %3 = tpu.matmul %1, %2, %cst {dimension_numbers = #tpu.dot_dimension_numbers<[1], [0], [0], [1], [0, 0, 1, 1], [], []>} : vector<2x32xf32>, vector<32x64xf32>, vector<2x64xf32> -> vector<2x64xf32>
    %c0_6 = arith.constant 0 : index
    %c0_7 = arith.constant 0 : index
    %4 = vector.load %arg4[%c0_6, %c0_7] : memref<1x64xf32, #tpu.memory_space<vmem>>, vector<1x64xf32>
    %5 = vector.broadcast %4 : vector<1x64xf32> to vector<2x64xf32>
    %6 = arith.addf %3, %5 : vector<2x64xf32>
    %cst_8 = arith.constant 0.000000e+00 : f32
    %7 = vector.broadcast %cst_8 : f32 to vector<2x64xf32>
    %8 = arith.maximumf %6, %7 : vector<2x64xf32>
    %c0_9 = arith.constant 0 : index
    %c0_10 = arith.constant 0 : index
    %9 = vector.load %arg5[%c0_9, %c0_10] : memref<64x5xf32, #tpu.memory_space<vmem>>, vector<64x5xf32>
    %cst_11 = arith.constant dense<0.000000e+00> : vector<2x5xf32>
    %10 = tpu.matmul %8, %9, %cst_11 {dimension_numbers = #tpu.dot_dimension_numbers<[1], [0], [0], [1], [0, 0, 1, 1], [], []>} : vector<2x64xf32>, vector<64x5xf32>, vector<2x5xf32> -> vector<2x5xf32>
    %c0_12 = arith.constant 0 : index
    %c0_13 = arith.constant 0 : index
    %11 = vector.load %arg6[%c0_12, %c0_13] : memref<1x5xf32, #tpu.memory_space<vmem>>, vector<1x5xf32>
    %12 = vector.broadcast %11 : vector<1x5xf32> to vector<2x5xf32>
    %13 = arith.addf %10, %12 : vector<2x5xf32>
    %cst_14 = arith.constant dense<0xFF800000> : vector<2xf32>
    %14 = vector.multi_reduction <maximumf>, %13, %cst_14 [1] : vector<2x5xf32> to vector<2xf32>
    %15 = vector.shape_cast %14 : vector<2xf32> to vector<2x1xf32>
    %16 = vector.broadcast %15 : vector<2x1xf32> to vector<2x5xf32>
    %17 = arith.subf %13, %16 : vector<2x5xf32>
    %18 = math.exp %17 : vector<2x5xf32>
    %cst_15 = arith.constant dense<0.000000e+00> : vector<2xf32>
    %19 = vector.multi_reduction <add>, %18, %cst_15 [1] : vector<2x5xf32> to vector<2xf32>
    %20 = vector.shape_cast %19 : vector<2xf32> to vector<2x1xf32>
    %21 = vector.broadcast %20 : vector<2x1xf32> to vector<2x5xf32>
    %22 = arith.divf %18, %21 : vector<2x5xf32>
    %c0_16 = arith.constant 0 : index
    %c0_17 = arith.constant 0 : index
    %23 = vector.load %arg7[%c0_16, %c0_17] : memref<5x320xf32, #tpu.memory_space<vmem>>, vector<5x320xf32>
    %cst_18 = arith.constant dense<0.000000e+00> : vector<2x320xf32>
    %24 = tpu.matmul %22, %23, %cst_18 {dimension_numbers = #tpu.dot_dimension_numbers<[1], [0], [0], [1], [0, 0, 1, 1], [], []>} : vector<2x5xf32>, vector<5x320xf32>, vector<2x320xf32> -> vector<2x320xf32>
    %25 = vector.shape_cast %0 : vector<2x16x32xbf16> to vector<32x32xbf16>
    %cst_19 = arith.constant 0.000000e+00 : f32
    %26 = vector.broadcast %cst_19 : f32 to vector<2x64xf32>
    %c0_20 = arith.constant 0 : index
    %c0_21 = arith.constant 0 : index
    %c0_22 = arith.constant 0 : index
    %27 = vector.load %arg8[%c0_20, %c0_21, %c0_22] : memref<1x32x320xbf16, #tpu.memory_space<vmem>>, vector<1x32x320xbf16>
    %28 = vector.shape_cast %27 : vector<1x32x320xbf16> to vector<32x320xbf16>
    %cst_23 = arith.constant dense<0.000000e+00> : vector<32x320xf32>
    %29 = tpu.matmul %25, %28, %cst_23 {dimension_numbers = #tpu.dot_dimension_numbers<[1], [0], [0], [1], [0, 0, 1, 1], [], []>} : vector<32x32xbf16>, vector<32x320xbf16>, vector<32x320xf32> -> vector<32x320xf32>
    %30 = vector.shape_cast %29 : vector<32x320xf32> to vector<2x16x320xf32>
    %cst_24 = arith.constant dense<0xFF800000> : vector<2x320xf32>
    %31 = vector.multi_reduction <maximumf>, %30, %cst_24 [1] : vector<2x16x320xf32> to vector<2x320xf32>
    %c0_25 = arith.constant 0 : index
    %c0_26 = arith.constant 0 : index
    %32 = vector.load %arg9[%c0_25, %c0_26] : memref<1x320xf32, #tpu.memory_space<vmem>>, vector<1x320xf32>
    %33 = vector.broadcast %32 : vector<1x320xf32> to vector<2x320xf32>
    %34 = arith.addf %31, %33 : vector<2x320xf32>
    %35 = arith.mulf %34, %24 : vector<2x320xf32>
    %36 = arith.truncf %35 : vector<2x320xf32> to vector<2x320xbf16>
    %c0_27 = arith.constant 0 : index
    %c0_28 = arith.constant 0 : index
    %37 = vector.load %arg10[%c0_27, %c0_28] : memref<320x64xbf16, #tpu.memory_space<vmem>>, vector<320x64xbf16>
    %cst_29 = arith.constant dense<0.000000e+00> : vector<2x64xf32>
    %38 = tpu.matmul %36, %37, %cst_29 {dimension_numbers = #tpu.dot_dimension_numbers<[1], [0], [0], [1], [0, 0, 1, 1], [], []>} : vector<2x320xbf16>, vector<320x64xbf16>, vector<2x64xf32> -> vector<2x64xf32>
    %39 = arith.addf %26, %38 : vector<2x64xf32>
    %c0_30 = arith.constant 0 : index
    %c0_31 = arith.constant 0 : index
    %c0_32 = arith.constant 0 : index
    %40 = vector.load %arg11[%c0_30, %c0_31, %c0_32] : memref<2x32x320xbf16, #tpu.memory_space<vmem>>, vector<1x32x320xbf16>
    %41 = vector.shape_cast %40 : vector<1x32x320xbf16> to vector<32x320xbf16>
    %cst_33 = arith.constant dense<0.000000e+00> : vector<32x320xf32>
    %42 = tpu.matmul %25, %41, %cst_33 {dimension_numbers = #tpu.dot_dimension_numbers<[1], [0], [0], [1], [0, 0, 1, 1], [], []>} : vector<32x32xbf16>, vector<32x320xbf16>, vector<32x320xf32> -> vector<32x320xf32>
    %43 = vector.shape_cast %42 : vector<32x320xf32> to vector<2x16x320xf32>
    %44 = vector.extract_strided_slice %43 {offsets = [0, 0, 0], sizes = [2, 15, 320], strides = [1, 1, 1]} : vector<2x16x320xf32> to vector<2x15x320xf32>
    %c1 = arith.constant 1 : index
    %c0_34 = arith.constant 0 : index
    %c0_35 = arith.constant 0 : index
    %45 = vector.load %arg11[%c1, %c0_34, %c0_35] : memref<2x32x320xbf16, #tpu.memory_space<vmem>>, vector<1x32x320xbf16>
    %46 = vector.shape_cast %45 : vector<1x32x320xbf16> to vector<32x320xbf16>
    %cst_36 = arith.constant dense<0.000000e+00> : vector<32x320xf32>
    %47 = tpu.matmul %25, %46, %cst_36 {dimension_numbers = #tpu.dot_dimension_numbers<[1], [0], [0], [1], [0, 0, 1, 1], [], []>} : vector<32x32xbf16>, vector<32x320xbf16>, vector<32x320xf32> -> vector<32x320xf32>
    %48 = vector.shape_cast %47 : vector<32x320xf32> to vector<2x16x320xf32>
    %49 = vector.extract_strided_slice %48 {offsets = [0, 1, 0], sizes = [2, 15, 320], strides = [1, 1, 1]} : vector<2x16x320xf32> to vector<2x15x320xf32>
    %50 = arith.addf %44, %49 : vector<2x15x320xf32>
    %cst_37 = arith.constant dense<0xFF800000> : vector<2x320xf32>
    %51 = vector.multi_reduction <maximumf>, %50, %cst_37 [1] : vector<2x15x320xf32> to vector<2x320xf32>
    %c0_38 = arith.constant 0 : index
    %c0_39 = arith.constant 0 : index
    %52 = vector.load %arg12[%c0_38, %c0_39] : memref<1x320xf32, #tpu.memory_space<vmem>>, vector<1x320xf32>
    %53 = vector.broadcast %52 : vector<1x320xf32> to vector<2x320xf32>
    %54 = arith.addf %51, %53 : vector<2x320xf32>
    %55 = arith.mulf %54, %24 : vector<2x320xf32>
    %56 = arith.truncf %55 : vector<2x320xf32> to vector<2x320xbf16>
    %c0_40 = arith.constant 0 : index
    %c0_41 = arith.constant 0 : index
    %57 = vector.load %arg13[%c0_40, %c0_41] : memref<320x64xbf16, #tpu.memory_space<vmem>>, vector<320x64xbf16>
    %cst_42 = arith.constant dense<0.000000e+00> : vector<2x64xf32>
    %58 = tpu.matmul %56, %57, %cst_42 {dimension_numbers = #tpu.dot_dimension_numbers<[1], [0], [0], [1], [0, 0, 1, 1], [], []>} : vector<2x320xbf16>, vector<320x64xbf16>, vector<2x64xf32> -> vector<2x64xf32>
    %59 = arith.addf %39, %58 : vector<2x64xf32>
    %c0_43 = arith.constant 0 : index
    %c0_44 = arith.constant 0 : index
    %c0_45 = arith.constant 0 : index
    %60 = vector.load %arg14[%c0_43, %c0_44, %c0_45] : memref<3x32x320xbf16, #tpu.memory_space<vmem>>, vector<1x32x320xbf16>
    %61 = vector.shape_cast %60 : vector<1x32x320xbf16> to vector<32x320xbf16>
    %cst_46 = arith.constant dense<0.000000e+00> : vector<32x320xf32>
    %62 = tpu.matmul %25, %61, %cst_46 {dimension_numbers = #tpu.dot_dimension_numbers<[1], [0], [0], [1], [0, 0, 1, 1], [], []>} : vector<32x32xbf16>, vector<32x320xbf16>, vector<32x320xf32> -> vector<32x320xf32>
    %63 = vector.shape_cast %62 : vector<32x320xf32> to vector<2x16x320xf32>
    %64 = vector.extract_strided_slice %63 {offsets = [0, 0, 0], sizes = [2, 14, 320], strides = [1, 1, 1]} : vector<2x16x320xf32> to vector<2x14x320xf32>
    %c1_47 = arith.constant 1 : index
    %c0_48 = arith.constant 0 : index
    %c0_49 = arith.constant 0 : index
    %65 = vector.load %arg14[%c1_47, %c0_48, %c0_49] : memref<3x32x320xbf16, #tpu.memory_space<vmem>>, vector<1x32x320xbf16>
    %66 = vector.shape_cast %65 : vector<1x32x320xbf16> to vector<32x320xbf16>
    %cst_50 = arith.constant dense<0.000000e+00> : vector<32x320xf32>
    %67 = tpu.matmul %25, %66, %cst_50 {dimension_numbers = #tpu.dot_dimension_numbers<[1], [0], [0], [1], [0, 0, 1, 1], [], []>} : vector<32x32xbf16>, vector<32x320xbf16>, vector<32x320xf32> -> vector<32x320xf32>
    %68 = vector.shape_cast %67 : vector<32x320xf32> to vector<2x16x320xf32>
    %69 = vector.extract_strided_slice %68 {offsets = [0, 1, 0], sizes = [2, 14, 320], strides = [1, 1, 1]} : vector<2x16x320xf32> to vector<2x14x320xf32>
    %70 = arith.addf %64, %69 : vector<2x14x320xf32>
    %c2 = arith.constant 2 : index
    %c0_51 = arith.constant 0 : index
    %c0_52 = arith.constant 0 : index
    %71 = vector.load %arg14[%c2, %c0_51, %c0_52] : memref<3x32x320xbf16, #tpu.memory_space<vmem>>, vector<1x32x320xbf16>
    %72 = vector.shape_cast %71 : vector<1x32x320xbf16> to vector<32x320xbf16>
    %cst_53 = arith.constant dense<0.000000e+00> : vector<32x320xf32>
    %73 = tpu.matmul %25, %72, %cst_53 {dimension_numbers = #tpu.dot_dimension_numbers<[1], [0], [0], [1], [0, 0, 1, 1], [], []>} : vector<32x32xbf16>, vector<32x320xbf16>, vector<32x320xf32> -> vector<32x320xf32>
    %74 = vector.shape_cast %73 : vector<32x320xf32> to vector<2x16x320xf32>
    %75 = vector.extract_strided_slice %74 {offsets = [0, 2, 0], sizes = [2, 14, 320], strides = [1, 1, 1]} : vector<2x16x320xf32> to vector<2x14x320xf32>
    %76 = arith.addf %70, %75 : vector<2x14x320xf32>
    %cst_54 = arith.constant dense<0xFF800000> : vector<2x320xf32>
    %77 = vector.multi_reduction <maximumf>, %76, %cst_54 [1] : vector<2x14x320xf32> to vector<2x320xf32>
    %c0_55 = arith.constant 0 : index
    %c0_56 = arith.constant 0 : index
    %78 = vector.load %arg15[%c0_55, %c0_56] : memref<1x320xf32, #tpu.memory_space<vmem>>, vector<1x320xf32>
    %79 = vector.broadcast %78 : vector<1x320xf32> to vector<2x320xf32>
    %80 = arith.addf %77, %79 : vector<2x320xf32>
    %81 = arith.mulf %80, %24 : vector<2x320xf32>
    %82 = arith.truncf %81 : vector<2x320xf32> to vector<2x320xbf16>
    %c0_57 = arith.constant 0 : index
    %c0_58 = arith.constant 0 : index
    %83 = vector.load %arg16[%c0_57, %c0_58] : memref<320x64xbf16, #tpu.memory_space<vmem>>, vector<320x64xbf16>
    %cst_59 = arith.constant dense<0.000000e+00> : vector<2x64xf32>
    %84 = tpu.matmul %82, %83, %cst_59 {dimension_numbers = #tpu.dot_dimension_numbers<[1], [0], [0], [1], [0, 0, 1, 1], [], []>} : vector<2x320xbf16>, vector<320x64xbf16>, vector<2x64xf32> -> vector<2x64xf32>
    %85 = arith.addf %59, %84 : vector<2x64xf32>
    %c0_60 = arith.constant 0 : index
    %c0_61 = arith.constant 0 : index
    %c0_62 = arith.constant 0 : index
    %86 = vector.load %arg17[%c0_60, %c0_61, %c0_62] : memref<5x32x320xbf16, #tpu.memory_space<vmem>>, vector<1x32x320xbf16>
    %87 = vector.shape_cast %86 : vector<1x32x320xbf16> to vector<32x320xbf16>
    %cst_63 = arith.constant dense<0.000000e+00> : vector<32x320xf32>
    %88 = tpu.matmul %25, %87, %cst_63 {dimension_numbers = #tpu.dot_dimension_numbers<[1], [0], [0], [1], [0, 0, 1, 1], [], []>} : vector<32x32xbf16>, vector<32x320xbf16>, vector<32x320xf32> -> vector<32x320xf32>
    %89 = vector.shape_cast %88 : vector<32x320xf32> to vector<2x16x320xf32>
    %90 = vector.extract_strided_slice %89 {offsets = [0, 0, 0], sizes = [2, 12, 320], strides = [1, 1, 1]} : vector<2x16x320xf32> to vector<2x12x320xf32>
    %c1_64 = arith.constant 1 : index
    %c0_65 = arith.constant 0 : index
    %c0_66 = arith.constant 0 : index
    %91 = vector.load %arg17[%c1_64, %c0_65, %c0_66] : memref<5x32x320xbf16, #tpu.memory_space<vmem>>, vector<1x32x320xbf16>
    %92 = vector.shape_cast %91 : vector<1x32x320xbf16> to vector<32x320xbf16>
    %cst_67 = arith.constant dense<0.000000e+00> : vector<32x320xf32>
    %93 = tpu.matmul %25, %92, %cst_67 {dimension_numbers = #tpu.dot_dimension_numbers<[1], [0], [0], [1], [0, 0, 1, 1], [], []>} : vector<32x32xbf16>, vector<32x320xbf16>, vector<32x320xf32> -> vector<32x320xf32>
    %94 = vector.shape_cast %93 : vector<32x320xf32> to vector<2x16x320xf32>
    %95 = vector.extract_strided_slice %94 {offsets = [0, 1, 0], sizes = [2, 12, 320], strides = [1, 1, 1]} : vector<2x16x320xf32> to vector<2x12x320xf32>
    %96 = arith.addf %90, %95 : vector<2x12x320xf32>
    %c2_68 = arith.constant 2 : index
    %c0_69 = arith.constant 0 : index
    %c0_70 = arith.constant 0 : index
    %97 = vector.load %arg17[%c2_68, %c0_69, %c0_70] : memref<5x32x320xbf16, #tpu.memory_space<vmem>>, vector<1x32x320xbf16>
    %98 = vector.shape_cast %97 : vector<1x32x320xbf16> to vector<32x320xbf16>
    %cst_71 = arith.constant dense<0.000000e+00> : vector<32x320xf32>
    %99 = tpu.matmul %25, %98, %cst_71 {dimension_numbers = #tpu.dot_dimension_numbers<[1], [0], [0], [1], [0, 0, 1, 1], [], []>} : vector<32x32xbf16>, vector<32x320xbf16>, vector<32x320xf32> -> vector<32x320xf32>
    %100 = vector.shape_cast %99 : vector<32x320xf32> to vector<2x16x320xf32>
    %101 = vector.extract_strided_slice %100 {offsets = [0, 2, 0], sizes = [2, 12, 320], strides = [1, 1, 1]} : vector<2x16x320xf32> to vector<2x12x320xf32>
    %102 = arith.addf %96, %101 : vector<2x12x320xf32>
    %c3 = arith.constant 3 : index
    %c0_72 = arith.constant 0 : index
    %c0_73 = arith.constant 0 : index
    %103 = vector.load %arg17[%c3, %c0_72, %c0_73] : memref<5x32x320xbf16, #tpu.memory_space<vmem>>, vector<1x32x320xbf16>
    %104 = vector.shape_cast %103 : vector<1x32x320xbf16> to vector<32x320xbf16>
    %cst_74 = arith.constant dense<0.000000e+00> : vector<32x320xf32>
    %105 = tpu.matmul %25, %104, %cst_74 {dimension_numbers = #tpu.dot_dimension_numbers<[1], [0], [0], [1], [0, 0, 1, 1], [], []>} : vector<32x32xbf16>, vector<32x320xbf16>, vector<32x320xf32> -> vector<32x320xf32>
    %106 = vector.shape_cast %105 : vector<32x320xf32> to vector<2x16x320xf32>
    %107 = vector.extract_strided_slice %106 {offsets = [0, 3, 0], sizes = [2, 12, 320], strides = [1, 1, 1]} : vector<2x16x320xf32> to vector<2x12x320xf32>
    %108 = arith.addf %102, %107 : vector<2x12x320xf32>
    %c4 = arith.constant 4 : index
    %c0_75 = arith.constant 0 : index
    %c0_76 = arith.constant 0 : index
    %109 = vector.load %arg17[%c4, %c0_75, %c0_76] : memref<5x32x320xbf16, #tpu.memory_space<vmem>>, vector<1x32x320xbf16>
    %110 = vector.shape_cast %109 : vector<1x32x320xbf16> to vector<32x320xbf16>
    %cst_77 = arith.constant dense<0.000000e+00> : vector<32x320xf32>
    %111 = tpu.matmul %25, %110, %cst_77 {dimension_numbers = #tpu.dot_dimension_numbers<[1], [0], [0], [1], [0, 0, 1, 1], [], []>} : vector<32x32xbf16>, vector<32x320xbf16>, vector<32x320xf32> -> vector<32x320xf32>
    %112 = vector.shape_cast %111 : vector<32x320xf32> to vector<2x16x320xf32>
    %113 = vector.extract_strided_slice %112 {offsets = [0, 4, 0], sizes = [2, 12, 320], strides = [1, 1, 1]} : vector<2x16x320xf32> to vector<2x12x320xf32>
    %114 = arith.addf %108, %113 : vector<2x12x320xf32>
    %cst_78 = arith.constant dense<0xFF800000> : vector<2x320xf32>
    %115 = vector.multi_reduction <maximumf>, %114, %cst_78 [1] : vector<2x12x320xf32> to vector<2x320xf32>
    %c0_79 = arith.constant 0 : index
    %c0_80 = arith.constant 0 : index
    %116 = vector.load %arg18[%c0_79, %c0_80] : memref<1x320xf32, #tpu.memory_space<vmem>>, vector<1x320xf32>
    %117 = vector.broadcast %116 : vector<1x320xf32> to vector<2x320xf32>
    %118 = arith.addf %115, %117 : vector<2x320xf32>
    %119 = arith.mulf %118, %24 : vector<2x320xf32>
    %120 = arith.truncf %119 : vector<2x320xf32> to vector<2x320xbf16>
    %c0_81 = arith.constant 0 : index
    %c0_82 = arith.constant 0 : index
    %121 = vector.load %arg19[%c0_81, %c0_82] : memref<320x64xbf16, #tpu.memory_space<vmem>>, vector<320x64xbf16>
    %cst_83 = arith.constant dense<0.000000e+00> : vector<2x64xf32>
    %122 = tpu.matmul %120, %121, %cst_83 {dimension_numbers = #tpu.dot_dimension_numbers<[1], [0], [0], [1], [0, 0, 1, 1], [], []>} : vector<2x320xbf16>, vector<320x64xbf16>, vector<2x64xf32> -> vector<2x64xf32>
    %123 = arith.addf %85, %122 : vector<2x64xf32>
    %c0_84 = arith.constant 0 : index
    %c0_85 = arith.constant 0 : index
    %c0_86 = arith.constant 0 : index
    %124 = vector.load %arg20[%c0_84, %c0_85, %c0_86] : memref<10x32x320xbf16, #tpu.memory_space<vmem>>, vector<1x32x320xbf16>
    %125 = vector.shape_cast %124 : vector<1x32x320xbf16> to vector<32x320xbf16>
    %cst_87 = arith.constant dense<0.000000e+00> : vector<32x320xf32>
    %126 = tpu.matmul %25, %125, %cst_87 {dimension_numbers = #tpu.dot_dimension_numbers<[1], [0], [0], [1], [0, 0, 1, 1], [], []>} : vector<32x32xbf16>, vector<32x320xbf16>, vector<32x320xf32> -> vector<32x320xf32>
    %127 = vector.shape_cast %126 : vector<32x320xf32> to vector<2x16x320xf32>
    %128 = vector.extract_strided_slice %127 {offsets = [0, 0, 0], sizes = [2, 7, 320], strides = [1, 1, 1]} : vector<2x16x320xf32> to vector<2x7x320xf32>
    %c1_88 = arith.constant 1 : index
    %c0_89 = arith.constant 0 : index
    %c0_90 = arith.constant 0 : index
    %129 = vector.load %arg20[%c1_88, %c0_89, %c0_90] : memref<10x32x320xbf16, #tpu.memory_space<vmem>>, vector<1x32x320xbf16>
    %130 = vector.shape_cast %129 : vector<1x32x320xbf16> to vector<32x320xbf16>
    %cst_91 = arith.constant dense<0.000000e+00> : vector<32x320xf32>
    %131 = tpu.matmul %25, %130, %cst_91 {dimension_numbers = #tpu.dot_dimension_numbers<[1], [0], [0], [1], [0, 0, 1, 1], [], []>} : vector<32x32xbf16>, vector<32x320xbf16>, vector<32x320xf32> -> vector<32x320xf32>
    %132 = vector.shape_cast %131 : vector<32x320xf32> to vector<2x16x320xf32>
    %133 = vector.extract_strided_slice %132 {offsets = [0, 1, 0], sizes = [2, 7, 320], strides = [1, 1, 1]} : vector<2x16x320xf32> to vector<2x7x320xf32>
    %134 = arith.addf %128, %133 : vector<2x7x320xf32>
    %c2_92 = arith.constant 2 : index
    %c0_93 = arith.constant 0 : index
    %c0_94 = arith.constant 0 : index
    %135 = vector.load %arg20[%c2_92, %c0_93, %c0_94] : memref<10x32x320xbf16, #tpu.memory_space<vmem>>, vector<1x32x320xbf16>
    %136 = vector.shape_cast %135 : vector<1x32x320xbf16> to vector<32x320xbf16>
    %cst_95 = arith.constant dense<0.000000e+00> : vector<32x320xf32>
    %137 = tpu.matmul %25, %136, %cst_95 {dimension_numbers = #tpu.dot_dimension_numbers<[1], [0], [0], [1], [0, 0, 1, 1], [], []>} : vector<32x32xbf16>, vector<32x320xbf16>, vector<32x320xf32> -> vector<32x320xf32>
    %138 = vector.shape_cast %137 : vector<32x320xf32> to vector<2x16x320xf32>
    %139 = vector.extract_strided_slice %138 {offsets = [0, 2, 0], sizes = [2, 7, 320], strides = [1, 1, 1]} : vector<2x16x320xf32> to vector<2x7x320xf32>
    %140 = arith.addf %134, %139 : vector<2x7x320xf32>
    %c3_96 = arith.constant 3 : index
    %c0_97 = arith.constant 0 : index
    %c0_98 = arith.constant 0 : index
    %141 = vector.load %arg20[%c3_96, %c0_97, %c0_98] : memref<10x32x320xbf16, #tpu.memory_space<vmem>>, vector<1x32x320xbf16>
    %142 = vector.shape_cast %141 : vector<1x32x320xbf16> to vector<32x320xbf16>
    %cst_99 = arith.constant dense<0.000000e+00> : vector<32x320xf32>
    %143 = tpu.matmul %25, %142, %cst_99 {dimension_numbers = #tpu.dot_dimension_numbers<[1], [0], [0], [1], [0, 0, 1, 1], [], []>} : vector<32x32xbf16>, vector<32x320xbf16>, vector<32x320xf32> -> vector<32x320xf32>
    %144 = vector.shape_cast %143 : vector<32x320xf32> to vector<2x16x320xf32>
    %145 = vector.extract_strided_slice %144 {offsets = [0, 3, 0], sizes = [2, 7, 320], strides = [1, 1, 1]} : vector<2x16x320xf32> to vector<2x7x320xf32>
    %146 = arith.addf %140, %145 : vector<2x7x320xf32>
    %c4_100 = arith.constant 4 : index
    %c0_101 = arith.constant 0 : index
    %c0_102 = arith.constant 0 : index
    %147 = vector.load %arg20[%c4_100, %c0_101, %c0_102] : memref<10x32x320xbf16, #tpu.memory_space<vmem>>, vector<1x32x320xbf16>
    %148 = vector.shape_cast %147 : vector<1x32x320xbf16> to vector<32x320xbf16>
    %cst_103 = arith.constant dense<0.000000e+00> : vector<32x320xf32>
    %149 = tpu.matmul %25, %148, %cst_103 {dimension_numbers = #tpu.dot_dimension_numbers<[1], [0], [0], [1], [0, 0, 1, 1], [], []>} : vector<32x32xbf16>, vector<32x320xbf16>, vector<32x320xf32> -> vector<32x320xf32>
    %150 = vector.shape_cast %149 : vector<32x320xf32> to vector<2x16x320xf32>
    %151 = vector.extract_strided_slice %150 {offsets = [0, 4, 0], sizes = [2, 7, 320], strides = [1, 1, 1]} : vector<2x16x320xf32> to vector<2x7x320xf32>
    %152 = arith.addf %146, %151 : vector<2x7x320xf32>
    %c5 = arith.constant 5 : index
    %c0_104 = arith.constant 0 : index
    %c0_105 = arith.constant 0 : index
    %153 = vector.load %arg20[%c5, %c0_104, %c0_105] : memref<10x32x320xbf16, #tpu.memory_space<vmem>>, vector<1x32x320xbf16>
    %154 = vector.shape_cast %153 : vector<1x32x320xbf16> to vector<32x320xbf16>
    %cst_106 = arith.constant dense<0.000000e+00> : vector<32x320xf32>
    %155 = tpu.matmul %25, %154, %cst_106 {dimension_numbers = #tpu.dot_dimension_numbers<[1], [0], [0], [1], [0, 0, 1, 1], [], []>} : vector<32x32xbf16>, vector<32x320xbf16>, vector<32x320xf32> -> vector<32x320xf32>
    %156 = vector.shape_cast %155 : vector<32x320xf32> to vector<2x16x320xf32>
    %157 = vector.extract_strided_slice %156 {offsets = [0, 5, 0], sizes = [2, 7, 320], strides = [1, 1, 1]} : vector<2x16x320xf32> to vector<2x7x320xf32>
    %158 = arith.addf %152, %157 : vector<2x7x320xf32>
    %c6 = arith.constant 6 : index
    %c0_107 = arith.constant 0 : index
    %c0_108 = arith.constant 0 : index
    %159 = vector.load %arg20[%c6, %c0_107, %c0_108] : memref<10x32x320xbf16, #tpu.memory_space<vmem>>, vector<1x32x320xbf16>
    %160 = vector.shape_cast %159 : vector<1x32x320xbf16> to vector<32x320xbf16>
    %cst_109 = arith.constant dense<0.000000e+00> : vector<32x320xf32>
    %161 = tpu.matmul %25, %160, %cst_109 {dimension_numbers = #tpu.dot_dimension_numbers<[1], [0], [0], [1], [0, 0, 1, 1], [], []>} : vector<32x32xbf16>, vector<32x320xbf16>, vector<32x320xf32> -> vector<32x320xf32>
    %162 = vector.shape_cast %161 : vector<32x320xf32> to vector<2x16x320xf32>
    %163 = vector.extract_strided_slice %162 {offsets = [0, 6, 0], sizes = [2, 7, 320], strides = [1, 1, 1]} : vector<2x16x320xf32> to vector<2x7x320xf32>
    %164 = arith.addf %158, %163 : vector<2x7x320xf32>
    %c7 = arith.constant 7 : index
    %c0_110 = arith.constant 0 : index
    %c0_111 = arith.constant 0 : index
    %165 = vector.load %arg20[%c7, %c0_110, %c0_111] : memref<10x32x320xbf16, #tpu.memory_space<vmem>>, vector<1x32x320xbf16>
    %166 = vector.shape_cast %165 : vector<1x32x320xbf16> to vector<32x320xbf16>
    %cst_112 = arith.constant dense<0.000000e+00> : vector<32x320xf32>
    %167 = tpu.matmul %25, %166, %cst_112 {dimension_numbers = #tpu.dot_dimension_numbers<[1], [0], [0], [1], [0, 0, 1, 1], [], []>} : vector<32x32xbf16>, vector<32x320xbf16>, vector<32x320xf32> -> vector<32x320xf32>
    %168 = vector.shape_cast %167 : vector<32x320xf32> to vector<2x16x320xf32>
    %169 = vector.extract_strided_slice %168 {offsets = [0, 7, 0], sizes = [2, 7, 320], strides = [1, 1, 1]} : vector<2x16x320xf32> to vector<2x7x320xf32>
    %170 = arith.addf %164, %169 : vector<2x7x320xf32>
    %c8 = arith.constant 8 : index
    %c0_113 = arith.constant 0 : index
    %c0_114 = arith.constant 0 : index
    %171 = vector.load %arg20[%c8, %c0_113, %c0_114] : memref<10x32x320xbf16, #tpu.memory_space<vmem>>, vector<1x32x320xbf16>
    %172 = vector.shape_cast %171 : vector<1x32x320xbf16> to vector<32x320xbf16>
    %cst_115 = arith.constant dense<0.000000e+00> : vector<32x320xf32>
    %173 = tpu.matmul %25, %172, %cst_115 {dimension_numbers = #tpu.dot_dimension_numbers<[1], [0], [0], [1], [0, 0, 1, 1], [], []>} : vector<32x32xbf16>, vector<32x320xbf16>, vector<32x320xf32> -> vector<32x320xf32>
    %174 = vector.shape_cast %173 : vector<32x320xf32> to vector<2x16x320xf32>
    %175 = vector.extract_strided_slice %174 {offsets = [0, 8, 0], sizes = [2, 7, 320], strides = [1, 1, 1]} : vector<2x16x320xf32> to vector<2x7x320xf32>
    %176 = arith.addf %170, %175 : vector<2x7x320xf32>
    %c9 = arith.constant 9 : index
    %c0_116 = arith.constant 0 : index
    %c0_117 = arith.constant 0 : index
    %177 = vector.load %arg20[%c9, %c0_116, %c0_117] : memref<10x32x320xbf16, #tpu.memory_space<vmem>>, vector<1x32x320xbf16>
    %178 = vector.shape_cast %177 : vector<1x32x320xbf16> to vector<32x320xbf16>
    %cst_118 = arith.constant dense<0.000000e+00> : vector<32x320xf32>
    %179 = tpu.matmul %25, %178, %cst_118 {dimension_numbers = #tpu.dot_dimension_numbers<[1], [0], [0], [1], [0, 0, 1, 1], [], []>} : vector<32x32xbf16>, vector<32x320xbf16>, vector<32x320xf32> -> vector<32x320xf32>
    %180 = vector.shape_cast %179 : vector<32x320xf32> to vector<2x16x320xf32>
    %181 = vector.extract_strided_slice %180 {offsets = [0, 9, 0], sizes = [2, 7, 320], strides = [1, 1, 1]} : vector<2x16x320xf32> to vector<2x7x320xf32>
    %182 = arith.addf %176, %181 : vector<2x7x320xf32>
    %cst_119 = arith.constant dense<0xFF800000> : vector<2x320xf32>
    %183 = vector.multi_reduction <maximumf>, %182, %cst_119 [1] : vector<2x7x320xf32> to vector<2x320xf32>
    %c0_120 = arith.constant 0 : index
    %c0_121 = arith.constant 0 : index
    %184 = vector.load %arg21[%c0_120, %c0_121] : memref<1x320xf32, #tpu.memory_space<vmem>>, vector<1x320xf32>
    %185 = vector.broadcast %184 : vector<1x320xf32> to vector<2x320xf32>
    %186 = arith.addf %183, %185 : vector<2x320xf32>
    %187 = arith.mulf %186, %24 : vector<2x320xf32>
    %188 = arith.truncf %187 : vector<2x320xf32> to vector<2x320xbf16>
    %c0_122 = arith.constant 0 : index
    %c0_123 = arith.constant 0 : index
    %189 = vector.load %arg22[%c0_122, %c0_123] : memref<320x64xbf16, #tpu.memory_space<vmem>>, vector<320x64xbf16>
    %cst_124 = arith.constant dense<0.000000e+00> : vector<2x64xf32>
    %190 = tpu.matmul %188, %189, %cst_124 {dimension_numbers = #tpu.dot_dimension_numbers<[1], [0], [0], [1], [0, 0, 1, 1], [], []>} : vector<2x320xbf16>, vector<320x64xbf16>, vector<2x64xf32> -> vector<2x64xf32>
    %191 = arith.addf %123, %190 : vector<2x64xf32>
    %c0_125 = arith.constant 0 : index
    %c0_126 = arith.constant 0 : index
    %192 = vector.load %arg23[%c0_125, %c0_126] : memref<1x64xf32, #tpu.memory_space<vmem>>, vector<1x64xf32>
    %193 = vector.broadcast %192 : vector<1x64xf32> to vector<2x64xf32>
    %194 = arith.addf %191, %193 : vector<2x64xf32>
    %c0_127 = arith.constant 0 : index
    %c0_128 = arith.constant 0 : index
    %195 = vector.load %arg24[%c0_127, %c0_128] : memref<1x64xf32, #tpu.memory_space<vmem>>, vector<1x64xf32>
    %196 = vector.broadcast %195 : vector<1x64xf32> to vector<2x64xf32>
    %197 = arith.mulf %194, %196 : vector<2x64xf32>
    %c0_129 = arith.constant 0 : index
    %c0_130 = arith.constant 0 : index
    %198 = vector.load %arg25[%c0_129, %c0_130] : memref<1x64xf32, #tpu.memory_space<vmem>>, vector<1x64xf32>
    %199 = vector.broadcast %198 : vector<1x64xf32> to vector<2x64xf32>
    %200 = arith.addf %197, %199 : vector<2x64xf32>
    %cst_131 = arith.constant 0.000000e+00 : f32
    %201 = vector.broadcast %cst_131 : f32 to vector<2x64xf32>
    %202 = arith.maximumf %200, %201 : vector<2x64xf32>
    %c0_132 = arith.constant 0 : index
    %c0_133 = arith.constant 0 : index
    %203 = vector.load %arg26[%c0_132, %c0_133] : memref<1x64xf32, #tpu.memory_space<vmem>>, vector<1x64xf32>
    %204 = vector.broadcast %203 : vector<1x64xf32> to vector<2x64xf32>
    %205 = arith.mulf %202, %204 : vector<2x64xf32>
    %cst_134 = arith.constant dense<0.000000e+00> : vector<2xf32>
    %206 = vector.multi_reduction <add>, %205, %cst_134 [1] : vector<2x64xf32> to vector<2xf32>
    %207 = vector.shape_cast %206 : vector<2xf32> to vector<2x1xf32>
    %c0_135 = arith.constant 0 : index
    %c0_136 = arith.constant 0 : index
    %208 = vector.load %arg27[%c0_135, %c0_136] : memref<1x1xf32, #tpu.memory_space<vmem>>, vector<1x1xf32>
    %209 = vector.broadcast %208 : vector<1x1xf32> to vector<2x1xf32>
    %210 = arith.addf %207, %209 : vector<2x1xf32>
    %211 = arith.negf %210 : vector<2x1xf32>
    %212 = math.exp %211 : vector<2x1xf32>
    %cst_137 = arith.constant 1.000000e+00 : f32
    %213 = vector.broadcast %cst_137 : f32 to vector<2x1xf32>
    %214 = arith.addf %213, %212 : vector<2x1xf32>
    %215 = arith.divf %213, %214 : vector<2x1xf32>
    %c0_138 = arith.constant 0 : index
    %c0_139 = arith.constant 0 : index
    %216 = vector.load %arg28[%c0_138, %c0_139] : memref<2x1xf32, #tpu.memory_space<vmem>>, vector<2x1xf32>
    tpu.vector_store %arg28[%c0_138, %c0_139], %215 {strides = array<i32>} : memref<2x1xf32, #tpu.memory_space<vmem>>, vector<2x1xf32>,
    return
  }
  func.func @transform_0(%arg0: i32) -> (i32, i32, i32) {
    %c0_i32 = arith.constant 0 : i32
    %c0_i32_0 = arith.constant 0 : i32
    %c0_i32_1 = arith.constant 0 : i32
    return %arg0, %c0_i32, %c0_i32_0 : i32, i32, i32
  }
  func.func @transform_1(%arg0: i32) -> (i32, i32) {
    %c0_i32 = arith.constant 0 : i32
    %c0_i32_0 = arith.constant 0 : i32
    return %arg0, %c0_i32 : i32, i32
  }
  func.func @transform_2(%arg0: i32) -> (i32, i32) {
    %c0_i32 = arith.constant 0 : i32
    %c0_i32_0 = arith.constant 0 : i32
    %c0_i32_1 = arith.constant 0 : i32
    return %c0_i32, %c0_i32_0 : i32, i32
  }
  func.func @transform_3(%arg0: i32) -> (i32, i32) {
    %c0_i32 = arith.constant 0 : i32
    %c0_i32_0 = arith.constant 0 : i32
    %c0_i32_1 = arith.constant 0 : i32
    return %c0_i32, %c0_i32_0 : i32, i32
  }
  func.func @transform_4(%arg0: i32) -> (i32, i32) {
    %c0_i32 = arith.constant 0 : i32
    %c0_i32_0 = arith.constant 0 : i32
    %c0_i32_1 = arith.constant 0 : i32
    return %c0_i32, %c0_i32_0 : i32, i32
  }
  func.func @transform_5(%arg0: i32) -> (i32, i32) {
    %c0_i32 = arith.constant 0 : i32
    %c0_i32_0 = arith.constant 0 : i32
    %c0_i32_1 = arith.constant 0 : i32
    return %c0_i32, %c0_i32_0 : i32, i32
  }
  func.func @transform_6(%arg0: i32) -> (i32, i32) {
    %c0_i32 = arith.constant 0 : i32
    %c0_i32_0 = arith.constant 0 : i32
    %c0_i32_1 = arith.constant 0 : i32
    return %c0_i32, %c0_i32_0 : i32, i32
  }
  func.func @transform_7(%arg0: i32) -> (i32, i32, i32) {
    %c0_i32 = arith.constant 0 : i32
    %c0_i32_0 = arith.constant 0 : i32
    %c0_i32_1 = arith.constant 0 : i32
    %c0_i32_2 = arith.constant 0 : i32
    return %c0_i32, %c0_i32_0, %c0_i32_1 : i32, i32, i32
  }
  func.func @transform_8(%arg0: i32) -> (i32, i32) {
    %c0_i32 = arith.constant 0 : i32
    %c0_i32_0 = arith.constant 0 : i32
    %c0_i32_1 = arith.constant 0 : i32
    return %c0_i32, %c0_i32_0 : i32, i32
  }
  func.func @transform_9(%arg0: i32) -> (i32, i32) {
    %c0_i32 = arith.constant 0 : i32
    %c0_i32_0 = arith.constant 0 : i32
    %c0_i32_1 = arith.constant 0 : i32
    return %c0_i32, %c0_i32_0 : i32, i32
  }
  func.func @transform_10(%arg0: i32) -> (i32, i32, i32) {
    %c0_i32 = arith.constant 0 : i32
    %c0_i32_0 = arith.constant 0 : i32
    %c0_i32_1 = arith.constant 0 : i32
    %c0_i32_2 = arith.constant 0 : i32
    return %c0_i32, %c0_i32_0, %c0_i32_1 : i32, i32, i32
  }
  func.func @transform_11(%arg0: i32) -> (i32, i32) {
    %c0_i32 = arith.constant 0 : i32
    %c0_i32_0 = arith.constant 0 : i32
    %c0_i32_1 = arith.constant 0 : i32
    return %c0_i32, %c0_i32_0 : i32, i32
  }
  func.func @transform_12(%arg0: i32) -> (i32, i32) {
    %c0_i32 = arith.constant 0 : i32
    %c0_i32_0 = arith.constant 0 : i32
    %c0_i32_1 = arith.constant 0 : i32
    return %c0_i32, %c0_i32_0 : i32, i32
  }
  func.func @transform_13(%arg0: i32) -> (i32, i32, i32) {
    %c0_i32 = arith.constant 0 : i32
    %c0_i32_0 = arith.constant 0 : i32
    %c0_i32_1 = arith.constant 0 : i32
    %c0_i32_2 = arith.constant 0 : i32
    return %c0_i32, %c0_i32_0, %c0_i32_1 : i32, i32, i32
  }
  func.func @transform_14(%arg0: i32) -> (i32, i32) {
    %c0_i32 = arith.constant 0 : i32
    %c0_i32_0 = arith.constant 0 : i32
    %c0_i32_1 = arith.constant 0 : i32
    return %c0_i32, %c0_i32_0 : i32, i32
  }
  func.func @transform_15(%arg0: i32) -> (i32, i32) {
    %c0_i32 = arith.constant 0 : i32
    %c0_i32_0 = arith.constant 0 : i32
    %c0_i32_1 = arith.constant 0 : i32
    return %c0_i32, %c0_i32_0 : i32, i32
  }
  func.func @transform_16(%arg0: i32) -> (i32, i32, i32) {
    %c0_i32 = arith.constant 0 : i32
    %c0_i32_0 = arith.constant 0 : i32
    %c0_i32_1 = arith.constant 0 : i32
    %c0_i32_2 = arith.constant 0 : i32
    return %c0_i32, %c0_i32_0, %c0_i32_1 : i32, i32, i32
  }
  func.func @transform_17(%arg0: i32) -> (i32, i32) {
    %c0_i32 = arith.constant 0 : i32
    %c0_i32_0 = arith.constant 0 : i32
    %c0_i32_1 = arith.constant 0 : i32
    return %c0_i32, %c0_i32_0 : i32, i32
  }
  func.func @transform_18(%arg0: i32) -> (i32, i32) {
    %c0_i32 = arith.constant 0 : i32
    %c0_i32_0 = arith.constant 0 : i32
    %c0_i32_1 = arith.constant 0 : i32
    return %c0_i32, %c0_i32_0 : i32, i32
  }
  func.func @transform_19(%arg0: i32) -> (i32, i32, i32) {
    %c0_i32 = arith.constant 0 : i32
    %c0_i32_0 = arith.constant 0 : i32
    %c0_i32_1 = arith.constant 0 : i32
    %c0_i32_2 = arith.constant 0 : i32
    return %c0_i32, %c0_i32_0, %c0_i32_1 : i32, i32, i32
  }
  func.func @transform_20(%arg0: i32) -> (i32, i32) {
    %c0_i32 = arith.constant 0 : i32
    %c0_i32_0 = arith.constant 0 : i32
    %c0_i32_1 = arith.constant 0 : i32
    return %c0_i32, %c0_i32_0 : i32, i32
  }
  func.func @transform_21(%arg0: i32) -> (i32, i32) {
    %c0_i32 = arith.constant 0 : i32
    %c0_i32_0 = arith.constant 0 : i32
    %c0_i32_1 = arith.constant 0 : i32
    return %c0_i32, %c0_i32_0 : i32, i32
  }
  func.func @transform_22(%arg0: i32) -> (i32, i32) {
    %c0_i32 = arith.constant 0 : i32
    %c0_i32_0 = arith.constant 0 : i32
    %c0_i32_1 = arith.constant 0 : i32
    return %c0_i32, %c0_i32_0 : i32, i32
  }
  func.func @transform_23(%arg0: i32) -> (i32, i32) {
    %c0_i32 = arith.constant 0 : i32
    %c0_i32_0 = arith.constant 0 : i32
    %c0_i32_1 = arith.constant 0 : i32
    return %c0_i32, %c0_i32_0 : i32, i32
  }
  func.func @transform_24(%arg0: i32) -> (i32, i32) {
    %c0_i32 = arith.constant 0 : i32
    %c0_i32_0 = arith.constant 0 : i32
    %c0_i32_1 = arith.constant 0 : i32
    return %c0_i32, %c0_i32_0 : i32, i32
  }
  func.func @transform_25(%arg0: i32) -> (i32, i32) {
    %c0_i32 = arith.constant 0 : i32
    %c0_i32_0 = arith.constant 0 : i32
    %c0_i32_1 = arith.constant 0 : i32
    return %c0_i32, %c0_i32_0 : i32, i32
  }
  func.func @transform_26(%arg0: i32) -> (i32, i32) {
    %c0_i32 = arith.constant 0 : i32
    %c0_i32_0 = arith.constant 0 : i32
    %c0_i32_1 = arith.constant 0 : i32
    return %c0_i32, %c0_i32_0 : i32, i32
  }
  func.func @transform_27(%arg0: i32) -> (i32, i32) {
    %c0_i32 = arith.constant 0 : i32
    %c0_i32_0 = arith.constant 0 : i32
    return %arg0, %c0_i32 : i32, i32
  }
}

</mosaic_0001>

<llo_original>
// kernel: tpu_custom_call.1
$region0: #{tpu_custom_call.1}
  #allocation0 [shape = 'u32[]', space=smem, size = 0x4, offset = 0x4, fixed_abs, tag = 'smem constant byte address 0x4 - core index']
  #allocation1 [shape = 'u32[72,128]{1,0:T(1,128)}', space=vmem, size = 0x9000, scoped, tag = 'internal scratch']
  #allocation2 [shape = 'f32[1,1]{1,0:T(1,128)S(1)}', space=vmem, size = 0x200, scoped, tag = 'scoped memory for tpu_custom_call.1']
  %s0 = inlined_call_operand.hbm [shape: bf16[2,16,32], index: 0, kind: input, shape index: {}]
  %s1 = inlined_call_operand.vmem [shape: f32[2,32], index: 1, kind: input, shape index: {}]
  %s2 = inlined_call_operand.hbm [shape: f32[32,64], index: 2, kind: input, shape index: {}]
  %s3 = inlined_call_operand.hbm [shape: f32[1,64], index: 3, kind: input, shape index: {}]
  %s4 = inlined_call_operand.vmem [shape: f32[64,5], index: 4, kind: input, shape index: {}]
  %s5 = inlined_call_operand.hbm [shape: f32[1,5], index: 5, kind: input, shape index: {}]
  %s6 = inlined_call_operand.hbm [shape: f32[5,320], index: 6, kind: input, shape index: {}]
  %s7 = inlined_call_operand.hbm [shape: bf16[1,32,320], index: 7, kind: input, shape index: {}]
  %s8 = inlined_call_operand.vmem [shape: f32[1,320], index: 8, kind: input, shape index: {}]
  %s9 = inlined_call_operand.vmem [shape: bf16[320,64], index: 9, kind: input, shape index: {}]
  %s10 = inlined_call_operand.vmem [shape: bf16[2,32,320], index: 10, kind: input, shape index: {}]
  %s11 = inlined_call_operand.vmem [shape: f32[1,320], index: 11, kind: input, shape index: {}]
  %s12 = inlined_call_operand.vmem [shape: bf16[320,64], index: 12, kind: input, shape index: {}]
  %s13 = inlined_call_operand.vmem [shape: bf16[3,32,320], index: 13, kind: input, shape index: {}]
  %s14 = inlined_call_operand.vmem [shape: f32[1,320], index: 14, kind: input, shape index: {}]
  %s15 = inlined_call_operand.vmem [shape: bf16[320,64], index: 15, kind: input, shape index: {}]
  %s16 = inlined_call_operand.vmem [shape: bf16[5,32,320], index: 16, kind: input, shape index: {}]
  %s17 = inlined_call_operand.vmem [shape: f32[1,320], index: 17, kind: input, shape index: {}]
  %s18 = inlined_call_operand.vmem [shape: bf16[320,64], index: 18, kind: input, shape index: {}]
  %s19 = inlined_call_operand.vmem [shape: bf16[10,32,320], index: 19, kind: input, shape index: {}]
  %s20 = inlined_call_operand.vmem [shape: f32[1,320], index: 20, kind: input, shape index: {}]
  %s21 = inlined_call_operand.vmem [shape: bf16[320,64], index: 21, kind: input, shape index: {}]
  %s22 = inlined_call_operand.vmem [shape: f32[1,64], index: 22, kind: input, shape index: {}]
  %s23 = inlined_call_operand.vmem [shape: f32[1,64], index: 23, kind: input, shape index: {}]
  %s24 = inlined_call_operand.vmem [shape: f32[1,64], index: 24, kind: input, shape index: {}]
  %s25 = inlined_call_operand.vmem [shape: f32[1,64], index: 25, kind: input, shape index: {}]
  %s26 = inlined_call_operand.<no memory space> [shape: f32[1,1], index: 26, kind: input, shape index: {}]
  %s27 = inlined_call_operand.vmem [shape: f32[2,1], index: 27, kind: output, shape index: {}]
  %s28 = sld [smem:[#allocation0]]
  $region142: #{tpu_custom_call.1} parent=0
    _
  %s30 = ssub.s32 1, %s28
  %s31 = scalar_select 0, %s30, %s28
  %v32 = vstv %s26
  %33 = vst [vmem:[#allocation2] sm:$0x1] %v32
  $region1: #{tpu_custom_call.1} parent=0
    #allocation3 [shape = 'u8[8192]{0}', space=vmem, size = 0x2000, scoped, tag = 'input window, operand 0, single buffered']
    #allocation4 [shape = 's32[1]{0}', space=sflag, size = 0x4, scoped, tag = 'scoped memory for tpu_custom_call.1']
    #allocation5 [shape = 'u8[16384]{0}', space=vmem, size = 0x4000, scoped, tag = 'input window, operand 2, single buffered']
    #allocation6 [shape = 's32[1]{0}', space=sflag, size = 0x4, scoped, tag = 'scoped memory for tpu_custom_call.1']
    #allocation7 [shape = 'u8[512]{0}', space=vmem, size = 0x400, scoped, tag = 'input window, operand 3, single buffered']
    #allocation8 [shape = 'u8[512]{0}', space=vmem, size = 0x400, scoped, tag = 'input window, operand 5, single buffered']
    #allocation9 [shape = 's32[1]{0}', space=sflag, size = 0x4, scoped, tag = 'scoped memory for tpu_custom_call.1']
    #allocation10 [shape = 'u8[12288]{0}', space=vmem, size = 0x3000, scoped, tag = 'input window, operand 6, single buffered']
    #allocation11 [shape = 'u8[24576]{0}', space=vmem, size = 0x6000, scoped, tag = 'input window, operand 7, single buffered']
    #allocation12 [shape = 's32[1]{0}', space=sflag, size = 0x4, scoped, tag = 'scoped memory for tpu_custom_call.1']
    %34 = vsyncpa [#allocation4], 0
    %35 = vsyncpa [#allocation6], 0
    %36 = vsyncpa [#allocation9], 0
    %37 = vsyncpa [#allocation12], 0
    // Predicated region
    $region2: #{tpu_custom_call.1} parent=1 // pred_check
      _
    $region3: #{tpu_custom_call.1} parent=1 // pred_check_branch
      %39 = sbr.rel (0) target = $region5
    $region4: #{tpu_custom_call.1} parent=1 // pred_region
      %41 = vsyncadd [#allocation4], 0
      %s42 = sshll.u32 %s0, 4
      %s43 = int_to_ptr.hbm [resolvable:$true] %s42
      %s44 = sshll.u32 [#allocation3], 4
      %s45 = int_to_ptr.vmem [resolvable:$true] %s44
      %50 = dma.hbm_to_vmem [thread:$0]  %s43, 256, %s45, [#allocation4], 64, 64, 4
    $region5: #{tpu_custom_call.1} parent=1 // pred_fallthru
      _
    // Predicated region
    $region6: #{tpu_custom_call.1} parent=1 // pred_check
      _
    $region7: #{tpu_custom_call.1} parent=1 // pred_check_branch
      %52 = sbr.rel (0) target = $region9
    $region8: #{tpu_custom_call.1} parent=1 // pred_region
      _
    $region9: #{tpu_custom_call.1} parent=1 // pred_fallthru
      _
    // Predicated region
    $region10: #{tpu_custom_call.1} parent=1 // pred_check
      _
    $region11: #{tpu_custom_call.1} parent=1 // pred_check_branch
      %54 = sbr.rel (0) target = $region13
    $region12: #{tpu_custom_call.1} parent=1 // pred_region
      %56 = vsyncadd [#allocation6], 0
      %s57 = sshll.u32 %s2, 4
      %s58 = int_to_ptr.hbm [resolvable:$true] %s57
      %s59 = sshll.u32 [#allocation5], 4
      %s60 = int_to_ptr.vmem [resolvable:$true] %s59
      %65 = dma.hbm_to_vmem [thread:$0]  %s58, 512, %s60, [#allocation6], 128, 128, 8
    $region13: #{tpu_custom_call.1} parent=1 // pred_fallthru
      _
    // Predicated region
    $region14: #{tpu_custom_call.1} parent=1 // pred_check
      _
    $region15: #{tpu_custom_call.1} parent=1 // pred_check_branch
      %67 = sbr.rel (0) target = $region17
    $region16: #{tpu_custom_call.1} parent=1 // pred_region
      %69 = vsyncadd [#allocation6], 0
      %s71 = sshll.u32 %s3, 4
      %s72 = int_to_ptr.hbm [resolvable:$true] %s71
      %s73 = sshll.u32 [#allocation7], 4
      %s74 = int_to_ptr.vmem [resolvable:$true] %s73
      %76 = dma.hbm_to_vmem [thread:$0]  %s72, 16, %s74, [#allocation6]
    $region17: #{tpu_custom_call.1} parent=1 // pred_fallthru
      _
    // Predicated region
    $region18: #{tpu_custom_call.1} parent=1 // pred_check
      _
    $region19: #{tpu_custom_call.1} parent=1 // pred_check_branch
      %78 = sbr.rel (0) target = $region21
    $region20: #{tpu_custom_call.1} parent=1 // pred_region
      _
    $region21: #{tpu_custom_call.1} parent=1 // pred_fallthru
      _
    // Predicated region
    $region22: #{tpu_custom_call.1} parent=1 // pred_check
      _
    $region23: #{tpu_custom_call.1} parent=1 // pred_check_branch
      %80 = sbr.rel (0) target = $region25
    $region24: #{tpu_custom_call.1} parent=1 // pred_region
      %82 = vsyncadd [#allocation9], 0
      %s84 = sshll.u32 %s5, 4
      %s85 = int_to_ptr.hbm [resolvable:$true] %s84
      %s86 = sshll.u32 [#allocation8], 4
      %s87 = int_to_ptr.vmem [resolvable:$true] %s86
      %89 = dma.hbm_to_vmem [thread:$0]  %s85, 16, %s87, [#allocation9]
    $region25: #{tpu_custom_call.1} parent=1 // pred_fallthru
      _
    // Predicated region
    $region26: #{tpu_custom_call.1} parent=1 // pred_check
      _
    $region27: #{tpu_custom_call.1} parent=1 // pred_check_branch
      %91 = sbr.rel (0) target = $region29
    $region28: #{tpu_custom_call.1} parent=1 // pred_region
      %93 = vsyncadd [#allocation9], 0
      %s95 = sshll.u32 %s6, 4
      %s96 = int_to_ptr.hbm [resolvable:$true] %s95
      %s97 = sshll.u32 [#allocation10], 4
      %s98 = int_to_ptr.vmem [resolvable:$true] %s97
      %100 = dma.hbm_to_vmem [thread:$0]  %s96, 384, %s98, [#allocation9]
    $region29: #{tpu_custom_call.1} parent=1 // pred_fallthru
      _
    // Predicated region
    $region30: #{tpu_custom_call.1} parent=1 // pred_check
      _
    $region31: #{tpu_custom_call.1} parent=1 // pred_check_branch
      %102 = sbr.rel (0) target = $region33
    $region32: #{tpu_custom_call.1} parent=1 // pred_region
      %104 = vsyncadd [#allocation12], 0
      %s105 = sshll.u32 %s7, 4
      %s106 = int_to_ptr.hbm [resolvable:$true] %s105
      %s107 = sshll.u32 [#allocation11], 4
      %s108 = int_to_ptr.vmem [resolvable:$true] %s107
      %113 = dma.hbm_to_vmem [thread:$0]  %s106, 768, %s108, [#allocation12], 192, 192, 12
    $region33: #{tpu_custom_call.1} parent=1 // pred_fallthru
      _
    // Predicated region
    $region34: #{tpu_custom_call.1} parent=1 // pred_check
      _
    $region35: #{tpu_custom_call.1} parent=1 // pred_check_branch
      %115 = sbr.rel (0) target = $region37
    $region36: #{tpu_custom_call.1} parent=1 // pred_region
      _
    $region37: #{tpu_custom_call.1} parent=1 // pred_fallthru
      _
    // Predicated region
    $region38: #{tpu_custom_call.1} parent=1 // pred_check
      _
    $region39: #{tpu_custom_call.1} parent=1 // pred_check_branch
      %117 = sbr.rel (0) target = $region41
    $region40: #{tpu_custom_call.1} parent=1 // pred_region
      _
    $region41: #{tpu_custom_call.1} parent=1 // pred_fallthru
      _
    // Predicated region
    $region42: #{tpu_custom_call.1} parent=1 // pred_check
      _
    $region43: #{tpu_custom_call.1} parent=1 // pred_check_branch
      %119 = sbr.rel (0) target = $region45
    $region44: #{tpu_custom_call.1} parent=1 // pred_region
      _
    $region45: #{tpu_custom_call.1} parent=1 // pred_fallthru
      _
    // Predicated region
    $region46: #{tpu_custom_call.1} parent=1 // pred_check
      _
    $region47: #{tpu_custom_call.1} parent=1 // pred_check_branch
      %121 = sbr.rel (0) target = $region49
    $region48: #{tpu_custom_call.1} parent=1 // pred_region
      _
    $region49: #{tpu_custom_call.1} parent=1 // pred_fallthru
      _
    // Predicated region
    $region50: #{tpu_custom_call.1} parent=1 // pred_check
      _
    $region51: #{tpu_custom_call.1} parent=1 // pred_check_branch
      %123 = sbr.rel (0) target = $region53
    $region52: #{tpu_custom_call.1} parent=1 // pred_region
      _
    $region53: #{tpu_custom_call.1} parent=1 // pred_fallthru
      _
    // Predicated region
    $region54: #{tpu_custom_call.1} parent=1 // pred_check
      _
    $region55: #{tpu_custom_call.1} parent=1 // pred_check_branch
      %125 = sbr.rel (0) target = $region57
    $region56: #{tpu_custom_call.1} parent=1 // pred_region
      _
    $region57: #{tpu_custom_call.1} parent=1 // pred_fallthru
      _
    // Predicated region
    $region58: #{tpu_custom_call.1} parent=1 // pred_check
      _
    $region59: #{tpu_custom_call.1} parent=1 // pred_check_branch
      %127 = sbr.rel (0) target = $region61
    $region60: #{tpu_custom_call.1} parent=1 // pred_region
      _
    $region61: #{tpu_custom_call.1} parent=1 // pred_fallthru
      _
    // Predicated region
    $region62: #{tpu_custom_call.1} parent=1 // pred_check
      _
    $region63: #{tpu_custom_call.1} parent=1 // pred_check_branch
      %129 = sbr.rel (0) target = $region65
    $region64: #{tpu_custom_call.1} parent=1 // pred_region
      _
    $region65: #{tpu_custom_call.1} parent=1 // pred_fallthru
      _
    // Predicated region
    $region66: #{tpu_custom_call.1} parent=1 // pred_check
      _
    $region67: #{tpu_custom_call.1} parent=1 // pred_check_branch
      %131 = sbr.rel (0) target = $region69
    $region68: #{tpu_custom_call.1} parent=1 // pred_region
      _
    $region69: #{tpu_custom_call.1} parent=1 // pred_fallthru
      _
    // Predicated region
    $region70: #{tpu_custom_call.1} parent=1 // pred_check
      _
    $region71: #{tpu_custom_call.1} parent=1 // pred_check_branch
      %133 = sbr.rel (0) target = $region73
    $region72: #{tpu_custom_call.1} parent=1 // pred_region
      _
    $region73: #{tpu_custom_call.1} parent=1 // pred_fallthru
      _
    // Predicated region
    $region74: #{tpu_custom_call.1} parent=1 // pred_check
      _
    $region75: #{tpu_custom_call.1} parent=1 // pred_check_branch
      %135 = sbr.rel (0) target = $region77
    $region76: #{tpu_custom_call.1} parent=1 // pred_region
      _
    $region77: #{tpu_custom_call.1} parent=1 // pred_fallthru
      _
    // Predicated region
    $region78: #{tpu_custom_call.1} parent=1 // pred_check
      _
    $region79: #{tpu_custom_call.1} parent=1 // pred_check_branch
      %137 = sbr.rel (0) target = $region81
    $region80: #{tpu_custom_call.1} parent=1 // pred_region
      _
    $region81: #{tpu_custom_call.1} parent=1 // pred_fallthru
      _
    // Predicated region
    $region82: #{tpu_custom_call.1} parent=1 // pred_check
      _
    $region83: #{tpu_custom_call.1} parent=1 // pred_check_branch
      %139 = sbr.rel (0) target = $region85
    $region84: #{tpu_custom_call.1} parent=1 // pred_region
      _
    $region85: #{tpu_custom_call.1} parent=1 // pred_fallthru
      _
    // Predicated region
    $region86: #{tpu_custom_call.1} parent=1 // pred_check
      _
    $region87: #{tpu_custom_call.1} parent=1 // pred_check_branch
      %141 = sbr.rel (0) target = $region89
    $region88: #{tpu_custom_call.1} parent=1 // pred_region
      _
    $region89: #{tpu_custom_call.1} parent=1 // pred_fallthru
      _
    // Predicated region
    $region90: #{tpu_custom_call.1} parent=1 // pred_check
      _
    $region91: #{tpu_custom_call.1} parent=1 // pred_check_branch
      %143 = sbr.rel (0) target = $region93
    $region92: #{tpu_custom_call.1} parent=1 // pred_region
      _
    $region93: #{tpu_custom_call.1} parent=1 // pred_fallthru
      _
    // Predicated region
    $region94: #{tpu_custom_call.1} parent=1 // pred_check
      _
    $region95: #{tpu_custom_call.1} parent=1 // pred_check_branch
      %145 = sbr.rel (0) target = $region97
    $region96: #{tpu_custom_call.1} parent=1 // pred_region
      _
    $region97: #{tpu_custom_call.1} parent=1 // pred_fallthru
      _
    // Predicated region
    $region98: #{tpu_custom_call.1} parent=1 // pred_check
      _
    $region99: #{tpu_custom_call.1} parent=1 // pred_check_branch
      %147 = sbr.rel (0) target = $region101
    $region100: #{tpu_custom_call.1} parent=1 // pred_region
      _
    $region101: #{tpu_custom_call.1} parent=1 // pred_fallthru
      _
    // Predicated region
    $region102: #{tpu_custom_call.1} parent=1 // pred_check
      _
    $region103: #{tpu_custom_call.1} parent=1 // pred_check_branch
      %149 = sbr.rel (0) target = $region105
    $region104: #{tpu_custom_call.1} parent=1 // pred_region
      _
    $region105: #{tpu_custom_call.1} parent=1 // pred_fallthru
      _
    // Predicated region
    $region106: #{tpu_custom_call.1} parent=1 // pred_check
      _
    $region107: #{tpu_custom_call.1} parent=1 // pred_check_branch
      %151 = sbr.rel (0) target = $region109
    $region108: #{tpu_custom_call.1} parent=1 // pred_region
      _
    $region109: #{tpu_custom_call.1} parent=1 // pred_fallthru
      _
    // Predicated region
    $region110: #{tpu_custom_call.1} parent=1 // pred_check
      _
    $region111: #{tpu_custom_call.1} parent=1 // pred_check_branch
      %153 = sbr.rel (0) target = $region113
    $region112: #{tpu_custom_call.1} parent=1 // pred_region
      %155 = dma.done [#allocation4], 256
    $region113: #{tpu_custom_call.1} parent=1 // pred_fallthru
      _
    // Predicated region
    $region114: #{tpu_custom_call.1} parent=1 // pred_check
      _
    $region115: #{tpu_custom_call.1} parent=1 // pred_check_branch
      %157 = sbr.rel (0) target = $region117
    $region116: #{tpu_custom_call.1} parent=1 // pred_region
      %159 = dma.done [#allocation6], 512
    $region117: #{tpu_custom_call.1} parent=1 // pred_fallthru
      _
    // Predicated region
    $region118: #{tpu_custom_call.1} parent=1 // pred_check
      _
    $region119: #{tpu_custom_call.1} parent=1 // pred_check_branch
      %161 = sbr.rel (0) target = $region121
    $region120: #{tpu_custom_call.1} parent=1 // pred_region
      %163 = dma.done [#allocation6], 16
    $region121: #{tpu_custom_call.1} parent=1 // pred_fallthru
      _
    // Predicated region
    $region122: #{tpu_custom_call.1} parent=1 // pred_check
      _
    $region123: #{tpu_custom_call.1} parent=1 // pred_check_branch
      %165 = sbr.rel (0) target = $region125
    $region124: #{tpu_custom_call.1} parent=1 // pred_region
      %167 = dma.done [#allocation9], 16
    $region125: #{tpu_custom_call.1} parent=1 // pred_fallthru
      _
    // Predicated region
    $region126: #{tpu_custom_call.1} parent=1 // pred_check
      _
    $region127: #{tpu_custom_call.1} parent=1 // pred_check_branch
      %169 = sbr.rel (0) target = $region129
    $region128: #{tpu_custom_call.1} parent=1 // pred_region
      %171 = dma.done [#allocation9], 384
    $region129: #{tpu_custom_call.1} parent=1 // pred_fallthru
      _
    // Predicated region
    $region130: #{tpu_custom_call.1} parent=1 // pred_check
      _
    $region131: #{tpu_custom_call.1} parent=1 // pred_check_branch
      %173 = sbr.rel (0) target = $region133
    $region132: #{tpu_custom_call.1} parent=1 // pred_region
      %175 = dma.done [#allocation12], 768
    $region133: #{tpu_custom_call.1} parent=1 // pred_fallthru
      _
    %v177 = vld [vmem:[#allocation3] sm:$0xf]
    %v178 = vld [vmem:[#allocation3 + $0x4] sm:$0xf]
    %v179 = vld [vmem:[#allocation3 + $0x8] sm:$0xf]
    %v180 = vld [vmem:[#allocation3 + $0xc] sm:$0xf]
    %v181 = vld [vmem:[%s1] sm:$0x3]
    %v182 = vld [vmem:[#allocation5] sm:$0xff]
    %v183 = vld [vmem:[#allocation5 + $0x8] sm:$0xff]
    %v184 = vld [vmem:[#allocation5 + $0x10] sm:$0xff]
    %v185 = vld [vmem:[#allocation5 + $0x18] sm:$0xff]
    %v186 = vld [vmem:[#allocation7] sm:$0x1]
    %v188 = vperm.slane %v186, 0
    %vm190 = vcmask 261120
    %v192 = vsel %vm190, %v181, 0
    %194 = vmatpush.msra.mxu0 0.0
    %195 = vmatpush.msra.mxu0 0.0
    %196 = vmatpush.msra.mxu0 0.0
    %197 = vmatpush.msra.mxu0 0.0
    %198 = vmatpush.msra.mxu0 0.0
    %199 = vmatpush.msra.mxu0 0.0
    %200 = vmatpush.msra.mxu0 0.0
    %201 = vmatpush.msra.mxu0 0.0
    %202 = vmatpush.msra.mxu0 0.0
    %203 = vmatpush.msra.mxu0 0.0
    %204 = vmatpush.msra.mxu0 0.0
    %205 = vmatpush.msra.mxu0 0.0
    %206 = vmatpush.msra.mxu0 %v185
    %207 = vmatpush.msra.mxu0 %v184
    %208 = vmatpush.msra.mxu0 %v183
    %209 = vmatpush.msra.mxu0 %v182
    %210 = vmatmul.f32.gmra.mxu0 %v192
    %v211 = vpop.f32.mrf.mxu0
    %v212 = vadd.f32 %v188, %v211
    %213 = vdwg.mxu0
    %v214 = vmax.f32 %v212, 0.0
    %v215 = vld [vmem:[%s4] sm:$0xff]
    %v216 = vld [vmem:[%s4 + $0x8] sm:$0xff]
    %v217 = vld [vmem:[%s4 + $0x10] sm:$0xff]
    %v218 = vld [vmem:[%s4 + $0x18] sm:$0xff]
    %v219 = vld [vmem:[%s4 + $0x20] sm:$0xff]
    %v220 = vld [vmem:[%s4 + $0x28] sm:$0xff]
    %v221 = vld [vmem:[%s4 + $0x30] sm:$0xff]
    %v222 = vld [vmem:[%s4 + $0x38] sm:$0xff]
    %v223 = vld [vmem:[#allocation8] sm:$0x1]
    %v225 = vperm.slane %v223, 0
    %vm227 = vcmask 523264
    %v229 = vsel %vm227, %v214, 0
    %231 = vmatpush.msra.mxu0 0.0
    %232 = vmatpush.msra.mxu0 0.0
    %233 = vmatpush.msra.mxu0 0.0
    %234 = vmatpush.msra.mxu0 0.0
    %235 = vmatpush.msra.mxu0 0.0
    %236 = vmatpush.msra.mxu0 0.0
    %237 = vmatpush.msra.mxu0 0.0
    %238 = vmatpush.msra.mxu0 0.0
    %239 = vmatpush.msra.mxu0 %v222
    %240 = vmatpush.msra.mxu0 %v221
    %241 = vmatpush.msra.mxu0 %v220
    %242 = vmatpush.msra.mxu0 %v219
    %243 = vmatpush.msra.mxu0 %v218
    %244 = vmatpush.msra.mxu0 %v217
    %245 = vmatpush.msra.mxu0 %v216
    %246 = vmatpush.msra.mxu0 %v215
    %247 = vmatmul.f32.gmra.mxu0 %v229
    %v248 = vpop.f32.mrf.mxu0
    %v249 = vadd.f32 %v225, %v248
    %250 = vdwg.mxu0
    %vm251 = vcmask 33792
    %v252 = vsel %vm251, %v249, -inf
    %253 = vmax.xlane.f32.xlu0 %v252
    %v254 = vpop.xlane.xlu0 %253
    %v255 = vsub.f32 %v249, %v254
    %v256 = vmul.f32 %v255, 1.442695
    %v257 = vpow.pop %v256
    %v258 = vsel %vm251, %v257, 0.0
    %259 = vadd.xlane.f32.xlu0 %v258
    %v260 = vpop.xlane.xlu0 %259
    %v261 = vrcp.pop %v260
    %v262 = vmul.f32 %v260, %v261
    %v263 = vsub.f32 1.0, %v262
    %v264 = vmul.f32 %v261, %v263
    %v265 = vadd.f32 %v261, %v264
    %vm266 = vweird.f32 %v260
    %vm267 = vweird.f32 %v261
    %vm268 = vmor %vm266, %vm267
    %v269 = vsel %vm268, %v261, %v265
    %v270 = vand.u32 2147483647, %v260
    %vm271 = vcmp.eq.f32.partialorder %v270, 8.507059e+37
    %v272 = vand.u32 %v260, 2147483648
    %v273 = vor.u32 1.1754944e-38, %v272
    %v274 = vsel %vm271, %v273, %v269
    %v275 = vmul.f32 %v257, %v274
    %v276 = vld [vmem:[#allocation10] sm:$0x1f]
    %v277 = vld [vmem:[#allocation10 + $0x8] sm:$0x1f]
    %v278 = vld [vmem:[#allocation10 + $0x10] sm:$0x1f]
    %vm279 = vcmask 39936
    %v281 = vsel %vm279, %v275, 0
    %vm283 = vcmask 1044480
    %v285 = vsel %vm283, %v276, 0
    %v288 = vsel %vm283, %v277, 0
    %v291 = vsel %vm283, %v278, 0
    %293 = vmatpush.msra.mxu0 0.0
    %294 = vmatpush.msra.mxu0 0.0
    %295 = vmatpush.msra.mxu0 0.0
    %296 = vmatpush.msra.mxu0 0.0
    %297 = vmatpush.msra.mxu0 0.0
    %298 = vmatpush.msra.mxu0 0.0
    %299 = vmatpush.msra.mxu0 0.0
    %300 = vmatpush.msra.mxu0 0.0
    %301 = vmatpush.msra.mxu0 0.0
    %302 = vmatpush.msra.mxu0 0.0
    %303 = vmatpush.msra.mxu0 0.0
    %304 = vmatpush.msra.mxu0 0.0
    %305 = vmatpush.msra.mxu0 0.0
    %306 = vmatpush.msra.mxu0 0.0
    %307 = vmatpush.msra.mxu0 0.0
    %308 = vmatpush.msra.mxu0 %v285
    %309 = vmatmul.f32.gmra.mxu0 %v281
    %v310 = vpop.f32.mrf.mxu0
    %v311 = vadd.f32 0.0, %v310
    %312 = vdwg.mxu0
    %313 = vmatpush.msra.mxu0 0.0
    %314 = vmatpush.msra.mxu0 0.0
    %315 = vmatpush.msra.mxu0 0.0
    %316 = vmatpush.msra.mxu0 0.0
    %317 = vmatpush.msra.mxu0 0.0
    %318 = vmatpush.msra.mxu0 0.0
    %319 = vmatpush.msra.mxu0 0.0
    %320 = vmatpush.msra.mxu0 0.0
    %321 = vmatpush.msra.mxu0 0.0
    %322 = vmatpush.msra.mxu0 0.0
    %323 = vmatpush.msra.mxu0 0.0
    %324 = vmatpush.msra.mxu0 0.0
    %325 = vmatpush.msra.mxu0 0.0
    %326 = vmatpush.msra.mxu0 0.0
    %327 = vmatpush.msra.mxu0 0.0
    %328 = vmatpush.msra.mxu0 %v288
    %329 = vmatmul.f32.gmra.mxu0 %v281
    %v330 = vpop.f32.mrf.mxu0
    %v331 = vadd.f32 0.0, %v330
    %332 = vdwg.mxu0
    %333 = vmatpush.msra.mxu0 0.0
    %334 = vmatpush.msra.mxu0 0.0
    %335 = vmatpush.msra.mxu0 0.0
    %336 = vmatpush.msra.mxu0 0.0
    %337 = vmatpush.msra.mxu0 0.0
    %338 = vmatpush.msra.mxu0 0.0
    %339 = vmatpush.msra.mxu0 0.0
    %340 = vmatpush.msra.mxu0 0.0
    %341 = vmatpush.msra.mxu0 0.0
    %342 = vmatpush.msra.mxu0 0.0
    %343 = vmatpush.msra.mxu0 0.0
    %344 = vmatpush.msra.mxu0 0.0
    %345 = vmatpush.msra.mxu0 0.0
    %346 = vmatpush.msra.mxu0 0.0
    %347 = vmatpush.msra.mxu0 0.0
    %348 = vmatpush.msra.mxu0 %v291
    %349 = vmatmul.f32.gmra.mxu0 %v281
    %v350 = vpop.f32.mrf.mxu0
    %v351 = vadd.f32 0.0, %v350
    %352 = vdwg.mxu0
    %v353 = vld [vmem:[#allocation11] sm:$0xff]
    %v354 = vld [vmem:[#allocation11 + $0x8] sm:$0xf]
    %v355 = vld [vmem:[#allocation11 + $0xc] sm:$0xff]
    %v356 = vld [vmem:[#allocation11 + $0x14] sm:$0xf]
    %v357 = vld [vmem:[#allocation11 + $0x18] sm:$0xff]
    %v358 = vld [vmem:[#allocation11 + $0x20] sm:$0xf]
    %v359 = vld [vmem:[#allocation11 + $0x24] sm:$0xff]
    %v360 = vld [vmem:[#allocation11 + $0x2c] sm:$0xf]
    %v365 = vunpack.c.l.b16 %v177
    %v366 = vunpack.c.l.b16 %v178
    %v367 = vunpack.c.l.b16 %v179
    %v368 = vunpack.c.l.b16 %v180
    %v369 = vpack.c.b16 %v366, %v365
    %v370 = vpack.c.b16 %v368, %v367
    %v379 = vunpack.c.l.b16 %v353
    %v380 = vunpack.c.h.b16 %v353
    %v381 = vunpack.c.l.b16 %v354
    %v382 = vunpack.c.l.b16 %v355
    %v383 = vunpack.c.h.b16 %v355
    %v384 = vunpack.c.l.b16 %v356
    %v385 = vunpack.c.l.b16 %v357
    %v386 = vunpack.c.h.b16 %v357
    %v387 = vunpack.c.l.b16 %v358
    %v388 = vunpack.c.l.b16 %v359
    %v389 = vunpack.c.h.b16 %v359
    %v390 = vunpack.c.l.b16 %v360
    %v391 = vpack.c.b16 %v382, %v379
    %v392 = vpack.c.b16 %v383, %v380
    %v393 = vpack.c.b16 %v384, %v381
    %v394 = vpack.c.b16 %v388, %v385
    %v395 = vpack.c.b16 %v389, %v386
    %v396 = vpack.c.b16 %v390, %v387
    %v404 = vsel %vm190, %v369, 0
    %v407 = vsel %vm190, %v370, 0
    %409 = vmatpush.bf16.msra.mxu0 0
    %410 = vmatpush.bf16.msra.mxu0 0
    %411 = vmatpush.bf16.msra.mxu0 0
    %412 = vmatpush.bf16.msra.mxu0 0
    %413 = vmatpush.bf16.msra.mxu0 0
    %414 = vmatpush.bf16.msra.mxu0 0
    %415 = vmatpush.bf16.msra.mxu0 %v394
    %416 = vmatpush.bf16.msra.mxu0 %v391
    %417 = vmatmul.bf16.gmra.mxu0 %v404
    %v418 = vpop.f32.mrf.mxu0
    %v419 = vadd.f32 0.0, %v418
    %v420 = vpop.f32.mrf.mxu0
    %v421 = vadd.f32 0.0, %v420
    %422 = vmatmul.bf16.gmra.mxu0 %v407
    %v423 = vpop.f32.mrf.mxu0
    %v424 = vadd.f32 0.0, %v423
    %v425 = vpop.f32.mrf.mxu0
    %v426 = vadd.f32 0.0, %v425
    %427 = vdwg.mxu0
    %428 = vmatpush.bf16.msra.mxu0 0
    %429 = vmatpush.bf16.msra.mxu0 0
    %430 = vmatpush.bf16.msra.mxu0 0
    %431 = vmatpush.bf16.msra.mxu0 0
    %432 = vmatpush.bf16.msra.mxu0 0
    %433 = vmatpush.bf16.msra.mxu0 0
    %434 = vmatpush.bf16.msra.mxu0 %v395
    %435 = vmatpush.bf16.msra.mxu0 %v392
    %436 = vmatmul.bf16.gmra.mxu0 %v404
    %v437 = vpop.f32.mrf.mxu0
    %v438 = vadd.f32 0.0, %v437
    %v439 = vpop.f32.mrf.mxu0
    %v440 = vadd.f32 0.0, %v439
    %441 = vmatmul.bf16.gmra.mxu0 %v407
    %v442 = vpop.f32.mrf.mxu0
    %v443 = vadd.f32 0.0, %v442
    %v444 = vpop.f32.mrf.mxu0
    %v445 = vadd.f32 0.0, %v444
    %446 = vdwg.mxu0
    %447 = vmatpush.bf16.msra.mxu0 0
    %448 = vmatpush.bf16.msra.mxu0 0
    %449 = vmatpush.bf16.msra.mxu0 0
    %450 = vmatpush.bf16.msra.mxu0 0
    %451 = vmatpush.bf16.msra.mxu0 0
    %452 = vmatpush.bf16.msra.mxu0 0
    %453 = vmatpush.bf16.msra.mxu0 %v396
    %454 = vmatpush.bf16.msra.mxu0 %v393
    %455 = vmatmul.bf16.gmra.mxu0 %v404
    %v456 = vpop.f32.mrf.mxu0
    %v457 = vadd.f32 0.0, %v456
    %v458 = vpop.f32.mrf.mxu0
    %v459 = vadd.f32 0.0, %v458
    %460 = vmatmul.bf16.gmra.mxu0 %v407
    %v461 = vpop.f32.mrf.mxu0
    %v462 = vadd.f32 0.0, %v461
    %v463 = vpop.f32.mrf.mxu0
    %v464 = vadd.f32 0.0, %v463
    %465 = vdwg.mxu0
    %v466 = vmax.f32 %v419, %v421
    %v467 = vrot.slane %v466, 4
    %v468 = vmax.f32 %v466, %v467
    %v469 = vrot.slane %v468, 2
    %v470 = vmax.f32 %v468, %v469
    %v471 = vrot.slane %v470, 1
    %v472 = vmax.f32 %v470, %v471
    %v473 = vmax.f32 %v438, %v440
    %v474 = vrot.slane %v473, 4
    %v475 = vmax.f32 %v473, %v474
    %v476 = vrot.slane %v475, 2
    %v477 = vmax.f32 %v475, %v476
    %v478 = vrot.slane %v477, 1
    %v479 = vmax.f32 %v477, %v478
    %v480 = vsel %vm227, %v457, -inf
    %v481 = vsel %vm227, %v459, -inf
    %v482 = vmax.f32 %v480, %v481
    %v483 = vrot.slane %v482, 4
    %v484 = vmax.f32 %v482, %v483
    %v485 = vrot.slane %v484, 2
    %v486 = vmax.f32 %v484, %v485
    %v487 = vrot.slane %v486, 1
    %v488 = vmax.f32 %v486, %v487
    %v489 = vmax.f32 %v424, %v426
    %v490 = vrot.slane %v489, 4
    %v491 = vmax.f32 %v489, %v490
    %v492 = vrot.slane %v491, 2
    %v493 = vmax.f32 %v491, %v492
    %v494 = vrot.slane %v493, 1
    %v495 = vmax.f32 %v493, %v494
    %v496 = vmax.f32 %v443, %v445
    %v497 = vrot.slane %v496, 4
    %v498 = vmax.f32 %v496, %v497
    %v499 = vrot.slane %v498, 2
    %v500 = vmax.f32 %v498, %v499
    %v501 = vrot.slane %v500, 1
    %v502 = vmax.f32 %v500, %v501
    %v503 = vsel %vm227, %v462, -inf
    %v504 = vsel %vm227, %v464, -inf
    %v505 = vmax.f32 %v503, %v504
    %v506 = vrot.slane %v505, 4
    %v507 = vmax.f32 %v505, %v506
    %v508 = vrot.slane %v507, 2
    %v509 = vmax.f32 %v507, %v508
    %v510 = vrot.slane %v509, 1
    %v511 = vmax.f32 %v509, %v510
    %v512 = vld [vmem:[%s8] sm:$0x7]
    %v514 = vperm.slane %v512, 0
    %v515 = vperm.slane %v512, 1
    %v516 = vperm.slane %v512, 2
    %v520 = vadd.f32 %v472, %v514
    %v521 = vadd.f32 %v479, %v515
    %v522 = vadd.f32 %v488, %v516
    %v523 = vadd.f32 %v495, %v514
    %v524 = vadd.f32 %v502, %v515
    %v525 = vadd.f32 %v511, %v516
    %v529 = vrot.slane %v311, 1
    %v530 = vrot.slane %v331, 1
    %v531 = vrot.slane %v351, 1
    %v538 = vmul.f32 %v520, %v311
    %v539 = vmul.f32 %v521, %v331
    %v540 = vmul.f32 %v522, %v351
    %v541 = vmul.f32 %v523, %v529
    %v542 = vmul.f32 %v524, %v530
    %v543 = vmul.f32 %v525, %v531
    %v544 = vpack.c.bf16 %v538, %v538
    %v545 = vpack.c.bf16 %v539, %v539
    %v546 = vpack.c.bf16 %v540, %v540
    %v547 = vpack.c.bf16 %v541, %v541
    %v548 = vpack.c.bf16 %v542, %v542
    %v549 = vpack.c.bf16 %v543, %v543
    %v550 = vld [vmem:[%s9] sm:$0xf]
    %v551 = vld [vmem:[%s9 + $0x4] sm:$0xf]
    %v552 = vld [vmem:[%s9 + $0x8] sm:$0xf]
    %v553 = vld [vmem:[%s9 + $0xc] sm:$0xf]
    %v554 = vld [vmem:[%s9 + $0x10] sm:$0xf]
    %v555 = vld [vmem:[%s9 + $0x14] sm:$0xf]
    %v556 = vld [vmem:[%s9 + $0x18] sm:$0xf]
    %v557 = vld [vmem:[%s9 + $0x1c] sm:$0xf]
    %v558 = vld [vmem:[%s9 + $0x20] sm:$0xf]
    %v559 = vld [vmem:[%s9 + $0x24] sm:$0xf]
    %v560 = vld [vmem:[%s9 + $0x28] sm:$0xf]
    %v561 = vld [vmem:[%s9 + $0x2c] sm:$0xf]
    %v562 = vld [vmem:[%s9 + $0x30] sm:$0xf]
    %v563 = vld [vmem:[%s9 + $0x34] sm:$0xf]
    %v564 = vld [vmem:[%s9 + $0x38] sm:$0xf]
    %v565 = vld [vmem:[%s9 + $0x3c] sm:$0xf]
    %v566 = vld [vmem:[%s9 + $0x40] sm:$0xf]
    %v567 = vld [vmem:[%s9 + $0x44] sm:$0xf]
    %v568 = vld [vmem:[%s9 + $0x48] sm:$0xf]
    %v569 = vld [vmem:[%s9 + $0x4c] sm:$0xf]
    %v570 = vld [vmem:[%s9 + $0x50] sm:$0xf]
    %v571 = vld [vmem:[%s9 + $0x54] sm:$0xf]
    %v572 = vld [vmem:[%s9 + $0x58] sm:$0xf]
    %v573 = vld [vmem:[%s9 + $0x5c] sm:$0xf]
    %v574 = vld [vmem:[%s9 + $0x60] sm:$0xf]
    %v575 = vld [vmem:[%s9 + $0x64] sm:$0xf]
    %v576 = vld [vmem:[%s9 + $0x68] sm:$0xf]
    %v577 = vld [vmem:[%s9 + $0x6c] sm:$0xf]
    %v578 = vld [vmem:[%s9 + $0x70] sm:$0xf]
    %v579 = vld [vmem:[%s9 + $0x74] sm:$0xf]
    %v580 = vld [vmem:[%s9 + $0x78] sm:$0xf]
    %v581 = vld [vmem:[%s9 + $0x7c] sm:$0xf]
    %v582 = vld [vmem:[%s9 + $0x80] sm:$0xf]
    %v583 = vld [vmem:[%s9 + $0x84] sm:$0xf]
    %v584 = vld [vmem:[%s9 + $0x88] sm:$0xf]
    %v585 = vld [vmem:[%s9 + $0x8c] sm:$0xf]
    %v586 = vld [vmem:[%s9 + $0x90] sm:$0xf]
    %v587 = vld [vmem:[%s9 + $0x94] sm:$0xf]
    %v588 = vld [vmem:[%s9 + $0x98] sm:$0xf]
    %v589 = vld [vmem:[%s9 + $0x9c] sm:$0xf]
    %v590 = vld [vmem:[%s10] sm:$0xff]
    %v591 = vld [vmem:[%s10 + $0x8] sm:$0xf]
    %v592 = vld [vmem:[%s10 + $0xc] sm:$0xff]
    %v593 = vld [vmem:[%s10 + $0x14] sm:$0xf]
    %v594 = vld [vmem:[%s10 + $0x18] sm:$0xff]
    %v595 = vld [vmem:[%s10 + $0x20] sm:$0xf]
    %v596 = vld [vmem:[%s10 + $0x24] sm:$0xff]
    %v597 = vld [vmem:[%s10 + $0x2c] sm:$0xf]
    %v606 = vunpack.c.l.b16 %v590
    %v607 = vunpack.c.h.b16 %v590
    %v608 = vunpack.c.l.b16 %v591
    %v609 = vunpack.c.l.b16 %v592
    %v610 = vunpack.c.h.b16 %v592
    %v611 = vunpack.c.l.b16 %v593
    %v612 = vunpack.c.l.b16 %v594
    %v613 = vunpack.c.h.b16 %v594
    %v614 = vunpack.c.l.b16 %v595
    %v615 = vunpack.c.l.b16 %v596
    %v616 = vunpack.c.h.b16 %v596
    %v617 = vunpack.c.l.b16 %v597
    %v618 = vpack.c.b16 %v609, %v606
    %v619 = vpack.c.b16 %v610, %v607
    %v620 = vpack.c.b16 %v611, %v608
    %v621 = vpack.c.b16 %v615, %v612
    %v622 = vpack.c.b16 %v616, %v613
    %v623 = vpack.c.b16 %v617, %v614
    %630 = vmatpush.bf16.msra.mxu0 0
    %631 = vmatpush.bf16.msra.mxu0 0
    %632 = vmatpush.bf16.msra.mxu0 0
    %633 = vmatpush.bf16.msra.mxu0 0
    %634 = vmatpush.bf16.msra.mxu0 0
    %635 = vmatpush.bf16.msra.mxu0 0
    %636 = vmatpush.bf16.msra.mxu0 %v621
    %637 = vmatpush.bf16.msra.mxu0 %v618
    %638 = vmatmul.bf16.gmra.mxu0 %v404
    %v639 = vpop.f32.mrf.mxu0
    %v640 = vadd.f32 0.0, %v639
    %v641 = vpop.f32.mrf.mxu0
    %v642 = vadd.f32 0.0, %v641
    %643 = vmatmul.bf16.gmra.mxu0 %v407
    %v644 = vpop.f32.mrf.mxu0
    %v645 = vadd.f32 0.0, %v644
    %v646 = vpop.f32.mrf.mxu0
    %v647 = vadd.f32 0.0, %v646
    %648 = vdwg.mxu0
    %649 = vmatpush.bf16.msra.mxu0 0
    %650 = vmatpush.bf16.msra.mxu0 0
    %651 = vmatpush.bf16.msra.mxu0 0
    %652 = vmatpush.bf16.msra.mxu0 0
    %653 = vmatpush.bf16.msra.mxu0 0
    %654 = vmatpush.bf16.msra.mxu0 0
    %655 = vmatpush.bf16.msra.mxu0 %v622
    %656 = vmatpush.bf16.msra.mxu0 %v619
    %657 = vmatmul.bf16.gmra.mxu0 %v404
    %v658 = vpop.f32.mrf.mxu0
    %v659 = vadd.f32 0.0, %v658
    %v660 = vpop.f32.mrf.mxu0
    %v661 = vadd.f32 0.0, %v660
    %662 = vmatmul.bf16.gmra.mxu0 %v407
    %v663 = vpop.f32.mrf.mxu0
    %v664 = vadd.f32 0.0, %v663
    %v665 = vpop.f32.mrf.mxu0
    %v666 = vadd.f32 0.0, %v665
    %667 = vdwg.mxu0
    %668 = vmatpush.bf16.msra.mxu0 0
    %669 = vmatpush.bf16.msra.mxu0 0
    %670 = vmatpush.bf16.msra.mxu0 0
    %671 = vmatpush.bf16.msra.mxu0 0
    %672 = vmatpush.bf16.msra.mxu0 0
    %673 = vmatpush.bf16.msra.mxu0 0
    %674 = vmatpush.bf16.msra.mxu0 %v623
    %675 = vmatpush.bf16.msra.mxu0 %v620
    %676 = vmatmul.bf16.gmra.mxu0 %v404
    %v677 = vpop.f32.mrf.mxu0
    %v678 = vadd.f32 0.0, %v677
    %v679 = vpop.f32.mrf.mxu0
    %v680 = vadd.f32 0.0, %v679
    %681 = vmatmul.bf16.gmra.mxu0 %v407
    %v682 = vpop.f32.mrf.mxu0
    %v683 = vadd.f32 0.0, %v682
    %v684 = vpop.f32.mrf.mxu0
    %v685 = vadd.f32 0.0, %v684
    %686 = vdwg.mxu0
    %s687 = scalar_lea.vmem %s10, 48
    %v688 = vld [vmem:[%s687] sm:$0xff]
    %v689 = vld [vmem:[%s687 + $0x8] sm:$0xf]
    %v690 = vld [vmem:[%s687 + $0xc] sm:$0xff]
    %v691 = vld [vmem:[%s687 + $0x14] sm:$0xf]
    %v692 = vld [vmem:[%s687 + $0x18] sm:$0xff]
    %v693 = vld [vmem:[%s687 + $0x20] sm:$0xf]
    %v694 = vld [vmem:[%s687 + $0x24] sm:$0xff]
    %v695 = vld [vmem:[%s687 + $0x2c] sm:$0xf]
    %v704 = vunpack.c.l.b16 %v688
    %v705 = vunpack.c.h.b16 %v688
    %v706 = vunpack.c.l.b16 %v689
    %v707 = vunpack.c.l.b16 %v690
    %v708 = vunpack.c.h.b16 %v690
    %v709 = vunpack.c.l.b16 %v691
    %v710 = vunpack.c.l.b16 %v692
    %v711 = vunpack.c.h.b16 %v692
    %v712 = vunpack.c.l.b16 %v693
    %v713 = vunpack.c.l.b16 %v694
    %v714 = vunpack.c.h.b16 %v694
    %v715 = vunpack.c.l.b16 %v695
    %v716 = vpack.c.b16 %v707, %v704
    %v717 = vpack.c.b16 %v708, %v705
    %v718 = vpack.c.b16 %v709, %v706
    %v719 = vpack.c.b16 %v713, %v710
    %v720 = vpack.c.b16 %v714, %v711
    %v721 = vpack.c.b16 %v715, %v712
    %728 = vmatpush.bf16.msra.mxu0 0
    %729 = vmatpush.bf16.msra.mxu0 0
    %730 = vmatpush.bf16.msra.mxu0 0
    %731 = vmatpush.bf16.msra.mxu0 0
    %732 = vmatpush.bf16.msra.mxu0 0
    %733 = vmatpush.bf16.msra.mxu0 0
    %734 = vmatpush.bf16.msra.mxu0 %v719
    %735 = vmatpush.bf16.msra.mxu0 %v716
    %736 = vmatmul.bf16.gmra.mxu0 %v404
    %v737 = vpop.f32.mrf.mxu0
    %v738 = vadd.f32 0.0, %v737
    %v739 = vpop.f32.mrf.mxu0
    %v740 = vadd.f32 0.0, %v739
    %741 = vmatmul.bf16.gmra.mxu0 %v407
    %v742 = vpop.f32.mrf.mxu0
    %v743 = vadd.f32 0.0, %v742
    %v744 = vpop.f32.mrf.mxu0
    %v745 = vadd.f32 0.0, %v744
    %746 = vdwg.mxu0
    %747 = vmatpush.bf16.msra.mxu0 0
    %748 = vmatpush.bf16.msra.mxu0 0
    %749 = vmatpush.bf16.msra.mxu0 0
    %750 = vmatpush.bf16.msra.mxu0 0
    %751 = vmatpush.bf16.msra.mxu0 0
    %752 = vmatpush.bf16.msra.mxu0 0
    %753 = vmatpush.bf16.msra.mxu0 %v720
    %754 = vmatpush.bf16.msra.mxu0 %v717
    %755 = vmatmul.bf16.gmra.mxu0 %v404
    %v756 = vpop.f32.mrf.mxu0
    %v757 = vadd.f32 0.0, %v756
    %v758 = vpop.f32.mrf.mxu0
    %v759 = vadd.f32 0.0, %v758
    %760 = vmatmul.bf16.gmra.mxu0 %v407
    %v761 = vpop.f32.mrf.mxu0
    %v762 = vadd.f32 0.0, %v761
    %v763 = vpop.f32.mrf.mxu0
    %v764 = vadd.f32 0.0, %v763
    %765 = vdwg.mxu0
    %766 = vmatpush.bf16.msra.mxu0 0
    %767 = vmatpush.bf16.msra.mxu0 0
    %768 = vmatpush.bf16.msra.mxu0 0
    %769 = vmatpush.bf16.msra.mxu0 0
    %770 = vmatpush.bf16.msra.mxu0 0
    %771 = vmatpush.bf16.msra.mxu0 0
    %772 = vmatpush.bf16.msra.mxu0 %v721
    %773 = vmatpush.bf16.msra.mxu0 %v718
    %774 = vmatmul.bf16.gmra.mxu0 %v404
    %v775 = vpop.f32.mrf.mxu0
    %v776 = vadd.f32 0.0, %v775
    %v777 = vpop.f32.mrf.mxu0
    %v778 = vadd.f32 0.0, %v777
    %779 = vmatmul.bf16.gmra.mxu0 %v407
    %v780 = vpop.f32.mrf.mxu0
    %v781 = vadd.f32 0.0, %v780
    %v782 = vpop.f32.mrf.mxu0
    %v783 = vadd.f32 0.0, %v782
    %784 = vdwg.mxu0
    %vm797 = vcmask 1046528
    %v798 = vrot.slane %v738, 1
    %v799 = vrot.slane %v740, 1
    %v800 = vsel %vm797, %v798, %v799
    %v801 = vrot.slane %v757, 1
    %v802 = vrot.slane %v759, 1
    %v803 = vsel %vm797, %v801, %v802
    %v804 = vrot.slane %v776, 1
    %v805 = vrot.slane %v778, 1
    %v806 = vsel %vm797, %v804, %v805
    %v807 = vrot.slane %v743, 1
    %v808 = vrot.slane %v745, 1
    %v809 = vsel %vm797, %v807, %v808
    %v810 = vrot.slane %v762, 1
    %v811 = vrot.slane %v764, 1
    %v812 = vsel %vm797, %v810, %v811
    %v813 = vrot.slane %v781, 1
    %v814 = vrot.slane %v783, 1
    %v815 = vsel %vm797, %v813, %v814
    %v828 = vadd.f32 %v640, %v800
    %v829 = vadd.f32 %v659, %v803
    %v830 = vadd.f32 %v678, %v806
    %v831 = vadd.f32 %v642, %v799
    %v832 = vadd.f32 %v661, %v802
    %v833 = vadd.f32 %v680, %v805
    %v834 = vadd.f32 %v645, %v809
    %v835 = vadd.f32 %v664, %v812
    %v836 = vadd.f32 %v683, %v815
    %v837 = vadd.f32 %v647, %v808
    %v838 = vadd.f32 %v666, %v811
    %v839 = vadd.f32 %v685, %v814
    %v840 = vsel %vm797, %v831, -inf
    %v841 = vmax.f32 %v828, %v840
    %v842 = vrot.slane %v841, 4
    %v843 = vmax.f32 %v841, %v842
    %v844 = vrot.slane %v843, 2
    %v845 = vmax.f32 %v843, %v844
    %v846 = vrot.slane %v845, 1
    %v847 = vmax.f32 %v845, %v846
    %v848 = vsel %vm797, %v832, -inf
    %v849 = vmax.f32 %v829, %v848
    %v850 = vrot.slane %v849, 4
    %v851 = vmax.f32 %v849, %v850
    %v852 = vrot.slane %v851, 2
    %v853 = vmax.f32 %v851, %v852
    %v854 = vrot.slane %v853, 1
    %v855 = vmax.f32 %v853, %v854
    %v856 = vsel %vm227, %v830, -inf
    %vm857 = vcmask 522240
    %v858 = vsel %vm857, %v833, -inf
    %v859 = vmax.f32 %v856, %v858
    %v860 = vrot.slane %v859, 4
    %v861 = vmax.f32 %v859, %v860
    %v862 = vrot.slane %v861, 2
    %v863 = vmax.f32 %v861, %v862
    %v864 = vrot.slane %v863, 1
    %v865 = vmax.f32 %v863, %v864
    %v866 = vsel %vm797, %v837, -inf
    %v867 = vmax.f32 %v834, %v866
    %v868 = vrot.slane %v867, 4
    %v869 = vmax.f32 %v867, %v868
    %v870 = vrot.slane %v869, 2
    %v871 = vmax.f32 %v869, %v870
    %v872 = vrot.slane %v871, 1
    %v873 = vmax.f32 %v871, %v872
    %v874 = vsel %vm797, %v838, -inf
    %v875 = vmax.f32 %v835, %v874
    %v876 = vrot.slane %v875, 4
    %v877 = vmax.f32 %v875, %v876
    %v878 = vrot.slane %v877, 2
    %v879 = vmax.f32 %v877, %v878
    %v880 = vrot.slane %v879, 1
    %v881 = vmax.f32 %v879, %v880
    %v882 = vsel %vm227, %v836, -inf
    %v883 = vsel %vm857, %v839, -inf
    %v884 = vmax.f32 %v882, %v883
    %v885 = vrot.slane %v884, 4
    %v886 = vmax.f32 %v884, %v885
    %v887 = vrot.slane %v886, 2
    %v888 = vmax.f32 %v886, %v887
    %v889 = vrot.slane %v888, 1
    %v890 = vmax.f32 %v888, %v889
    %v891 = vld [vmem:[%s11] sm:$0x7]
    %v893 = vperm.slane %v891, 0
    %v894 = vperm.slane %v891, 1
    %v895 = vperm.slane %v891, 2
    %v899 = vadd.f32 %v847, %v893
    %v900 = vadd.f32 %v855, %v894
    %v901 = vadd.f32 %v865, %v895
    %v902 = vadd.f32 %v873, %v893
    %v903 = vadd.f32 %v881, %v894
    %v904 = vadd.f32 %v890, %v895
    %v905 = vmul.f32 %v899, %v311
    %v906 = vmul.f32 %v900, %v331
    %v907 = vmul.f32 %v901, %v351
    %v908 = vmul.f32 %v902, %v529
    %v909 = vmul.f32 %v903, %v530
    %v910 = vmul.f32 %v904, %v531
    %v911 = vpack.c.bf16 %v905, %v905
    %v912 = vpack.c.bf16 %v906, %v906
    %v913 = vpack.c.bf16 %v907, %v907
    %v914 = vpack.c.bf16 %v908, %v908
    %v915 = vpack.c.bf16 %v909, %v909
    %v916 = vpack.c.bf16 %v910, %v910
    %v917 = vld [vmem:[%s12] sm:$0xf]
    %v918 = vld [vmem:[%s12 + $0x4] sm:$0xf]
    %v919 = vld [vmem:[%s12 + $0x8] sm:$0xf]
    %v920 = vld [vmem:[%s12 + $0xc] sm:$0xf]
    %v921 = vld [vmem:[%s12 + $0x10] sm:$0xf]
    %v922 = vld [vmem:[%s12 + $0x14] sm:$0xf]
    %v923 = vld [vmem:[%s12 + $0x18] sm:$0xf]
    %v924 = vld [vmem:[%s12 + $0x1c] sm:$0xf]
    %v925 = vld [vmem:[%s12 + $0x20] sm:$0xf]
    %v926 = vld [vmem:[%s12 + $0x24] sm:$0xf]
    %v927 = vld [vmem:[%s12 + $0x28] sm:$0xf]
    %v928 = vld [vmem:[%s12 + $0x2c] sm:$0xf]
    %v929 = vld [vmem:[%s12 + $0x30] sm:$0xf]
    %v930 = vld [vmem:[%s12 + $0x34] sm:$0xf]
    %v931 = vld [vmem:[%s12 + $0x38] sm:$0xf]
    %v932 = vld [vmem:[%s12 + $0x3c] sm:$0xf]
    %v933 = vld [vmem:[%s12 + $0x40] sm:$0xf]
    %v934 = vld [vmem:[%s12 + $0x44] sm:$0xf]
    %v935 = vld [vmem:[%s12 + $0x48] sm:$0xf]
    %v936 = vld [vmem:[%s12 + $0x4c] sm:$0xf]
    %v937 = vld [vmem:[%s12 + $0x50] sm:$0xf]
    %v938 = vld [vmem:[%s12 + $0x54] sm:$0xf]
    %v939 = vld [vmem:[%s12 + $0x58] sm:$0xf]
    %v940 = vld [vmem:[%s12 + $0x5c] sm:$0xf]
    %v941 = vld [vmem:[%s12 + $0x60] sm:$0xf]
    %v942 = vld [vmem:[%s12 + $0x64] sm:$0xf]
    %v943 = vld [vmem:[%s12 + $0x68] sm:$0xf]
    %v944 = vld [vmem:[%s12 + $0x6c] sm:$0xf]
    %v945 = vld [vmem:[%s12 + $0x70] sm:$0xf]
    %v946 = vld [vmem:[%s12 + $0x74] sm:$0xf]
    %v947 = vld [vmem:[%s12 + $0x78] sm:$0xf]
    %v948 = vld [vmem:[%s12 + $0x7c] sm:$0xf]
    %v949 = vld [vmem:[%s12 + $0x80] sm:$0xf]
    %v950 = vld [vmem:[%s12 + $0x84] sm:$0xf]
    %v951 = vld [vmem:[%s12 + $0x88] sm:$0xf]
    %v952 = vld [vmem:[%s12 + $0x8c] sm:$0xf]
    %v953 = vld [vmem:[%s12 + $0x90] sm:$0xf]
    %v954 = vld [vmem:[%s12 + $0x94] sm:$0xf]
    %v955 = vld [vmem:[%s12 + $0x98] sm:$0xf]
    %v956 = vld [vmem:[%s12 + $0x9c] sm:$0xf]
    %v963 = vunpack.c.l.b16 %v911
    %v964 = vunpack.c.l.b16 %v912
    %v965 = vunpack.c.l.b16 %v913
    %v966 = vunpack.c.l.b16 %v914
    %v967 = vunpack.c.l.b16 %v915
    %v968 = vunpack.c.l.b16 %v916
    %v969 = vrot.slane %v966, 7
    %vm970 = vcmask 1041409
    %v971 = vsel %vm970, %v969, %v963
    %v972 = vrot.slane %v967, 7
    %v973 = vsel %vm970, %v972, %v964
    %v974 = vrot.slane %v968, 7
    %v975 = vsel %vm970, %v974, %v965
    %v976 = vpack.c.b16 %v971, %v971
    %v977 = vpack.c.b16 %v973, %v973
    %v978 = vpack.c.b16 %v975, %v975
    %v1021 = vunpack.c.l.b16 %v917
    %v1022 = vunpack.c.l.b16 %v918
    %v1023 = vunpack.c.l.b16 %v919
    %v1024 = vunpack.c.l.b16 %v920
    %v1025 = vunpack.c.l.b16 %v921
    %v1026 = vunpack.c.l.b16 %v922
    %v1027 = vunpack.c.l.b16 %v923
    %v1028 = vunpack.c.l.b16 %v924
    %v1029 = vunpack.c.l.b16 %v925
    %v1030 = vunpack.c.l.b16 %v926
    %v1031 = vunpack.c.l.b16 %v927
    %v1032 = vunpack.c.l.b16 %v928
    %v1033 = vunpack.c.l.b16 %v929
    %v1034 = vunpack.c.l.b16 %v930
    %v1035 = vunpack.c.l.b16 %v931
    %v1036 = vunpack.c.l.b16 %v932
    %v1037 = vunpack.c.l.b16 %v933
    %v1038 = vunpack.c.l.b16 %v934
    %v1039 = vunpack.c.l.b16 %v935
    %v1040 = vunpack.c.l.b16 %v936
    %v1041 = vunpack.c.l.b16 %v937
    %v1042 = vunpack.c.l.b16 %v938
    %v1043 = vunpack.c.l.b16 %v939
    %v1044 = vunpack.c.l.b16 %v940
    %v1045 = vunpack.c.l.b16 %v941
    %v1046 = vunpack.c.l.b16 %v942
    %v1047 = vunpack.c.l.b16 %v943
    %v1048 = vunpack.c.l.b16 %v944
    %v1049 = vunpack.c.l.b16 %v945
    %v1050 = vunpack.c.l.b16 %v946
    %v1051 = vunpack.c.l.b16 %v947
    %v1052 = vunpack.c.l.b16 %v948
    %v1053 = vunpack.c.l.b16 %v949
    %v1054 = vunpack.c.l.b16 %v950
    %v1055 = vunpack.c.l.b16 %v951
    %v1056 = vunpack.c.l.b16 %v952
    %v1057 = vunpack.c.l.b16 %v953
    %v1058 = vunpack.c.l.b16 %v954
    %v1059 = vunpack.c.l.b16 %v955
    %v1060 = vunpack.c.l.b16 %v956
    %v1061 = vpack.c.b16 %v1022, %v1021
    %v1062 = vpack.c.b16 %v1024, %v1023
    %v1063 = vpack.c.b16 %v1026, %v1025
    %v1064 = vpack.c.b16 %v1028, %v1027
    %v1065 = vpack.c.b16 %v1030, %v1029
    %v1066 = vpack.c.b16 %v1032, %v1031
    %v1067 = vpack.c.b16 %v1034, %v1033
    %v1068 = vpack.c.b16 %v1036, %v1035
    %v1069 = vpack.c.b16 %v1038, %v1037
    %v1070 = vpack.c.b16 %v1040, %v1039
    %v1071 = vpack.c.b16 %v1042, %v1041
    %v1072 = vpack.c.b16 %v1044, %v1043
    %v1073 = vpack.c.b16 %v1046, %v1045
    %v1074 = vpack.c.b16 %v1048, %v1047
    %v1075 = vpack.c.b16 %v1050, %v1049
    %v1076 = vpack.c.b16 %v1052, %v1051
    %v1077 = vpack.c.b16 %v1054, %v1053
    %v1078 = vpack.c.b16 %v1056, %v1055
    %v1079 = vpack.c.b16 %v1058, %v1057
    %v1080 = vpack.c.b16 %v1060, %v1059
    %v1102 = vsel %vm227, %v978, 0
    %1104 = vmatpush.bf16.msra.mxu0 %v1068
    %1105 = vmatpush.bf16.msra.mxu0 %v1067
    %1106 = vmatpush.bf16.msra.mxu0 %v1066
    %1107 = vmatpush.bf16.msra.mxu0 %v1065
    %1108 = vmatpush.bf16.msra.mxu0 %v1064
    %1109 = vmatpush.bf16.msra.mxu0 %v1063
    %1110 = vmatpush.bf16.msra.mxu0 %v1062
    %1111 = vmatpush.bf16.msra.mxu0 %v1061
    %1112 = vmatmul.bf16.gmra.mxu0 %v976
    %v1113 = vpop.f32.mrf.mxu0
    %v1114 = vadd.f32 0.0, %v1113
    %v1115 = vpop.f32.mrf.mxu0
    %1116 = vdwg.mxu0
    %1117 = vmatpush.bf16.msra.mxu0 %v1076
    %1118 = vmatpush.bf16.msra.mxu0 %v1075
    %1119 = vmatpush.bf16.msra.mxu0 %v1074
    %1120 = vmatpush.bf16.msra.mxu0 %v1073
    %1121 = vmatpush.bf16.msra.mxu0 %v1072
    %1122 = vmatpush.bf16.msra.mxu0 %v1071
    %1123 = vmatpush.bf16.msra.mxu0 %v1070
    %1124 = vmatpush.bf16.msra.mxu0 %v1069
    %1125 = vmatmul.bf16.gmra.mxu0 %v977
    %v1126 = vpop.f32.mrf.mxu0
    %v1127 = vadd.f32 %v1114, %v1126
    %v1128 = vpop.f32.mrf.mxu0
    %1129 = vdwg.mxu0
    %1130 = vmatpush.bf16.msra.mxu0 0
    %1131 = vmatpush.bf16.msra.mxu0 0
    %1132 = vmatpush.bf16.msra.mxu0 0
    %1133 = vmatpush.bf16.msra.mxu0 0
    %1134 = vmatpush.bf16.msra.mxu0 %v1080
    %1135 = vmatpush.bf16.msra.mxu0 %v1079
    %1136 = vmatpush.bf16.msra.mxu0 %v1078
    %1137 = vmatpush.bf16.msra.mxu0 %v1077
    %1138 = vmatmul.bf16.gmra.mxu0 %v1102
    %v1139 = vpop.f32.mrf.mxu0
    %v1140 = vadd.f32 %v1127, %v1139
    %v1141 = vpop.f32.mrf.mxu0
    %1142 = vdwg.mxu0
    %v1149 = vunpack.c.l.b16 %v544
    %v1150 = vunpack.c.l.b16 %v545
    %v1151 = vunpack.c.l.b16 %v546
    %v1152 = vunpack.c.l.b16 %v547
    %v1153 = vunpack.c.l.b16 %v548
    %v1154 = vunpack.c.l.b16 %v549
    %v1155 = vrot.slane %v1152, 7
    %v1156 = vsel %vm970, %v1155, %v1149
    %v1157 = vrot.slane %v1153, 7
    %v1158 = vsel %vm970, %v1157, %v1150
    %v1159 = vrot.slane %v1154, 7
    %v1160 = vsel %vm970, %v1159, %v1151
    %v1161 = vpack.c.b16 %v1156, %v1156
    %v1162 = vpack.c.b16 %v1158, %v1158
    %v1163 = vpack.c.b16 %v1160, %v1160
    %v1206 = vunpack.c.l.b16 %v550
    %v1207 = vunpack.c.l.b16 %v551
    %v1208 = vunpack.c.l.b16 %v552
    %v1209 = vunpack.c.l.b16 %v553
    %v1210 = vunpack.c.l.b16 %v554
    %v1211 = vunpack.c.l.b16 %v555
    %v1212 = vunpack.c.l.b16 %v556
    %v1213 = vunpack.c.l.b16 %v557
    %v1214 = vunpack.c.l.b16 %v558
    %v1215 = vunpack.c.l.b16 %v559
    %v1216 = vunpack.c.l.b16 %v560
    %v1217 = vunpack.c.l.b16 %v561
    %v1218 = vunpack.c.l.b16 %v562
    %v1219 = vunpack.c.l.b16 %v563
    %v1220 = vunpack.c.l.b16 %v564
    %v1221 = vunpack.c.l.b16 %v565
    %v1222 = vunpack.c.l.b16 %v566
    %v1223 = vunpack.c.l.b16 %v567
    %v1224 = vunpack.c.l.b16 %v568
    %v1225 = vunpack.c.l.b16 %v569
    %v1226 = vunpack.c.l.b16 %v570
    %v1227 = vunpack.c.l.b16 %v571
    %v1228 = vunpack.c.l.b16 %v572
    %v1229 = vunpack.c.l.b16 %v573
    %v1230 = vunpack.c.l.b16 %v574
    %v1231 = vunpack.c.l.b16 %v575
    %v1232 = vunpack.c.l.b16 %v576
    %v1233 = vunpack.c.l.b16 %v577
    %v1234 = vunpack.c.l.b16 %v578
    %v1235 = vunpack.c.l.b16 %v579
    %v1236 = vunpack.c.l.b16 %v580
    %v1237 = vunpack.c.l.b16 %v581
    %v1238 = vunpack.c.l.b16 %v582
    %v1239 = vunpack.c.l.b16 %v583
    %v1240 = vunpack.c.l.b16 %v584
    %v1241 = vunpack.c.l.b16 %v585
    %v1242 = vunpack.c.l.b16 %v586
    %v1243 = vunpack.c.l.b16 %v587
    %v1244 = vunpack.c.l.b16 %v588
    %v1245 = vunpack.c.l.b16 %v589
    %v1246 = vpack.c.b16 %v1207, %v1206
    %v1247 = vpack.c.b16 %v1209, %v1208
    %v1248 = vpack.c.b16 %v1211, %v1210
    %v1249 = vpack.c.b16 %v1213, %v1212
    %v1250 = vpack.c.b16 %v1215, %v1214
    %v1251 = vpack.c.b16 %v1217, %v1216
    %v1252 = vpack.c.b16 %v1219, %v1218
    %v1253 = vpack.c.b16 %v1221, %v1220
    %v1254 = vpack.c.b16 %v1223, %v1222
    %v1255 = vpack.c.b16 %v1225, %v1224
    %v1256 = vpack.c.b16 %v1227, %v1226
    %v1257 = vpack.c.b16 %v1229, %v1228
    %v1258 = vpack.c.b16 %v1231, %v1230
    %v1259 = vpack.c.b16 %v1233, %v1232
    %v1260 = vpack.c.b16 %v1235, %v1234
    %v1261 = vpack.c.b16 %v1237, %v1236
    %v1262 = vpack.c.b16 %v1239, %v1238
    %v1263 = vpack.c.b16 %v1241, %v1240
    %v1264 = vpack.c.b16 %v1243, %v1242
    %v1265 = vpack.c.b16 %v1245, %v1244
    %v1287 = vsel %vm227, %v1163, 0
    %1289 = vmatpush.bf16.msra.mxu0 %v1253
    %1290 = vmatpush.bf16.msra.mxu0 %v1252
    %1291 = vmatpush.bf16.msra.mxu0 %v1251
    %1292 = vmatpush.bf16.msra.mxu0 %v1250
    %1293 = vmatpush.bf16.msra.mxu0 %v1249
    %1294 = vmatpush.bf16.msra.mxu0 %v1248
    %1295 = vmatpush.bf16.msra.mxu0 %v1247
    %1296 = vmatpush.bf16.msra.mxu0 %v1246
    %1297 = vmatmul.bf16.gmra.mxu0 %v1161
    %v1298 = vpop.f32.mrf.mxu0
    %v1299 = vadd.f32 %v1140, %v1298
    %v1300 = vpop.f32.mrf.mxu0
    %1301 = vdwg.mxu0
    %1302 = vmatpush.bf16.msra.mxu0 %v1261
    %1303 = vmatpush.bf16.msra.mxu0 %v1260
    %1304 = vmatpush.bf16.msra.mxu0 %v1259
    %1305 = vmatpush.bf16.msra.mxu0 %v1258
    %1306 = vmatpush.bf16.msra.mxu0 %v1257
    %1307 = vmatpush.bf16.msra.mxu0 %v1256
    %1308 = vmatpush.bf16.msra.mxu0 %v1255
    %1309 = vmatpush.bf16.msra.mxu0 %v1254
    %1310 = vmatmul.bf16.gmra.mxu0 %v1162
    %v1311 = vpop.f32.mrf.mxu0
    %v1312 = vadd.f32 %v1299, %v1311
    %v1313 = vpop.f32.mrf.mxu0
    %1314 = vdwg.mxu0
    %1315 = vmatpush.bf16.msra.mxu0 0
    %1316 = vmatpush.bf16.msra.mxu0 0
    %1317 = vmatpush.bf16.msra.mxu0 0
    %1318 = vmatpush.bf16.msra.mxu0 0
    %1319 = vmatpush.bf16.msra.mxu0 %v1265
    %1320 = vmatpush.bf16.msra.mxu0 %v1264
    %1321 = vmatpush.bf16.msra.mxu0 %v1263
    %1322 = vmatpush.bf16.msra.mxu0 %v1262
    %1323 = vmatmul.bf16.gmra.mxu0 %v1287
    %v1324 = vpop.f32.mrf.mxu0
    %v1325 = vadd.f32 %v1312, %v1324
    %v1326 = vpop.f32.mrf.mxu0
    %1327 = vdwg.mxu0
    %v1328 = vld [vmem:[%s13] sm:$0xff]
    %v1329 = vld [vmem:[%s13 + $0x8] sm:$0xf]
    %v1330 = vld [vmem:[%s13 + $0xc] sm:$0xff]
    %v1331 = vld [vmem:[%s13 + $0x14] sm:$0xf]
    %v1332 = vld [vmem:[%s13 + $0x18] sm:$0xff]
    %v1333 = vld [vmem:[%s13 + $0x20] sm:$0xf]
    %v1334 = vld [vmem:[%s13 + $0x24] sm:$0xff]
    %v1335 = vld [vmem:[%s13 + $0x2c] sm:$0xf]
    %v1344 = vunpack.c.l.b16 %v1328
    %v1345 = vunpack.c.h.b16 %v1328
    %v1346 = vunpack.c.l.b16 %v1329
    %v1347 = vunpack.c.l.b16 %v1330
    %v1348 = vunpack.c.h.b16 %v1330
    %v1349 = vunpack.c.l.b16 %v1331
    %v1350 = vunpack.c.l.b16 %v1332
    %v1351 = vunpack.c.h.b16 %v1332
    %v1352 = vunpack.c.l.b16 %v1333
    %v1353 = vunpack.c.l.b16 %v1334
    %v1354 = vunpack.c.h.b16 %v1334
    %v1355 = vunpack.c.l.b16 %v1335
    %v1356 = vpack.c.b16 %v1347, %v1344
    %v1357 = vpack.c.b16 %v1348, %v1345
    %v1358 = vpack.c.b16 %v1349, %v1346
    %v1359 = vpack.c.b16 %v1353, %v1350
    %v1360 = vpack.c.b16 %v1354, %v1351
    %v1361 = vpack.c.b16 %v1355, %v1352
    %1368 = vmatpush.bf16.msra.mxu0 0
    %1369 = vmatpush.bf16.msra.mxu0 0
    %1370 = vmatpush.bf16.msra.mxu0 0
    %1371 = vmatpush.bf16.msra.mxu0 0
    %1372 = vmatpush.bf16.msra.mxu0 0
    %1373 = vmatpush.bf16.msra.mxu0 0
    %1374 = vmatpush.bf16.msra.mxu0 %v1359
    %1375 = vmatpush.bf16.msra.mxu0 %v1356
    %1376 = vmatmul.bf16.gmra.mxu0 %v404
    %v1377 = vpop.f32.mrf.mxu0
    %v1378 = vadd.f32 0.0, %v1377
    %v1379 = vpop.f32.mrf.mxu0
    %v1380 = vadd.f32 0.0, %v1379
    %1381 = vmatmul.bf16.gmra.mxu0 %v407
    %v1382 = vpop.f32.mrf.mxu0
    %v1383 = vadd.f32 0.0, %v1382
    %v1384 = vpop.f32.mrf.mxu0
    %v1385 = vadd.f32 0.0, %v1384
    %1386 = vdwg.mxu0
    %1387 = vmatpush.bf16.msra.mxu0 0
    %1388 = vmatpush.bf16.msra.mxu0 0
    %1389 = vmatpush.bf16.msra.mxu0 0
    %1390 = vmatpush.bf16.msra.mxu0 0
    %1391 = vmatpush.bf16.msra.mxu0 0
    %1392 = vmatpush.bf16.msra.mxu0 0
    %1393 = vmatpush.bf16.msra.mxu0 %v1360
    %1394 = vmatpush.bf16.msra.mxu0 %v1357
    %1395 = vmatmul.bf16.gmra.mxu0 %v404
    %v1396 = vpop.f32.mrf.mxu0
    %v1397 = vadd.f32 0.0, %v1396
    %v1398 = vpop.f32.mrf.mxu0
    %v1399 = vadd.f32 0.0, %v1398
    %1400 = vmatmul.bf16.gmra.mxu0 %v407
    %v1401 = vpop.f32.mrf.mxu0
    %v1402 = vadd.f32 0.0, %v1401
    %v1403 = vpop.f32.mrf.mxu0
    %v1404 = vadd.f32 0.0, %v1403
    %1405 = vdwg.mxu0
    %1406 = vmatpush.bf16.msra.mxu0 0
    %1407 = vmatpush.bf16.msra.mxu0 0
    %1408 = vmatpush.bf16.msra.mxu0 0
    %1409 = vmatpush.bf16.msra.mxu0 0
    %1410 = vmatpush.bf16.msra.mxu0 0
    %1411 = vmatpush.bf16.msra.mxu0 0
    %1412 = vmatpush.bf16.msra.mxu0 %v1361
    %1413 = vmatpush.bf16.msra.mxu0 %v1358
    %1414 = vmatmul.bf16.gmra.mxu0 %v404
    %v1415 = vpop.f32.mrf.mxu0
    %v1416 = vadd.f32 0.0, %v1415
    %v1417 = vpop.f32.mrf.mxu0
    %v1418 = vadd.f32 0.0, %v1417
    %1419 = vmatmul.bf16.gmra.mxu0 %v407
    %v1420 = vpop.f32.mrf.mxu0
    %v1421 = vadd.f32 0.0, %v1420
    %v1422 = vpop.f32.mrf.mxu0
    %v1423 = vadd.f32 0.0, %v1422
    %1424 = vdwg.mxu0
    %s1425 = scalar_lea.vmem %s13, 48
    %v1426 = vld [vmem:[%s1425] sm:$0xff]
    %v1427 = vld [vmem:[%s1425 + $0x8] sm:$0xf]
    %v1428 = vld [vmem:[%s1425 + $0xc] sm:$0xff]
    %v1429 = vld [vmem:[%s1425 + $0x14] sm:$0xf]
    %v1430 = vld [vmem:[%s1425 + $0x18] sm:$0xff]
    %v1431 = vld [vmem:[%s1425 + $0x20] sm:$0xf]
    %v1432 = vld [vmem:[%s1425 + $0x24] sm:$0xff]
    %v1433 = vld [vmem:[%s1425 + $0x2c] sm:$0xf]
    %v1442 = vunpack.c.l.b16 %v1426
    %v1443 = vunpack.c.h.b16 %v1426
    %v1444 = vunpack.c.l.b16 %v1427
    %v1445 = vunpack.c.l.b16 %v1428
    %v1446 = vunpack.c.h.b16 %v1428
    %v1447 = vunpack.c.l.b16 %v1429
    %v1448 = vunpack.c.l.b16 %v1430
    %v1449 = vunpack.c.h.b16 %v1430
    %v1450 = vunpack.c.l.b16 %v1431
    %v1451 = vunpack.c.l.b16 %v1432
    %v1452 = vunpack.c.h.b16 %v1432
    %v1453 = vunpack.c.l.b16 %v1433
    %v1454 = vpack.c.b16 %v1445, %v1442
    %v1455 = vpack.c.b16 %v1446, %v1443
    %v1456 = vpack.c.b16 %v1447, %v1444
    %v1457 = vpack.c.b16 %v1451, %v1448
    %v1458 = vpack.c.b16 %v1452, %v1449
    %v1459 = vpack.c.b16 %v1453, %v1450
    %1466 = vmatpush.bf16.msra.mxu0 0
    %1467 = vmatpush.bf16.msra.mxu0 0
    %1468 = vmatpush.bf16.msra.mxu0 0
    %1469 = vmatpush.bf16.msra.mxu0 0
    %1470 = vmatpush.bf16.msra.mxu0 0
    %1471 = vmatpush.bf16.msra.mxu0 0
    %1472 = vmatpush.bf16.msra.mxu0 %v1457
    %1473 = vmatpush.bf16.msra.mxu0 %v1454
    %1474 = vmatmul.bf16.gmra.mxu0 %v404
    %v1475 = vpop.f32.mrf.mxu0
    %v1476 = vadd.f32 0.0, %v1475
    %v1477 = vpop.f32.mrf.mxu0
    %v1478 = vadd.f32 0.0, %v1477
    %1479 = vmatmul.bf16.gmra.mxu0 %v407
    %v1480 = vpop.f32.mrf.mxu0
    %v1481 = vadd.f32 0.0, %v1480
    %v1482 = vpop.f32.mrf.mxu0
    %v1483 = vadd.f32 0.0, %v1482
    %1484 = vdwg.mxu0
    %1485 = vmatpush.bf16.msra.mxu0 0
    %1486 = vmatpush.bf16.msra.mxu0 0
    %1487 = vmatpush.bf16.msra.mxu0 0
    %1488 = vmatpush.bf16.msra.mxu0 0
    %1489 = vmatpush.bf16.msra.mxu0 0
    %1490 = vmatpush.bf16.msra.mxu0 0
    %1491 = vmatpush.bf16.msra.mxu0 %v1458
    %1492 = vmatpush.bf16.msra.mxu0 %v1455
    %1493 = vmatmul.bf16.gmra.mxu0 %v404
    %v1494 = vpop.f32.mrf.mxu0
    %v1495 = vadd.f32 0.0, %v1494
    %v1496 = vpop.f32.mrf.mxu0
    %v1497 = vadd.f32 0.0, %v1496
    %1498 = vmatmul.bf16.gmra.mxu0 %v407
    %v1499 = vpop.f32.mrf.mxu0
    %v1500 = vadd.f32 0.0, %v1499
    %v1501 = vpop.f32.mrf.mxu0
    %v1502 = vadd.f32 0.0, %v1501
    %1503 = vdwg.mxu0
    %1504 = vmatpush.bf16.msra.mxu0 0
    %1505 = vmatpush.bf16.msra.mxu0 0
    %1506 = vmatpush.bf16.msra.mxu0 0
    %1507 = vmatpush.bf16.msra.mxu0 0
    %1508 = vmatpush.bf16.msra.mxu0 0
    %1509 = vmatpush.bf16.msra.mxu0 0
    %1510 = vmatpush.bf16.msra.mxu0 %v1459
    %1511 = vmatpush.bf16.msra.mxu0 %v1456
    %1512 = vmatmul.bf16.gmra.mxu0 %v404
    %v1513 = vpop.f32.mrf.mxu0
    %v1514 = vadd.f32 0.0, %v1513
    %v1515 = vpop.f32.mrf.mxu0
    %v1516 = vadd.f32 0.0, %v1515
    %1517 = vmatmul.bf16.gmra.mxu0 %v407
    %v1518 = vpop.f32.mrf.mxu0
    %v1519 = vadd.f32 0.0, %v1518
    %v1520 = vpop.f32.mrf.mxu0
    %v1521 = vadd.f32 0.0, %v1520
    %1522 = vdwg.mxu0
    %v1535 = vrot.slane %v1476, 1
    %v1536 = vrot.slane %v1478, 1
    %v1537 = vsel %vm797, %v1535, %v1536
    %v1538 = vrot.slane %v1495, 1
    %v1539 = vrot.slane %v1497, 1
    %v1540 = vsel %vm797, %v1538, %v1539
    %v1541 = vrot.slane %v1514, 1
    %v1542 = vrot.slane %v1516, 1
    %v1543 = vsel %vm797, %v1541, %v1542
    %v1544 = vrot.slane %v1481, 1
    %v1545 = vrot.slane %v1483, 1
    %v1546 = vsel %vm797, %v1544, %v1545
    %v1547 = vrot.slane %v1500, 1
    %v1548 = vrot.slane %v1502, 1
    %v1549 = vsel %vm797, %v1547, %v1548
    %v1550 = vrot.slane %v1519, 1
    %v1551 = vrot.slane %v1521, 1
    %v1552 = vsel %vm797, %v1550, %v1551
    %v1565 = vadd.f32 %v1378, %v1537
    %v1566 = vadd.f32 %v1397, %v1540
    %v1567 = vadd.f32 %v1416, %v1543
    %v1568 = vadd.f32 %v1380, %v1536
    %v1569 = vadd.f32 %v1399, %v1539
    %v1570 = vadd.f32 %v1418, %v1542
    %v1571 = vadd.f32 %v1383, %v1546
    %v1572 = vadd.f32 %v1402, %v1549
    %v1573 = vadd.f32 %v1421, %v1552
    %v1574 = vadd.f32 %v1385, %v1545
    %v1575 = vadd.f32 %v1404, %v1548
    %v1576 = vadd.f32 %v1423, %v1551
    %s1577 = scalar_lea.vmem %s13, 96
    %v1578 = vld [vmem:[%s1577] sm:$0xff]
    %v1579 = vld [vmem:[%s1577 + $0x8] sm:$0xf]
    %v1580 = vld [vmem:[%s1577 + $0xc] sm:$0xff]
    %v1581 = vld [vmem:[%s1577 + $0x14] sm:$0xf]
    %v1582 = vld [vmem:[%s1577 + $0x18] sm:$0xff]
    %v1583 = vld [vmem:[%s1577 + $0x20] sm:$0xf]
    %v1584 = vld [vmem:[%s1577 + $0x24] sm:$0xff]
    %v1585 = vld [vmem:[%s1577 + $0x2c] sm:$0xf]
    %v1594 = vunpack.c.l.b16 %v1578
    %v1595 = vunpack.c.h.b16 %v1578
    %v1596 = vunpack.c.l.b16 %v1579
    %v1597 = vunpack.c.l.b16 %v1580
    %v1598 = vunpack.c.h.b16 %v1580
    %v1599 = vunpack.c.l.b16 %v1581
    %v1600 = vunpack.c.l.b16 %v1582
    %v1601 = vunpack.c.h.b16 %v1582
    %v1602 = vunpack.c.l.b16 %v1583
    %v1603 = vunpack.c.l.b16 %v1584
    %v1604 = vunpack.c.h.b16 %v1584
    %v1605 = vunpack.c.l.b16 %v1585
    %v1606 = vpack.c.b16 %v1597, %v1594
    %v1607 = vpack.c.b16 %v1598, %v1595
    %v1608 = vpack.c.b16 %v1599, %v1596
    %v1609 = vpack.c.b16 %v1603, %v1600
    %v1610 = vpack.c.b16 %v1604, %v1601
    %v1611 = vpack.c.b16 %v1605, %v1602
    %1618 = vmatpush.bf16.msra.mxu0 0
    %1619 = vmatpush.bf16.msra.mxu0 0
    %1620 = vmatpush.bf16.msra.mxu0 0
    %1621 = vmatpush.bf16.msra.mxu0 0
    %1622 = vmatpush.bf16.msra.mxu0 0
    %1623 = vmatpush.bf16.msra.mxu0 0
    %1624 = vmatpush.bf16.msra.mxu0 %v1609
    %1625 = vmatpush.bf16.msra.mxu0 %v1606
    %1626 = vmatmul.bf16.gmra.mxu0 %v404
    %v1627 = vpop.f32.mrf.mxu0
    %v1628 = vadd.f32 0.0, %v1627
    %v1629 = vpop.f32.mrf.mxu0
    %v1630 = vadd.f32 0.0, %v1629
    %1631 = vmatmul.bf16.gmra.mxu0 %v407
    %v1632 = vpop.f32.mrf.mxu0
    %v1633 = vadd.f32 0.0, %v1632
    %v1634 = vpop.f32.mrf.mxu0
    %v1635 = vadd.f32 0.0, %v1634
    %1636 = vdwg.mxu0
    %1637 = vmatpush.bf16.msra.mxu0 0
    %1638 = vmatpush.bf16.msra.mxu0 0
    %1639 = vmatpush.bf16.msra.mxu0 0
    %1640 = vmatpush.bf16.msra.mxu0 0
    %1641 = vmatpush.bf16.msra.mxu0 0
    %1642 = vmatpush.bf16.msra.mxu0 0
    %1643 = vmatpush.bf16.msra.mxu0 %v1610
    %1644 = vmatpush.bf16.msra.mxu0 %v1607
    %1645 = vmatmul.bf16.gmra.mxu0 %v404
    %v1646 = vpop.f32.mrf.mxu0
    %v1647 = vadd.f32 0.0, %v1646
    %v1648 = vpop.f32.mrf.mxu0
    %v1649 = vadd.f32 0.0, %v1648
    %1650 = vmatmul.bf16.gmra.mxu0 %v407
    %v1651 = vpop.f32.mrf.mxu0
    %v1652 = vadd.f32 0.0, %v1651
    %v1653 = vpop.f32.mrf.mxu0
    %v1654 = vadd.f32 0.0, %v1653
    %1655 = vdwg.mxu0
    %1656 = vmatpush.bf16.msra.mxu0 0
    %1657 = vmatpush.bf16.msra.mxu0 0
    %1658 = vmatpush.bf16.msra.mxu0 0
    %1659 = vmatpush.bf16.msra.mxu0 0
    %1660 = vmatpush.bf16.msra.mxu0 0
    %1661 = vmatpush.bf16.msra.mxu0 0
    %1662 = vmatpush.bf16.msra.mxu0 %v1611
    %1663 = vmatpush.bf16.msra.mxu0 %v1608
    %1664 = vmatmul.bf16.gmra.mxu0 %v404
    %v1665 = vpop.f32.mrf.mxu0
    %v1666 = vadd.f32 0.0, %v1665
    %v1667 = vpop.f32.mrf.mxu0
    %v1668 = vadd.f32 0.0, %v1667
    %1669 = vmatmul.bf16.gmra.mxu0 %v407
    %v1670 = vpop.f32.mrf.mxu0
    %v1671 = vadd.f32 0.0, %v1670
    %v1672 = vpop.f32.mrf.mxu0
    %v1673 = vadd.f32 0.0, %v1672
    %1674 = vdwg.mxu0
    %vm1687 = vcmask 1045504
    %v1688 = vrot.slane %v1628, 2
    %v1689 = vrot.slane %v1630, 2
    %v1690 = vsel %vm1687, %v1688, %v1689
    %v1691 = vrot.slane %v1647, 2
    %v1692 = vrot.slane %v1649, 2
    %v1693 = vsel %vm1687, %v1691, %v1692
    %v1694 = vrot.slane %v1666, 2
    %v1695 = vrot.slane %v1668, 2
    %v1696 = vsel %vm1687, %v1694, %v1695
    %v1697 = vrot.slane %v1633, 2
    %v1698 = vrot.slane %v1635, 2
    %v1699 = vsel %vm1687, %v1697, %v1698
    %v1700 = vrot.slane %v1652, 2
    %v1701 = vrot.slane %v1654, 2
    %v1702 = vsel %vm1687, %v1700, %v1701
    %v1703 = vrot.slane %v1671, 2
    %v1704 = vrot.slane %v1673, 2
    %v1705 = vsel %vm1687, %v1703, %v1704
    %v1718 = vadd.f32 %v1565, %v1690
    %v1719 = vadd.f32 %v1566, %v1693
    %v1720 = vadd.f32 %v1567, %v1696
    %v1721 = vadd.f32 %v1568, %v1689
    %v1722 = vadd.f32 %v1569, %v1692
    %v1723 = vadd.f32 %v1570, %v1695
    %v1724 = vadd.f32 %v1571, %v1699
    %v1725 = vadd.f32 %v1572, %v1702
    %v1726 = vadd.f32 %v1573, %v1705
    %v1727 = vadd.f32 %v1574, %v1698
    %v1728 = vadd.f32 %v1575, %v1701
    %v1729 = vadd.f32 %v1576, %v1704
    %v1730 = vsel %vm1687, %v1721, -inf
    %v1731 = vmax.f32 %v1718, %v1730
    %v1732 = vrot.slane %v1731, 4
    %v1733 = vmax.f32 %v1731, %v1732
    %v1734 = vrot.slane %v1733, 2
    %v1735 = vmax.f32 %v1733, %v1734
    %v1736 = vrot.slane %v1735, 1
    %v1737 = vmax.f32 %v1735, %v1736
    %v1738 = vsel %vm1687, %v1722, -inf
    %v1739 = vmax.f32 %v1719, %v1738
    %v1740 = vrot.slane %v1739, 4
    %v1741 = vmax.f32 %v1739, %v1740
    %v1742 = vrot.slane %v1741, 2
    %v1743 = vmax.f32 %v1741, %v1742
    %v1744 = vrot.slane %v1743, 1
    %v1745 = vmax.f32 %v1743, %v1744
    %v1746 = vsel %vm227, %v1720, -inf
    %vm1747 = vcmask 521216
    %v1748 = vsel %vm1747, %v1723, -inf
    %v1749 = vmax.f32 %v1746, %v1748
    %v1750 = vrot.slane %v1749, 4
    %v1751 = vmax.f32 %v1749, %v1750
    %v1752 = vrot.slane %v1751, 2
    %v1753 = vmax.f32 %v1751, %v1752
    %v1754 = vrot.slane %v1753, 1
    %v1755 = vmax.f32 %v1753, %v1754
    %v1756 = vsel %vm1687, %v1727, -inf
    %v1757 = vmax.f32 %v1724, %v1756
    %v1758 = vrot.slane %v1757, 4
    %v1759 = vmax.f32 %v1757, %v1758
    %v1760 = vrot.slane %v1759, 2
    %v1761 = vmax.f32 %v1759, %v1760
    %v1762 = vrot.slane %v1761, 1
    %v1763 = vmax.f32 %v1761, %v1762
    %v1764 = vsel %vm1687, %v1728, -inf
    %v1765 = vmax.f32 %v1725, %v1764
    %v1766 = vrot.slane %v1765, 4
    %v1767 = vmax.f32 %v1765, %v1766
    %v1768 = vrot.slane %v1767, 2
    %v1769 = vmax.f32 %v1767, %v1768
    %v1770 = vrot.slane %v1769, 1
    %v1771 = vmax.f32 %v1769, %v1770
    %v1772 = vsel %vm227, %v1726, -inf
    %v1773 = vsel %vm1747, %v1729, -inf
    %v1774 = vmax.f32 %v1772, %v1773
    %v1775 = vrot.slane %v1774, 4
    %v1776 = vmax.f32 %v1774, %v1775
    %v1777 = vrot.slane %v1776, 2
    %v1778 = vmax.f32 %v1776, %v1777
    %v1779 = vrot.slane %v1778, 1
    %v1780 = vmax.f32 %v1778, %v1779
    %v1781 = vld [vmem:[%s14] sm:$0x7]
    %v1783 = vperm.slane %v1781, 0
    %v1784 = vperm.slane %v1781, 1
    %v1785 = vperm.slane %v1781, 2
    %v1789 = vadd.f32 %v1737, %v1783
    %v1790 = vadd.f32 %v1745, %v1784
    %v1791 = vadd.f32 %v1755, %v1785
    %v1792 = vadd.f32 %v1763, %v1783
    %v1793 = vadd.f32 %v1771, %v1784
    %v1794 = vadd.f32 %v1780, %v1785
    %v1795 = vmul.f32 %v1789, %v311
    %v1796 = vmul.f32 %v1790, %v331
    %v1797 = vmul.f32 %v1791, %v351
    %v1798 = vmul.f32 %v1792, %v529
    %v1799 = vmul.f32 %v1793, %v530
    %v1800 = vmul.f32 %v1794, %v531
    %v1801 = vpack.c.bf16 %v1795, %v1795
    %v1802 = vpack.c.bf16 %v1796, %v1796
    %v1803 = vpack.c.bf16 %v1797, %v1797
    %v1804 = vpack.c.bf16 %v1798, %v1798
    %v1805 = vpack.c.bf16 %v1799, %v1799
    %v1806 = vpack.c.bf16 %v1800, %v1800
    %v1807 = vld [vmem:[%s15] sm:$0xf]
    %v1808 = vld [vmem:[%s15 + $0x4] sm:$0xf]
    %v1809 = vld [vmem:[%s15 + $0x8] sm:$0xf]
    %v1810 = vld [vmem:[%s15 + $0xc] sm:$0xf]
    %v1811 = vld [vmem:[%s15 + $0x10] sm:$0xf]
    %v1812 = vld [vmem:[%s15 + $0x14] sm:$0xf]
    %v1813 = vld [vmem:[%s15 + $0x18] sm:$0xf]
    %v1814 = vld [vmem:[%s15 + $0x1c] sm:$0xf]
    %v1815 = vld [vmem:[%s15 + $0x20] sm:$0xf]
    %v1816 = vld [vmem:[%s15 + $0x24] sm:$0xf]
    %v1817 = vld [vmem:[%s15 + $0x28] sm:$0xf]
    %v1818 = vld [vmem:[%s15 + $0x2c] sm:$0xf]
    %v1819 = vld [vmem:[%s15 + $0x30] sm:$0xf]
    %v1820 = vld [vmem:[%s15 + $0x34] sm:$0xf]
    %v1821 = vld [vmem:[%s15 + $0x38] sm:$0xf]
    %v1822 = vld [vmem:[%s15 + $0x3c] sm:$0xf]
    %v1823 = vld [vmem:[%s15 + $0x40] sm:$0xf]
    %v1824 = vld [vmem:[%s15 + $0x44] sm:$0xf]
    %v1825 = vld [vmem:[%s15 + $0x48] sm:$0xf]
    %v1826 = vld [vmem:[%s15 + $0x4c] sm:$0xf]
    %v1827 = vld [vmem:[%s15 + $0x50] sm:$0xf]
    %v1828 = vld [vmem:[%s15 + $0x54] sm:$0xf]
    %v1829 = vld [vmem:[%s15 + $0x58] sm:$0xf]
    %v1830 = vld [vmem:[%s15 + $0x5c] sm:$0xf]
    %v1831 = vld [vmem:[%s15 + $0x60] sm:$0xf]
    %v1832 = vld [vmem:[%s15 + $0x64] sm:$0xf]
    %v1833 = vld [vmem:[%s15 + $0x68] sm:$0xf]
    %v1834 = vld [vmem:[%s15 + $0x6c] sm:$0xf]
    %v1835 = vld [vmem:[%s15 + $0x70] sm:$0xf]
    %v1836 = vld [vmem:[%s15 + $0x74] sm:$0xf]
    %v1837 = vld [vmem:[%s15 + $0x78] sm:$0xf]
    %v1838 = vld [vmem:[%s15 + $0x7c] sm:$0xf]
    %v1839 = vld [vmem:[%s15 + $0x80] sm:$0xf]
    %v1840 = vld [vmem:[%s15 + $0x84] sm:$0xf]
    %v1841 = vld [vmem:[%s15 + $0x88] sm:$0xf]
    %v1842 = vld [vmem:[%s15 + $0x8c] sm:$0xf]
    %v1843 = vld [vmem:[%s15 + $0x90] sm:$0xf]
    %v1844 = vld [vmem:[%s15 + $0x94] sm:$0xf]
    %v1845 = vld [vmem:[%s15 + $0x98] sm:$0xf]
    %v1846 = vld [vmem:[%s15 + $0x9c] sm:$0xf]
    %v1853 = vunpack.c.l.b16 %v1801
    %v1854 = vunpack.c.l.b16 %v1802
    %v1855 = vunpack.c.l.b16 %v1803
    %v1856 = vunpack.c.l.b16 %v1804
    %v1857 = vunpack.c.l.b16 %v1805
    %v1858 = vunpack.c.l.b16 %v1806
    %v1859 = vrot.slane %v1856, 7
    %v1860 = vsel %vm970, %v1859, %v1853
    %v1861 = vrot.slane %v1857, 7
    %v1862 = vsel %vm970, %v1861, %v1854
    %v1863 = vrot.slane %v1858, 7
    %v1864 = vsel %vm970, %v1863, %v1855
    %v1865 = vpack.c.b16 %v1860, %v1860
    %v1866 = vpack.c.b16 %v1862, %v1862
    %v1867 = vpack.c.b16 %v1864, %v1864
    %v1910 = vunpack.c.l.b16 %v1807
    %v1911 = vunpack.c.l.b16 %v1808
    %v1912 = vunpack.c.l.b16 %v1809
    %v1913 = vunpack.c.l.b16 %v1810
    %v1914 = vunpack.c.l.b16 %v1811
    %v1915 = vunpack.c.l.b16 %v1812
    %v1916 = vunpack.c.l.b16 %v1813
    %v1917 = vunpack.c.l.b16 %v1814
    %v1918 = vunpack.c.l.b16 %v1815
    %v1919 = vunpack.c.l.b16 %v1816
    %v1920 = vunpack.c.l.b16 %v1817
    %v1921 = vunpack.c.l.b16 %v1818
    %v1922 = vunpack.c.l.b16 %v1819
    %v1923 = vunpack.c.l.b16 %v1820
    %v1924 = vunpack.c.l.b16 %v1821
    %v1925 = vunpack.c.l.b16 %v1822
    %v1926 = vunpack.c.l.b16 %v1823
    %v1927 = vunpack.c.l.b16 %v1824
    %v1928 = vunpack.c.l.b16 %v1825
    %v1929 = vunpack.c.l.b16 %v1826
    %v1930 = vunpack.c.l.b16 %v1827
    %v1931 = vunpack.c.l.b16 %v1828
    %v1932 = vunpack.c.l.b16 %v1829
    %v1933 = vunpack.c.l.b16 %v1830
    %v1934 = vunpack.c.l.b16 %v1831
    %v1935 = vunpack.c.l.b16 %v1832
    %v1936 = vunpack.c.l.b16 %v1833
    %v1937 = vunpack.c.l.b16 %v1834
    %v1938 = vunpack.c.l.b16 %v1835
    %v1939 = vunpack.c.l.b16 %v1836
    %v1940 = vunpack.c.l.b16 %v1837
    %v1941 = vunpack.c.l.b16 %v1838
    %v1942 = vunpack.c.l.b16 %v1839
    %v1943 = vunpack.c.l.b16 %v1840
    %v1944 = vunpack.c.l.b16 %v1841
    %v1945 = vunpack.c.l.b16 %v1842
    %v1946 = vunpack.c.l.b16 %v1843
    %v1947 = vunpack.c.l.b16 %v1844
    %v1948 = vunpack.c.l.b16 %v1845
    %v1949 = vunpack.c.l.b16 %v1846
    %v1950 = vpack.c.b16 %v1911, %v1910
    %v1951 = vpack.c.b16 %v1913, %v1912
    %v1952 = vpack.c.b16 %v1915, %v1914
    %v1953 = vpack.c.b16 %v1917, %v1916
    %v1954 = vpack.c.b16 %v1919, %v1918
    %v1955 = vpack.c.b16 %v1921, %v1920
    %v1956 = vpack.c.b16 %v1923, %v1922
    %v1957 = vpack.c.b16 %v1925, %v1924
    %v1958 = vpack.c.b16 %v1927, %v1926
    %v1959 = vpack.c.b16 %v1929, %v1928
    %v1960 = vpack.c.b16 %v1931, %v1930
    %v1961 = vpack.c.b16 %v1933, %v1932
    %v1962 = vpack.c.b16 %v1935, %v1934
    %v1963 = vpack.c.b16 %v1937, %v1936
    %v1964 = vpack.c.b16 %v1939, %v1938
    %v1965 = vpack.c.b16 %v1941, %v1940
    %v1966 = vpack.c.b16 %v1943, %v1942
    %v1967 = vpack.c.b16 %v1945, %v1944
    %v1968 = vpack.c.b16 %v1947, %v1946
    %v1969 = vpack.c.b16 %v1949, %v1948
    %v1991 = vsel %vm227, %v1867, 0
    %1993 = vmatpush.bf16.msra.mxu0 %v1957
    %1994 = vmatpush.bf16.msra.mxu0 %v1956
    %1995 = vmatpush.bf16.msra.mxu0 %v1955
    %1996 = vmatpush.bf16.msra.mxu0 %v1954
    %1997 = vmatpush.bf16.msra.mxu0 %v1953
    %1998 = vmatpush.bf16.msra.mxu0 %v1952
    %1999 = vmatpush.bf16.msra.mxu0 %v1951
    %2000 = vmatpush.bf16.msra.mxu0 %v1950
    %2001 = vmatmul.bf16.gmra.mxu0 %v1865
    %v2002 = vpop.f32.mrf.mxu0
    %v2003 = vadd.f32 0.0, %v2002
    %v2004 = vpop.f32.mrf.mxu0
    %2005 = vdwg.mxu0
    %2006 = vmatpush.bf16.msra.mxu0 %v1965
    %2007 = vmatpush.bf16.msra.mxu0 %v1964
    %2008 = vmatpush.bf16.msra.mxu0 %v1963
    %2009 = vmatpush.bf16.msra.mxu0 %v1962
    %2010 = vmatpush.bf16.msra.mxu0 %v1961
    %2011 = vmatpush.bf16.msra.mxu0 %v1960
    %2012 = vmatpush.bf16.msra.mxu0 %v1959
    %2013 = vmatpush.bf16.msra.mxu0 %v1958
    %2014 = vmatmul.bf16.gmra.mxu0 %v1866
    %v2015 = vpop.f32.mrf.mxu0
    %v2016 = vadd.f32 %v2003, %v2015
    %v2017 = vpop.f32.mrf.mxu0
    %2018 = vdwg.mxu0
    %2019 = vmatpush.bf16.msra.mxu0 0
    %2020 = vmatpush.bf16.msra.mxu0 0
    %2021 = vmatpush.bf16.msra.mxu0 0
    %2022 = vmatpush.bf16.msra.mxu0 0
    %2023 = vmatpush.bf16.msra.mxu0 %v1969
    %2024 = vmatpush.bf16.msra.mxu0 %v1968
    %2025 = vmatpush.bf16.msra.mxu0 %v1967
    %2026 = vmatpush.bf16.msra.mxu0 %v1966
    %2027 = vmatmul.bf16.gmra.mxu0 %v1991
    %v2028 = vpop.f32.mrf.mxu0
    %v2029 = vadd.f32 %v2016, %v2028
    %v2030 = vpop.f32.mrf.mxu0
    %2031 = vdwg.mxu0
    %v2032 = vadd.f32 %v1325, %v2029
    %v2033 = vld [vmem:[%s16] sm:$0xff]
    %v2034 = vld [vmem:[%s16 + $0x8] sm:$0xf]
    %v2035 = vld [vmem:[%s16 + $0xc] sm:$0xff]
    %v2036 = vld [vmem:[%s16 + $0x14] sm:$0xf]
    %v2037 = vld [vmem:[%s16 + $0x18] sm:$0xff]
    %v2038 = vld [vmem:[%s16 + $0x20] sm:$0xf]
    %v2039 = vld [vmem:[%s16 + $0x24] sm:$0xff]
    %v2040 = vld [vmem:[%s16 + $0x2c] sm:$0xf]
    %v2049 = vunpack.c.l.b16 %v2033
    %v2050 = vunpack.c.h.b16 %v2033
    %v2051 = vunpack.c.l.b16 %v2034
    %v2052 = vunpack.c.l.b16 %v2035
    %v2053 = vunpack.c.h.b16 %v2035
    %v2054 = vunpack.c.l.b16 %v2036
    %v2055 = vunpack.c.l.b16 %v2037
    %v2056 = vunpack.c.h.b16 %v2037
    %v2057 = vunpack.c.l.b16 %v2038
    %v2058 = vunpack.c.l.b16 %v2039
    %v2059 = vunpack.c.h.b16 %v2039
    %v2060 = vunpack.c.l.b16 %v2040
    %v2061 = vpack.c.b16 %v2052, %v2049
    %v2062 = vpack.c.b16 %v2053, %v2050
    %v2063 = vpack.c.b16 %v2054, %v2051
    %v2064 = vpack.c.b16 %v2058, %v2055
    %v2065 = vpack.c.b16 %v2059, %v2056
    %v2066 = vpack.c.b16 %v2060, %v2057
    %2073 = vmatpush.bf16.msra.mxu0 0
    %2074 = vmatpush.bf16.msra.mxu0 0
    %2075 = vmatpush.bf16.msra.mxu0 0
    %2076 = vmatpush.bf16.msra.mxu0 0
    %2077 = vmatpush.bf16.msra.mxu0 0
    %2078 = vmatpush.bf16.msra.mxu0 0
    %2079 = vmatpush.bf16.msra.mxu0 %v2064
    %2080 = vmatpush.bf16.msra.mxu0 %v2061
    %2081 = vmatmul.bf16.gmra.mxu0 %v404
    %v2082 = vpop.f32.mrf.mxu0
    %v2083 = vadd.f32 0.0, %v2082
    %v2084 = vpop.f32.mrf.mxu0
    %v2085 = vadd.f32 0.0, %v2084
    %2086 = vmatmul.bf16.gmra.mxu0 %v407
    %v2087 = vpop.f32.mrf.mxu0
    %v2088 = vadd.f32 0.0, %v2087
    %v2089 = vpop.f32.mrf.mxu0
    %v2090 = vadd.f32 0.0, %v2089
    %2091 = vdwg.mxu0
    %2092 = vmatpush.bf16.msra.mxu0 0
    %2093 = vmatpush.bf16.msra.mxu0 0
    %2094 = vmatpush.bf16.msra.mxu0 0
    %2095 = vmatpush.bf16.msra.mxu0 0
    %2096 = vmatpush.bf16.msra.mxu0 0
    %2097 = vmatpush.bf16.msra.mxu0 0
    %2098 = vmatpush.bf16.msra.mxu0 %v2065
    %2099 = vmatpush.bf16.msra.mxu0 %v2062
    %2100 = vmatmul.bf16.gmra.mxu0 %v404
    %v2101 = vpop.f32.mrf.mxu0
    %v2102 = vadd.f32 0.0, %v2101
    %v2103 = vpop.f32.mrf.mxu0
    %v2104 = vadd.f32 0.0, %v2103
    %2105 = vmatmul.bf16.gmra.mxu0 %v407
    %v2106 = vpop.f32.mrf.mxu0
    %v2107 = vadd.f32 0.0, %v2106
    %v2108 = vpop.f32.mrf.mxu0
    %v2109 = vadd.f32 0.0, %v2108
    %2110 = vdwg.mxu0
    %2111 = vmatpush.bf16.msra.mxu0 0
    %2112 = vmatpush.bf16.msra.mxu0 0
    %2113 = vmatpush.bf16.msra.mxu0 0
    %2114 = vmatpush.bf16.msra.mxu0 0
    %2115 = vmatpush.bf16.msra.mxu0 0
    %2116 = vmatpush.bf16.msra.mxu0 0
    %2117 = vmatpush.bf16.msra.mxu0 %v2066
    %2118 = vmatpush.bf16.msra.mxu0 %v2063
    %2119 = vmatmul.bf16.gmra.mxu0 %v404
    %v2120 = vpop.f32.mrf.mxu0
    %v2121 = vadd.f32 0.0, %v2120
    %v2122 = vpop.f32.mrf.mxu0
    %v2123 = vadd.f32 0.0, %v2122
    %2124 = vmatmul.bf16.gmra.mxu0 %v407
    %v2125 = vpop.f32.mrf.mxu0
    %v2126 = vadd.f32 0.0, %v2125
    %v2127 = vpop.f32.mrf.mxu0
    %v2128 = vadd.f32 0.0, %v2127
    %2129 = vdwg.mxu0
    %s2130 = scalar_lea.vmem %s16, 48
    %v2131 = vld [vmem:[%s2130] sm:$0xff]
    %v2132 = vld [vmem:[%s2130 + $0x8] sm:$0xf]
    %v2133 = vld [vmem:[%s2130 + $0xc] sm:$0xff]
    %v2134 = vld [vmem:[%s2130 + $0x14] sm:$0xf]
    %v2135 = vld [vmem:[%s2130 + $0x18] sm:$0xff]
    %v2136 = vld [vmem:[%s2130 + $0x20] sm:$0xf]
    %v2137 = vld [vmem:[%s2130 + $0x24] sm:$0xff]
    %v2138 = vld [vmem:[%s2130 + $0x2c] sm:$0xf]
    %v2147 = vunpack.c.l.b16 %v2131
    %v2148 = vunpack.c.h.b16 %v2131
    %v2149 = vunpack.c.l.b16 %v2132
    %v2150 = vunpack.c.l.b16 %v2133
    %v2151 = vunpack.c.h.b16 %v2133
    %v2152 = vunpack.c.l.b16 %v2134
    %v2153 = vunpack.c.l.b16 %v2135
    %v2154 = vunpack.c.h.b16 %v2135
    %v2155 = vunpack.c.l.b16 %v2136
    %v2156 = vunpack.c.l.b16 %v2137
    %v2157 = vunpack.c.h.b16 %v2137
    %v2158 = vunpack.c.l.b16 %v2138
    %v2159 = vpack.c.b16 %v2150, %v2147
    %v2160 = vpack.c.b16 %v2151, %v2148
    %v2161 = vpack.c.b16 %v2152, %v2149
    %v2162 = vpack.c.b16 %v2156, %v2153
    %v2163 = vpack.c.b16 %v2157, %v2154
    %v2164 = vpack.c.b16 %v2158, %v2155
    %2171 = vmatpush.bf16.msra.mxu0 0
    %2172 = vmatpush.bf16.msra.mxu0 0
    %2173 = vmatpush.bf16.msra.mxu0 0
    %2174 = vmatpush.bf16.msra.mxu0 0
    %2175 = vmatpush.bf16.msra.mxu0 0
    %2176 = vmatpush.bf16.msra.mxu0 0
    %2177 = vmatpush.bf16.msra.mxu0 %v2162
    %2178 = vmatpush.bf16.msra.mxu0 %v2159
    %2179 = vmatmul.bf16.gmra.mxu0 %v404
    %v2180 = vpop.f32.mrf.mxu0
    %v2181 = vadd.f32 0.0, %v2180
    %v2182 = vpop.f32.mrf.mxu0
    %v2183 = vadd.f32 0.0, %v2182
    %2184 = vmatmul.bf16.gmra.mxu0 %v407
    %v2185 = vpop.f32.mrf.mxu0
    %v2186 = vadd.f32 0.0, %v2185
    %v2187 = vpop.f32.mrf.mxu0
    %v2188 = vadd.f32 0.0, %v2187
    %2189 = vdwg.mxu0
    %2190 = vmatpush.bf16.msra.mxu0 0
    %2191 = vmatpush.bf16.msra.mxu0 0
    %2192 = vmatpush.bf16.msra.mxu0 0
    %2193 = vmatpush.bf16.msra.mxu0 0
    %2194 = vmatpush.bf16.msra.mxu0 0
    %2195 = vmatpush.bf16.msra.mxu0 0
    %2196 = vmatpush.bf16.msra.mxu0 %v2163
    %2197 = vmatpush.bf16.msra.mxu0 %v2160
    %2198 = vmatmul.bf16.gmra.mxu0 %v404
    %v2199 = vpop.f32.mrf.mxu0
    %v2200 = vadd.f32 0.0, %v2199
    %v2201 = vpop.f32.mrf.mxu0
    %v2202 = vadd.f32 0.0, %v2201
    %2203 = vmatmul.bf16.gmra.mxu0 %v407
    %v2204 = vpop.f32.mrf.mxu0
    %v2205 = vadd.f32 0.0, %v2204
    %v2206 = vpop.f32.mrf.mxu0
    %v2207 = vadd.f32 0.0, %v2206
    %2208 = vdwg.mxu0
    %2209 = vmatpush.bf16.msra.mxu0 0
    %2210 = vmatpush.bf16.msra.mxu0 0
    %2211 = vmatpush.bf16.msra.mxu0 0
    %2212 = vmatpush.bf16.msra.mxu0 0
    %2213 = vmatpush.bf16.msra.mxu0 0
    %2214 = vmatpush.bf16.msra.mxu0 0
    %2215 = vmatpush.bf16.msra.mxu0 %v2164
    %2216 = vmatpush.bf16.msra.mxu0 %v2161
    %2217 = vmatmul.bf16.gmra.mxu0 %v404
    %v2218 = vpop.f32.mrf.mxu0
    %v2219 = vadd.f32 0.0, %v2218
    %v2220 = vpop.f32.mrf.mxu0
    %v2221 = vadd.f32 0.0, %v2220
    %2222 = vmatmul.bf16.gmra.mxu0 %v407
    %v2223 = vpop.f32.mrf.mxu0
    %v2224 = vadd.f32 0.0, %v2223
    %v2225 = vpop.f32.mrf.mxu0
    %v2226 = vadd.f32 0.0, %v2225
    %2227 = vdwg.mxu0
    %v2240 = vrot.slane %v2181, 1
    %v2241 = vrot.slane %v2183, 1
    %v2242 = vsel %vm797, %v2240, %v2241
    %v2243 = vrot.slane %v2200, 1
    %v2244 = vrot.slane %v2202, 1
    %v2245 = vsel %vm797, %v2243, %v2244
    %v2246 = vrot.slane %v2219, 1
    %v2247 = vrot.slane %v2221, 1
    %v2248 = vsel %vm797, %v2246, %v2247
    %v2249 = vrot.slane %v2186, 1
    %v2250 = vrot.slane %v2188, 1
    %v2251 = vsel %vm797, %v2249, %v2250
    %v2252 = vrot.slane %v2205, 1
    %v2253 = vrot.slane %v2207, 1
    %v2254 = vsel %vm797, %v2252, %v2253
    %v2255 = vrot.slane %v2224, 1
    %v2256 = vrot.slane %v2226, 1
    %v2257 = vsel %vm797, %v2255, %v2256
    %v2270 = vadd.f32 %v2083, %v2242
    %v2271 = vadd.f32 %v2102, %v2245
    %v2272 = vadd.f32 %v2121, %v2248
    %v2273 = vadd.f32 %v2085, %v2241
    %v2274 = vadd.f32 %v2104, %v2244
    %v2275 = vadd.f32 %v2123, %v2247
    %v2276 = vadd.f32 %v2088, %v2251
    %v2277 = vadd.f32 %v2107, %v2254
    %v2278 = vadd.f32 %v2126, %v2257
    %v2279 = vadd.f32 %v2090, %v2250
    %v2280 = vadd.f32 %v2109, %v2253
    %v2281 = vadd.f32 %v2128, %v2256
    %s2282 = scalar_lea.vmem %s16, 96
    %v2283 = vld [vmem:[%s2282] sm:$0xff]
    %v2284 = vld [vmem:[%s2282 + $0x8] sm:$0xf]
    %v2285 = vld [vmem:[%s2282 + $0xc] sm:$0xff]
    %v2286 = vld [vmem:[%s2282 + $0x14] sm:$0xf]
    %v2287 = vld [vmem:[%s2282 + $0x18] sm:$0xff]
    %v2288 = vld [vmem:[%s2282 + $0x20] sm:$0xf]
    %v2289 = vld [vmem:[%s2282 + $0x24] sm:$0xff]
    %v2290 = vld [vmem:[%s2282 + $0x2c] sm:$0xf]
    %v2299 = vunpack.c.l.b16 %v2283
    %v2300 = vunpack.c.h.b16 %v2283
    %v2301 = vunpack.c.l.b16 %v2284
    %v2302 = vunpack.c.l.b16 %v2285
    %v2303 = vunpack.c.h.b16 %v2285
    %v2304 = vunpack.c.l.b16 %v2286
    %v2305 = vunpack.c.l.b16 %v2287
    %v2306 = vunpack.c.h.b16 %v2287
    %v2307 = vunpack.c.l.b16 %v2288
    %v2308 = vunpack.c.l.b16 %v2289
    %v2309 = vunpack.c.h.b16 %v2289
    %v2310 = vunpack.c.l.b16 %v2290
    %v2311 = vpack.c.b16 %v2302, %v2299
    %v2312 = vpack.c.b16 %v2303, %v2300
    %v2313 = vpack.c.b16 %v2304, %v2301
    %v2314 = vpack.c.b16 %v2308, %v2305
    %v2315 = vpack.c.b16 %v2309, %v2306
    %v2316 = vpack.c.b16 %v2310, %v2307
    %2323 = vmatpush.bf16.msra.mxu0 0
    %2324 = vmatpush.bf16.msra.mxu0 0
    %2325 = vmatpush.bf16.msra.mxu0 0
    %2326 = vmatpush.bf16.msra.mxu0 0
    %2327 = vmatpush.bf16.msra.mxu0 0
    %2328 = vmatpush.bf16.msra.mxu0 0
    %2329 = vmatpush.bf16.msra.mxu0 %v2314
    %2330 = vmatpush.bf16.msra.mxu0 %v2311
    %2331 = vmatmul.bf16.gmra.mxu0 %v404
    %v2332 = vpop.f32.mrf.mxu0
    %v2333 = vadd.f32 0.0, %v2332
    %v2334 = vpop.f32.mrf.mxu0
    %v2335 = vadd.f32 0.0, %v2334
    %2336 = vmatmul.bf16.gmra.mxu0 %v407
    %v2337 = vpop.f32.mrf.mxu0
    %v2338 = vadd.f32 0.0, %v2337
    %v2339 = vpop.f32.mrf.mxu0
    %v2340 = vadd.f32 0.0, %v2339
    %2341 = vdwg.mxu0
    %2342 = vmatpush.bf16.msra.mxu0 0
    %2343 = vmatpush.bf16.msra.mxu0 0
    %2344 = vmatpush.bf16.msra.mxu0 0
    %2345 = vmatpush.bf16.msra.mxu0 0
    %2346 = vmatpush.bf16.msra.mxu0 0
    %2347 = vmatpush.bf16.msra.mxu0 0
    %2348 = vmatpush.bf16.msra.mxu0 %v2315
    %2349 = vmatpush.bf16.msra.mxu0 %v2312
    %2350 = vmatmul.bf16.gmra.mxu0 %v404
    %v2351 = vpop.f32.mrf.mxu0
    %v2352 = vadd.f32 0.0, %v2351
    %v2353 = vpop.f32.mrf.mxu0
    %v2354 = vadd.f32 0.0, %v2353
    %2355 = vmatmul.bf16.gmra.mxu0 %v407
    %v2356 = vpop.f32.mrf.mxu0
    %v2357 = vadd.f32 0.0, %v2356
    %v2358 = vpop.f32.mrf.mxu0
    %v2359 = vadd.f32 0.0, %v2358
    %2360 = vdwg.mxu0
    %2361 = vmatpush.bf16.msra.mxu0 0
    %2362 = vmatpush.bf16.msra.mxu0 0
    %2363 = vmatpush.bf16.msra.mxu0 0
    %2364 = vmatpush.bf16.msra.mxu0 0
    %2365 = vmatpush.bf16.msra.mxu0 0
    %2366 = vmatpush.bf16.msra.mxu0 0
    %2367 = vmatpush.bf16.msra.mxu0 %v2316
    %2368 = vmatpush.bf16.msra.mxu0 %v2313
    %2369 = vmatmul.bf16.gmra.mxu0 %v404
    %v2370 = vpop.f32.mrf.mxu0
    %v2371 = vadd.f32 0.0, %v2370
    %v2372 = vpop.f32.mrf.mxu0
    %v2373 = vadd.f32 0.0, %v2372
    %2374 = vmatmul.bf16.gmra.mxu0 %v407
    %v2375 = vpop.f32.mrf.mxu0
    %v2376 = vadd.f32 0.0, %v2375
    %v2377 = vpop.f32.mrf.mxu0
    %v2378 = vadd.f32 0.0, %v2377
    %2379 = vdwg.mxu0
    %v2392 = vrot.slane %v2333, 2
    %v2393 = vrot.slane %v2335, 2
    %v2394 = vsel %vm1687, %v2392, %v2393
    %v2395 = vrot.slane %v2352, 2
    %v2396 = vrot.slane %v2354, 2
    %v2397 = vsel %vm1687, %v2395, %v2396
    %v2398 = vrot.slane %v2371, 2
    %v2399 = vrot.slane %v2373, 2
    %v2400 = vsel %vm1687, %v2398, %v2399
    %v2401 = vrot.slane %v2338, 2
    %v2402 = vrot.slane %v2340, 2
    %v2403 = vsel %vm1687, %v2401, %v2402
    %v2404 = vrot.slane %v2357, 2
    %v2405 = vrot.slane %v2359, 2
    %v2406 = vsel %vm1687, %v2404, %v2405
    %v2407 = vrot.slane %v2376, 2
    %v2408 = vrot.slane %v2378, 2
    %v2409 = vsel %vm1687, %v2407, %v2408
    %v2422 = vadd.f32 %v2270, %v2394
    %v2423 = vadd.f32 %v2271, %v2397
    %v2424 = vadd.f32 %v2272, %v2400
    %v2425 = vadd.f32 %v2273, %v2393
    %v2426 = vadd.f32 %v2274, %v2396
    %v2427 = vadd.f32 %v2275, %v2399
    %v2428 = vadd.f32 %v2276, %v2403
    %v2429 = vadd.f32 %v2277, %v2406
    %v2430 = vadd.f32 %v2278, %v2409
    %v2431 = vadd.f32 %v2279, %v2402
    %v2432 = vadd.f32 %v2280, %v2405
    %v2433 = vadd.f32 %v2281, %v2408
    %s2434 = scalar_lea.vmem %s16, 144
    %v2435 = vld [vmem:[%s2434] sm:$0xff]
    %v2436 = vld [vmem:[%s2434 + $0x8] sm:$0xf]
    %v2437 = vld [vmem:[%s2434 + $0xc] sm:$0xff]
    %v2438 = vld [vmem:[%s2434 + $0x14] sm:$0xf]
    %v2439 = vld [vmem:[%s2434 + $0x18] sm:$0xff]
    %v2440 = vld [vmem:[%s2434 + $0x20] sm:$0xf]
    %v2441 = vld [vmem:[%s2434 + $0x24] sm:$0xff]
    %v2442 = vld [vmem:[%s2434 + $0x2c] sm:$0xf]
    %v2451 = vunpack.c.l.b16 %v2435
    %v2452 = vunpack.c.h.b16 %v2435
    %v2453 = vunpack.c.l.b16 %v2436
    %v2454 = vunpack.c.l.b16 %v2437
    %v2455 = vunpack.c.h.b16 %v2437
    %v2456 = vunpack.c.l.b16 %v2438
    %v2457 = vunpack.c.l.b16 %v2439
    %v2458 = vunpack.c.h.b16 %v2439
    %v2459 = vunpack.c.l.b16 %v2440
    %v2460 = vunpack.c.l.b16 %v2441
    %v2461 = vunpack.c.h.b16 %v2441
    %v2462 = vunpack.c.l.b16 %v2442
    %v2463 = vpack.c.b16 %v2454, %v2451
    %v2464 = vpack.c.b16 %v2455, %v2452
    %v2465 = vpack.c.b16 %v2456, %v2453
    %v2466 = vpack.c.b16 %v2460, %v2457
    %v2467 = vpack.c.b16 %v2461, %v2458
    %v2468 = vpack.c.b16 %v2462, %v2459
    %2475 = vmatpush.bf16.msra.mxu0 0
    %2476 = vmatpush.bf16.msra.mxu0 0
    %2477 = vmatpush.bf16.msra.mxu0 0
    %2478 = vmatpush.bf16.msra.mxu0 0
    %2479 = vmatpush.bf16.msra.mxu0 0
    %2480 = vmatpush.bf16.msra.mxu0 0
    %2481 = vmatpush.bf16.msra.mxu0 %v2466
    %2482 = vmatpush.bf16.msra.mxu0 %v2463
    %2483 = vmatmul.bf16.gmra.mxu0 %v404
    %v2484 = vpop.f32.mrf.mxu0
    %v2485 = vadd.f32 0.0, %v2484
    %v2486 = vpop.f32.mrf.mxu0
    %v2487 = vadd.f32 0.0, %v2486
    %2488 = vmatmul.bf16.gmra.mxu0 %v407
    %v2489 = vpop.f32.mrf.mxu0
    %v2490 = vadd.f32 0.0, %v2489
    %v2491 = vpop.f32.mrf.mxu0
    %v2492 = vadd.f32 0.0, %v2491
    %2493 = vdwg.mxu0
    %2494 = vmatpush.bf16.msra.mxu0 0
    %2495 = vmatpush.bf16.msra.mxu0 0
    %2496 = vmatpush.bf16.msra.mxu0 0
    %2497 = vmatpush.bf16.msra.mxu0 0
    %2498 = vmatpush.bf16.msra.mxu0 0
    %2499 = vmatpush.bf16.msra.mxu0 0
    %2500 = vmatpush.bf16.msra.mxu0 %v2467
    %2501 = vmatpush.bf16.msra.mxu0 %v2464
    %2502 = vmatmul.bf16.gmra.mxu0 %v404
    %v2503 = vpop.f32.mrf.mxu0
    %v2504 = vadd.f32 0.0, %v2503
    %v2505 = vpop.f32.mrf.mxu0
    %v2506 = vadd.f32 0.0, %v2505
    %2507 = vmatmul.bf16.gmra.mxu0 %v407
    %v2508 = vpop.f32.mrf.mxu0
    %v2509 = vadd.f32 0.0, %v2508
    %v2510 = vpop.f32.mrf.mxu0
    %v2511 = vadd.f32 0.0, %v2510
    %2512 = vdwg.mxu0
    %2513 = vmatpush.bf16.msra.mxu0 0
    %2514 = vmatpush.bf16.msra.mxu0 0
    %2515 = vmatpush.bf16.msra.mxu0 0
    %2516 = vmatpush.bf16.msra.mxu0 0
    %2517 = vmatpush.bf16.msra.mxu0 0
    %2518 = vmatpush.bf16.msra.mxu0 0
    %2519 = vmatpush.bf16.msra.mxu0 %v2468
    %2520 = vmatpush.bf16.msra.mxu0 %v2465
    %2521 = vmatmul.bf16.gmra.mxu0 %v404
    %v2522 = vpop.f32.mrf.mxu0
    %v2523 = vadd.f32 0.0, %v2522
    %v2524 = vpop.f32.mrf.mxu0
    %v2525 = vadd.f32 0.0, %v2524
    %2526 = vmatmul.bf16.gmra.mxu0 %v407
    %v2527 = vpop.f32.mrf.mxu0
    %v2528 = vadd.f32 0.0, %v2527
    %v2529 = vpop.f32.mrf.mxu0
    %v2530 = vadd.f32 0.0, %v2529
    %2531 = vdwg.mxu0
    %v2544 = vrot.slane %v2485, 3
    %v2545 = vrot.slane %v2487, 3
    %v2546 = vsel %vm283, %v2544, %v2545
    %v2547 = vrot.slane %v2504, 3
    %v2548 = vrot.slane %v2506, 3
    %v2549 = vsel %vm283, %v2547, %v2548
    %v2550 = vrot.slane %v2523, 3
    %v2551 = vrot.slane %v2525, 3
    %v2552 = vsel %vm283, %v2550, %v2551
    %v2553 = vrot.slane %v2490, 3
    %v2554 = vrot.slane %v2492, 3
    %v2555 = vsel %vm283, %v2553, %v2554
    %v2556 = vrot.slane %v2509, 3
    %v2557 = vrot.slane %v2511, 3
    %v2558 = vsel %vm283, %v2556, %v2557
    %v2559 = vrot.slane %v2528, 3
    %v2560 = vrot.slane %v2530, 3
    %v2561 = vsel %vm283, %v2559, %v2560
    %v2574 = vadd.f32 %v2422, %v2546
    %v2575 = vadd.f32 %v2423, %v2549
    %v2576 = vadd.f32 %v2424, %v2552
    %v2577 = vadd.f32 %v2425, %v2545
    %v2578 = vadd.f32 %v2426, %v2548
    %v2579 = vadd.f32 %v2427, %v2551
    %v2580 = vadd.f32 %v2428, %v2555
    %v2581 = vadd.f32 %v2429, %v2558
    %v2582 = vadd.f32 %v2430, %v2561
    %v2583 = vadd.f32 %v2431, %v2554
    %v2584 = vadd.f32 %v2432, %v2557
    %v2585 = vadd.f32 %v2433, %v2560
    %s2586 = scalar_lea.vmem %s16, 192
    %v2587 = vld [vmem:[%s2586] sm:$0xff]
    %v2588 = vld [vmem:[%s2586 + $0x8] sm:$0xf]
    %v2589 = vld [vmem:[%s2586 + $0xc] sm:$0xff]
    %v2590 = vld [vmem:[%s2586 + $0x14] sm:$0xf]
    %v2591 = vld [vmem:[%s2586 + $0x18] sm:$0xff]
    %v2592 = vld [vmem:[%s2586 + $0x20] sm:$0xf]
    %v2593 = vld [vmem:[%s2586 + $0x24] sm:$0xff]
    %v2594 = vld [vmem:[%s2586 + $0x2c] sm:$0xf]
    %v2603 = vunpack.c.l.b16 %v2587
    %v2604 = vunpack.c.h.b16 %v2587
    %v2605 = vunpack.c.l.b16 %v2588
    %v2606 = vunpack.c.l.b16 %v2589
    %v2607 = vunpack.c.h.b16 %v2589
    %v2608 = vunpack.c.l.b16 %v2590
    %v2609 = vunpack.c.l.b16 %v2591
    %v2610 = vunpack.c.h.b16 %v2591
    %v2611 = vunpack.c.l.b16 %v2592
    %v2612 = vunpack.c.l.b16 %v2593
    %v2613 = vunpack.c.h.b16 %v2593
    %v2614 = vunpack.c.l.b16 %v2594
    %v2615 = vpack.c.b16 %v2606, %v2603
    %v2616 = vpack.c.b16 %v2607, %v2604
    %v2617 = vpack.c.b16 %v2608, %v2605
    %v2618 = vpack.c.b16 %v2612, %v2609
    %v2619 = vpack.c.b16 %v2613, %v2610
    %v2620 = vpack.c.b16 %v2614, %v2611
    %2627 = vmatpush.bf16.msra.mxu0 0
    %2628 = vmatpush.bf16.msra.mxu0 0
    %2629 = vmatpush.bf16.msra.mxu0 0
    %2630 = vmatpush.bf16.msra.mxu0 0
    %2631 = vmatpush.bf16.msra.mxu0 0
    %2632 = vmatpush.bf16.msra.mxu0 0
    %2633 = vmatpush.bf16.msra.mxu0 %v2618
    %2634 = vmatpush.bf16.msra.mxu0 %v2615
    %2635 = vmatmul.bf16.gmra.mxu0 %v404
    %v2636 = vpop.f32.mrf.mxu0
    %v2637 = vadd.f32 0.0, %v2636
    %v2638 = vpop.f32.mrf.mxu0
    %v2639 = vadd.f32 0.0, %v2638
    %2640 = vmatmul.bf16.gmra.mxu0 %v407
    %v2641 = vpop.f32.mrf.mxu0
    %v2642 = vadd.f32 0.0, %v2641
    %v2643 = vpop.f32.mrf.mxu0
    %v2644 = vadd.f32 0.0, %v2643
    %2645 = vdwg.mxu0
    %2646 = vmatpush.bf16.msra.mxu0 0
    %2647 = vmatpush.bf16.msra.mxu0 0
    %2648 = vmatpush.bf16.msra.mxu0 0
    %2649 = vmatpush.bf16.msra.mxu0 0
    %2650 = vmatpush.bf16.msra.mxu0 0
    %2651 = vmatpush.bf16.msra.mxu0 0
    %2652 = vmatpush.bf16.msra.mxu0 %v2619
    %2653 = vmatpush.bf16.msra.mxu0 %v2616
    %2654 = vmatmul.bf16.gmra.mxu0 %v404
    %v2655 = vpop.f32.mrf.mxu0
    %v2656 = vadd.f32 0.0, %v2655
    %v2657 = vpop.f32.mrf.mxu0
    %v2658 = vadd.f32 0.0, %v2657
    %2659 = vmatmul.bf16.gmra.mxu0 %v407
    %v2660 = vpop.f32.mrf.mxu0
    %v2661 = vadd.f32 0.0, %v2660
    %v2662 = vpop.f32.mrf.mxu0
    %v2663 = vadd.f32 0.0, %v2662
    %2664 = vdwg.mxu0
    %2665 = vmatpush.bf16.msra.mxu0 0
    %2666 = vmatpush.bf16.msra.mxu0 0
    %2667 = vmatpush.bf16.msra.mxu0 0
    %2668 = vmatpush.bf16.msra.mxu0 0
    %2669 = vmatpush.bf16.msra.mxu0 0
    %2670 = vmatpush.bf16.msra.mxu0 0
    %2671 = vmatpush.bf16.msra.mxu0 %v2620
    %2672 = vmatpush.bf16.msra.mxu0 %v2617
    %2673 = vmatmul.bf16.gmra.mxu0 %v404
    %v2674 = vpop.f32.mrf.mxu0
    %v2675 = vadd.f32 0.0, %v2674
    %v2676 = vpop.f32.mrf.mxu0
    %v2677 = vadd.f32 0.0, %v2676
    %2678 = vmatmul.bf16.gmra.mxu0 %v407
    %v2679 = vpop.f32.mrf.mxu0
    %v2680 = vadd.f32 0.0, %v2679
    %v2681 = vpop.f32.mrf.mxu0
    %v2682 = vadd.f32 0.0, %v2681
    %2683 = vdwg.mxu0
    %vm2696 = vcmask 1043456
    %v2697 = vrot.slane %v2637, 4
    %v2698 = vrot.slane %v2639, 4
    %v2699 = vsel %vm2696, %v2697, %v2698
    %v2700 = vrot.slane %v2656, 4
    %v2701 = vrot.slane %v2658, 4
    %v2702 = vsel %vm2696, %v2700, %v2701
    %v2703 = vrot.slane %v2675, 4
    %v2704 = vrot.slane %v2677, 4
    %v2705 = vsel %vm2696, %v2703, %v2704
    %v2706 = vrot.slane %v2642, 4
    %v2707 = vrot.slane %v2644, 4
    %v2708 = vsel %vm2696, %v2706, %v2707
    %v2709 = vrot.slane %v2661, 4
    %v2710 = vrot.slane %v2663, 4
    %v2711 = vsel %vm2696, %v2709, %v2710
    %v2712 = vrot.slane %v2680, 4
    %v2713 = vrot.slane %v2682, 4
    %v2714 = vsel %vm2696, %v2712, %v2713
    %v2727 = vadd.f32 %v2574, %v2699
    %v2728 = vadd.f32 %v2575, %v2702
    %v2729 = vadd.f32 %v2576, %v2705
    %v2730 = vadd.f32 %v2577, %v2698
    %v2731 = vadd.f32 %v2578, %v2701
    %v2732 = vadd.f32 %v2579, %v2704
    %v2733 = vadd.f32 %v2580, %v2708
    %v2734 = vadd.f32 %v2581, %v2711
    %v2735 = vadd.f32 %v2582, %v2714
    %v2736 = vadd.f32 %v2583, %v2707
    %v2737 = vadd.f32 %v2584, %v2710
    %v2738 = vadd.f32 %v2585, %v2713
    %v2739 = vsel %vm2696, %v2730, -inf
    %v2740 = vmax.f32 %v2727, %v2739
    %v2741 = vrot.slane %v2740, 4
    %v2742 = vmax.f32 %v2740, %v2741
    %v2743 = vrot.slane %v2742, 2
    %v2744 = vmax.f32 %v2742, %v2743
    %v2745 = vrot.slane %v2744, 1
    %v2746 = vmax.f32 %v2744, %v2745
    %v2747 = vsel %vm2696, %v2731, -inf
    %v2748 = vmax.f32 %v2728, %v2747
    %v2749 = vrot.slane %v2748, 4
    %v2750 = vmax.f32 %v2748, %v2749
    %v2751 = vrot.slane %v2750, 2
    %v2752 = vmax.f32 %v2750, %v2751
    %v2753 = vrot.slane %v2752, 1
    %v2754 = vmax.f32 %v2752, %v2753
    %v2755 = vsel %vm227, %v2729, -inf
    %vm2756 = vcmask 519168
    %v2757 = vsel %vm2756, %v2732, -inf
    %v2758 = vmax.f32 %v2755, %v2757
    %v2759 = vrot.slane %v2758, 4
    %v2760 = vmax.f32 %v2758, %v2759
    %v2761 = vrot.slane %v2760, 2
    %v2762 = vmax.f32 %v2760, %v2761
    %v2763 = vrot.slane %v2762, 1
    %v2764 = vmax.f32 %v2762, %v2763
    %v2765 = vsel %vm2696, %v2736, -inf
    %v2766 = vmax.f32 %v2733, %v2765
    %v2767 = vrot.slane %v2766, 4
    %v2768 = vmax.f32 %v2766, %v2767
    %v2769 = vrot.slane %v2768, 2
    %v2770 = vmax.f32 %v2768, %v2769
    %v2771 = vrot.slane %v2770, 1
    %v2772 = vmax.f32 %v2770, %v2771
    %v2773 = vsel %vm2696, %v2737, -inf
    %v2774 = vmax.f32 %v2734, %v2773
    %v2775 = vrot.slane %v2774, 4
    %v2776 = vmax.f32 %v2774, %v2775
    %v2777 = vrot.slane %v2776, 2
    %v2778 = vmax.f32 %v2776, %v2777
    %v2779 = vrot.slane %v2778, 1
    %v2780 = vmax.f32 %v2778, %v2779
    %v2781 = vsel %vm227, %v2735, -inf
    %v2782 = vsel %vm2756, %v2738, -inf
    %v2783 = vmax.f32 %v2781, %v2782
    %v2784 = vrot.slane %v2783, 4
    %v2785 = vmax.f32 %v2783, %v2784
    %v2786 = vrot.slane %v2785, 2
    %v2787 = vmax.f32 %v2785, %v2786
    %v2788 = vrot.slane %v2787, 1
    %v2789 = vmax.f32 %v2787, %v2788
    %v2790 = vld [vmem:[%s17] sm:$0x7]
    %v2792 = vperm.slane %v2790, 0
    %v2793 = vperm.slane %v2790, 1
    %v2794 = vperm.slane %v2790, 2
    %v2798 = vadd.f32 %v2746, %v2792
    %v2799 = vadd.f32 %v2754, %v2793
    %v2800 = vadd.f32 %v2764, %v2794
    %v2801 = vadd.f32 %v2772, %v2792
    %v2802 = vadd.f32 %v2780, %v2793
    %v2803 = vadd.f32 %v2789, %v2794
    %v2804 = vmul.f32 %v2798, %v311
    %v2805 = vmul.f32 %v2799, %v331
    %v2806 = vmul.f32 %v2800, %v351
    %v2807 = vmul.f32 %v2801, %v529
    %v2808 = vmul.f32 %v2802, %v530
    %v2809 = vmul.f32 %v2803, %v531
    %v2810 = vpack.c.bf16 %v2804, %v2804
    %v2811 = vpack.c.bf16 %v2805, %v2805
    %v2812 = vpack.c.bf16 %v2806, %v2806
    %v2813 = vpack.c.bf16 %v2807, %v2807
    %v2814 = vpack.c.bf16 %v2808, %v2808
    %v2815 = vpack.c.bf16 %v2809, %v2809
    %v2816 = vld [vmem:[%s18] sm:$0xf]
    %v2817 = vld [vmem:[%s18 + $0x4] sm:$0xf]
    %v2818 = vld [vmem:[%s18 + $0x8] sm:$0xf]
    %v2819 = vld [vmem:[%s18 + $0xc] sm:$0xf]
    %v2820 = vld [vmem:[%s18 + $0x10] sm:$0xf]
    %v2821 = vld [vmem:[%s18 + $0x14] sm:$0xf]
    %v2822 = vld [vmem:[%s18 + $0x18] sm:$0xf]
    %v2823 = vld [vmem:[%s18 + $0x1c] sm:$0xf]
    %v2824 = vld [vmem:[%s18 + $0x20] sm:$0xf]
    %v2825 = vld [vmem:[%s18 + $0x24] sm:$0xf]
    %v2826 = vld [vmem:[%s18 + $0x28] sm:$0xf]
    %v2827 = vld [vmem:[%s18 + $0x2c] sm:$0xf]
    %v2828 = vld [vmem:[%s18 + $0x30] sm:$0xf]
    %v2829 = vld [vmem:[%s18 + $0x34] sm:$0xf]
    %v2830 = vld [vmem:[%s18 + $0x38] sm:$0xf]
    %v2831 = vld [vmem:[%s18 + $0x3c] sm:$0xf]
    %v2832 = vld [vmem:[%s18 + $0x40] sm:$0xf]
    %v2833 = vld [vmem:[%s18 + $0x44] sm:$0xf]
    %v2834 = vld [vmem:[%s18 + $0x48] sm:$0xf]
    %v2835 = vld [vmem:[%s18 + $0x4c] sm:$0xf]
    %v2836 = vld [vmem:[%s18 + $0x50] sm:$0xf]
    %v2837 = vld [vmem:[%s18 + $0x54] sm:$0xf]
    %v2838 = vld [vmem:[%s18 + $0x58] sm:$0xf]
    %v2839 = vld [vmem:[%s18 + $0x5c] sm:$0xf]
    %v2840 = vld [vmem:[%s18 + $0x60] sm:$0xf]
    %v2841 = vld [vmem:[%s18 + $0x64] sm:$0xf]
    %v2842 = vld [vmem:[%s18 + $0x68] sm:$0xf]
    %v2843 = vld [vmem:[%s18 + $0x6c] sm:$0xf]
    %v2844 = vld [vmem:[%s18 + $0x70] sm:$0xf]
    %v2845 = vld [vmem:[%s18 + $0x74] sm:$0xf]
    %v2846 = vld [vmem:[%s18 + $0x78] sm:$0xf]
    %v2847 = vld [vmem:[%s18 + $0x7c] sm:$0xf]
    %v2848 = vld [vmem:[%s18 + $0x80] sm:$0xf]
    %v2849 = vld [vmem:[%s18 + $0x84] sm:$0xf]
    %v2850 = vld [vmem:[%s18 + $0x88] sm:$0xf]
    %v2851 = vld [vmem:[%s18 + $0x8c] sm:$0xf]
    %v2852 = vld [vmem:[%s18 + $0x90] sm:$0xf]
    %v2853 = vld [vmem:[%s18 + $0x94] sm:$0xf]
    %v2854 = vld [vmem:[%s18 + $0x98] sm:$0xf]
    %v2855 = vld [vmem:[%s18 + $0x9c] sm:$0xf]
    %v2862 = vunpack.c.l.b16 %v2810
    %v2863 = vunpack.c.l.b16 %v2811
    %v2864 = vunpack.c.l.b16 %v2812
    %v2865 = vunpack.c.l.b16 %v2813
    %v2866 = vunpack.c.l.b16 %v2814
    %v2867 = vunpack.c.l.b16 %v2815
    %v2868 = vrot.slane %v2865, 7
    %v2869 = vsel %vm970, %v2868, %v2862
    %v2870 = vrot.slane %v2866, 7
    %v2871 = vsel %vm970, %v2870, %v2863
    %v2872 = vrot.slane %v2867, 7
    %v2873 = vsel %vm970, %v2872, %v2864
    %v2874 = vpack.c.b16 %v2869, %v2869
    %v2875 = vpack.c.b16 %v2871, %v2871
    %v2876 = vpack.c.b16 %v2873, %v2873
    %v2919 = vunpack.c.l.b16 %v2816
    %v2920 = vunpack.c.l.b16 %v2817
    %v2921 = vunpack.c.l.b16 %v2818
    %v2922 = vunpack.c.l.b16 %v2819
    %v2923 = vunpack.c.l.b16 %v2820
    %v2924 = vunpack.c.l.b16 %v2821
    %v2925 = vunpack.c.l.b16 %v2822
    %v2926 = vunpack.c.l.b16 %v2823
    %v2927 = vunpack.c.l.b16 %v2824
    %v2928 = vunpack.c.l.b16 %v2825
    %v2929 = vunpack.c.l.b16 %v2826
    %v2930 = vunpack.c.l.b16 %v2827
    %v2931 = vunpack.c.l.b16 %v2828
    %v2932 = vunpack.c.l.b16 %v2829
    %v2933 = vunpack.c.l.b16 %v2830
    %v2934 = vunpack.c.l.b16 %v2831
    %v2935 = vunpack.c.l.b16 %v2832
    %v2936 = vunpack.c.l.b16 %v2833
    %v2937 = vunpack.c.l.b16 %v2834
    %v2938 = vunpack.c.l.b16 %v2835
    %v2939 = vunpack.c.l.b16 %v2836
    %v2940 = vunpack.c.l.b16 %v2837
    %v2941 = vunpack.c.l.b16 %v2838
    %v2942 = vunpack.c.l.b16 %v2839
    %v2943 = vunpack.c.l.b16 %v2840
    %v2944 = vunpack.c.l.b16 %v2841
    %v2945 = vunpack.c.l.b16 %v2842
    %v2946 = vunpack.c.l.b16 %v2843
    %v2947 = vunpack.c.l.b16 %v2844
    %v2948 = vunpack.c.l.b16 %v2845
    %v2949 = vunpack.c.l.b16 %v2846
    %v2950 = vunpack.c.l.b16 %v2847
    %v2951 = vunpack.c.l.b16 %v2848
    %v2952 = vunpack.c.l.b16 %v2849
    %v2953 = vunpack.c.l.b16 %v2850
    %v2954 = vunpack.c.l.b16 %v2851
    %v2955 = vunpack.c.l.b16 %v2852
    %v2956 = vunpack.c.l.b16 %v2853
    %v2957 = vunpack.c.l.b16 %v2854
    %v2958 = vunpack.c.l.b16 %v2855
    %v2959 = vpack.c.b16 %v2920, %v2919
    %v2960 = vpack.c.b16 %v2922, %v2921
    %v2961 = vpack.c.b16 %v2924, %v2923
    %v2962 = vpack.c.b16 %v2926, %v2925
    %v2963 = vpack.c.b16 %v2928, %v2927
    %v2964 = vpack.c.b16 %v2930, %v2929
    %v2965 = vpack.c.b16 %v2932, %v2931
    %v2966 = vpack.c.b16 %v2934, %v2933
    %v2967 = vpack.c.b16 %v2936, %v2935
    %v2968 = vpack.c.b16 %v2938, %v2937
    %v2969 = vpack.c.b16 %v2940, %v2939
    %v2970 = vpack.c.b16 %v2942, %v2941
    %v2971 = vpack.c.b16 %v2944, %v2943
    %v2972 = vpack.c.b16 %v2946, %v2945
    %v2973 = vpack.c.b16 %v2948, %v2947
    %v2974 = vpack.c.b16 %v2950, %v2949
    %v2975 = vpack.c.b16 %v2952, %v2951
    %v2976 = vpack.c.b16 %v2954, %v2953
    %v2977 = vpack.c.b16 %v2956, %v2955
    %v2978 = vpack.c.b16 %v2958, %v2957
    %v3000 = vsel %vm227, %v2876, 0
    %3002 = vmatpush.bf16.msra.mxu0 %v2966
    %3003 = vmatpush.bf16.msra.mxu0 %v2965
    %3004 = vmatpush.bf16.msra.mxu0 %v2964
    %3005 = vmatpush.bf16.msra.mxu0 %v2963
    %3006 = vmatpush.bf16.msra.mxu0 %v2962
    %3007 = vmatpush.bf16.msra.mxu0 %v2961
    %3008 = vmatpush.bf16.msra.mxu0 %v2960
    %3009 = vmatpush.bf16.msra.mxu0 %v2959
    %3010 = vmatmul.bf16.gmra.mxu0 %v2874
    %v3011 = vpop.f32.mrf.mxu0
    %v3012 = vadd.f32 0.0, %v3011
    %v3013 = vpop.f32.mrf.mxu0
    %3014 = vdwg.mxu0
    %3015 = vmatpush.bf16.msra.mxu0 %v2974
    %3016 = vmatpush.bf16.msra.mxu0 %v2973
    %3017 = vmatpush.bf16.msra.mxu0 %v2972
    %3018 = vmatpush.bf16.msra.mxu0 %v2971
    %3019 = vmatpush.bf16.msra.mxu0 %v2970
    %3020 = vmatpush.bf16.msra.mxu0 %v2969
    %3021 = vmatpush.bf16.msra.mxu0 %v2968
    %3022 = vmatpush.bf16.msra.mxu0 %v2967
    %3023 = vmatmul.bf16.gmra.mxu0 %v2875
    %v3024 = vpop.f32.mrf.mxu0
    %v3025 = vadd.f32 %v3012, %v3024
    %v3026 = vpop.f32.mrf.mxu0
    %3027 = vdwg.mxu0
    %3028 = vmatpush.bf16.msra.mxu0 0
    %3029 = vmatpush.bf16.msra.mxu0 0
    %3030 = vmatpush.bf16.msra.mxu0 0
    %3031 = vmatpush.bf16.msra.mxu0 0
    %3032 = vmatpush.bf16.msra.mxu0 %v2978
    %3033 = vmatpush.bf16.msra.mxu0 %v2977
    %3034 = vmatpush.bf16.msra.mxu0 %v2976
    %3035 = vmatpush.bf16.msra.mxu0 %v2975
    %3036 = vmatmul.bf16.gmra.mxu0 %v3000
    %v3037 = vpop.f32.mrf.mxu0
    %v3038 = vadd.f32 %v3025, %v3037
    %v3039 = vpop.f32.mrf.mxu0
    %3040 = vdwg.mxu0
    %v3041 = vadd.f32 %v2032, %v3038
    %v3042 = vld [vmem:[%s19] sm:$0xff]
    %v3043 = vld [vmem:[%s19 + $0x8] sm:$0xf]
    %v3044 = vld [vmem:[%s19 + $0xc] sm:$0xff]
    %v3045 = vld [vmem:[%s19 + $0x14] sm:$0xf]
    %v3046 = vld [vmem:[%s19 + $0x18] sm:$0xff]
    %v3047 = vld [vmem:[%s19 + $0x20] sm:$0xf]
    %v3048 = vld [vmem:[%s19 + $0x24] sm:$0xff]
    %v3049 = vld [vmem:[%s19 + $0x2c] sm:$0xf]
    %v3058 = vunpack.c.l.b16 %v3042
    %v3059 = vunpack.c.h.b16 %v3042
    %v3060 = vunpack.c.l.b16 %v3043
    %v3061 = vunpack.c.l.b16 %v3044
    %v3062 = vunpack.c.h.b16 %v3044
    %v3063 = vunpack.c.l.b16 %v3045
    %v3064 = vunpack.c.l.b16 %v3046
    %v3065 = vunpack.c.h.b16 %v3046
    %v3066 = vunpack.c.l.b16 %v3047
    %v3067 = vunpack.c.l.b16 %v3048
    %v3068 = vunpack.c.h.b16 %v3048
    %v3069 = vunpack.c.l.b16 %v3049
    %v3070 = vpack.c.b16 %v3061, %v3058
    %v3071 = vpack.c.b16 %v3062, %v3059
    %v3072 = vpack.c.b16 %v3063, %v3060
    %v3073 = vpack.c.b16 %v3067, %v3064
    %v3074 = vpack.c.b16 %v3068, %v3065
    %v3075 = vpack.c.b16 %v3069, %v3066
    %3082 = vmatpush.bf16.msra.mxu0 0
    %3083 = vmatpush.bf16.msra.mxu0 0
    %3084 = vmatpush.bf16.msra.mxu0 0
    %3085 = vmatpush.bf16.msra.mxu0 0
    %3086 = vmatpush.bf16.msra.mxu0 0
    %3087 = vmatpush.bf16.msra.mxu0 0
    %3088 = vmatpush.bf16.msra.mxu0 %v3073
    %3089 = vmatpush.bf16.msra.mxu0 %v3070
    %3090 = vmatmul.bf16.gmra.mxu0 %v404
    %v3091 = vpop.f32.mrf.mxu0
    %v3092 = vadd.f32 0.0, %v3091
    %v3093 = vpop.f32.mrf.mxu0
    %3094 = vmatmul.bf16.gmra.mxu0 %v407
    %v3095 = vpop.f32.mrf.mxu0
    %v3096 = vadd.f32 0.0, %v3095
    %v3097 = vpop.f32.mrf.mxu0
    %3098 = vdwg.mxu0
    %3099 = vmatpush.bf16.msra.mxu0 0
    %3100 = vmatpush.bf16.msra.mxu0 0
    %3101 = vmatpush.bf16.msra.mxu0 0
    %3102 = vmatpush.bf16.msra.mxu0 0
    %3103 = vmatpush.bf16.msra.mxu0 0
    %3104 = vmatpush.bf16.msra.mxu0 0
    %3105 = vmatpush.bf16.msra.mxu0 %v3074
    %3106 = vmatpush.bf16.msra.mxu0 %v3071
    %3107 = vmatmul.bf16.gmra.mxu0 %v404
    %v3108 = vpop.f32.mrf.mxu0
    %v3109 = vadd.f32 0.0, %v3108
    %v3110 = vpop.f32.mrf.mxu0
    %3111 = vmatmul.bf16.gmra.mxu0 %v407
    %v3112 = vpop.f32.mrf.mxu0
    %v3113 = vadd.f32 0.0, %v3112
    %v3114 = vpop.f32.mrf.mxu0
    %3115 = vdwg.mxu0
    %3116 = vmatpush.bf16.msra.mxu0 0
    %3117 = vmatpush.bf16.msra.mxu0 0
    %3118 = vmatpush.bf16.msra.mxu0 0
    %3119 = vmatpush.bf16.msra.mxu0 0
    %3120 = vmatpush.bf16.msra.mxu0 0
    %3121 = vmatpush.bf16.msra.mxu0 0
    %3122 = vmatpush.bf16.msra.mxu0 %v3075
    %3123 = vmatpush.bf16.msra.mxu0 %v3072
    %3124 = vmatmul.bf16.gmra.mxu0 %v404
    %v3125 = vpop.f32.mrf.mxu0
    %v3126 = vadd.f32 0.0, %v3125
    %v3127 = vpop.f32.mrf.mxu0
    %3128 = vmatmul.bf16.gmra.mxu0 %v407
    %v3129 = vpop.f32.mrf.mxu0
    %v3130 = vadd.f32 0.0, %v3129
    %v3131 = vpop.f32.mrf.mxu0
    %3132 = vdwg.mxu0
    %s3133 = scalar_lea.vmem %s19, 48
    %v3134 = vld [vmem:[%s3133] sm:$0xff]
    %v3135 = vld [vmem:[%s3133 + $0x8] sm:$0xf]
    %v3136 = vld [vmem:[%s3133 + $0xc] sm:$0xff]
    %v3137 = vld [vmem:[%s3133 + $0x14] sm:$0xf]
    %v3138 = vld [vmem:[%s3133 + $0x18] sm:$0xff]
    %v3139 = vld [vmem:[%s3133 + $0x20] sm:$0xf]
    %v3140 = vld [vmem:[%s3133 + $0x24] sm:$0xff]
    %v3141 = vld [vmem:[%s3133 + $0x2c] sm:$0xf]
    %v3150 = vunpack.c.l.b16 %v3134
    %v3151 = vunpack.c.h.b16 %v3134
    %v3152 = vunpack.c.l.b16 %v3135
    %v3153 = vunpack.c.l.b16 %v3136
    %v3154 = vunpack.c.h.b16 %v3136
    %v3155 = vunpack.c.l.b16 %v3137
    %v3156 = vunpack.c.l.b16 %v3138
    %v3157 = vunpack.c.h.b16 %v3138
    %v3158 = vunpack.c.l.b16 %v3139
    %v3159 = vunpack.c.l.b16 %v3140
    %v3160 = vunpack.c.h.b16 %v3140
    %v3161 = vunpack.c.l.b16 %v3141
    %v3162 = vpack.c.b16 %v3153, %v3150
    %v3163 = vpack.c.b16 %v3154, %v3151
    %v3164 = vpack.c.b16 %v3155, %v3152
    %v3165 = vpack.c.b16 %v3159, %v3156
    %v3166 = vpack.c.b16 %v3160, %v3157
    %v3167 = vpack.c.b16 %v3161, %v3158
    %3174 = vmatpush.bf16.msra.mxu0 0
    %3175 = vmatpush.bf16.msra.mxu0 0
    %3176 = vmatpush.bf16.msra.mxu0 0
    %3177 = vmatpush.bf16.msra.mxu0 0
    %3178 = vmatpush.bf16.msra.mxu0 0
    %3179 = vmatpush.bf16.msra.mxu0 0
    %3180 = vmatpush.bf16.msra.mxu0 %v3165
    %3181 = vmatpush.bf16.msra.mxu0 %v3162
    %3182 = vmatmul.bf16.gmra.mxu0 %v404
    %v3183 = vpop.f32.mrf.mxu0
    %v3184 = vadd.f32 0.0, %v3183
    %v3185 = vpop.f32.mrf.mxu0
    %3186 = vmatmul.bf16.gmra.mxu0 %v407
    %v3187 = vpop.f32.mrf.mxu0
    %v3188 = vadd.f32 0.0, %v3187
    %v3189 = vpop.f32.mrf.mxu0
    %3190 = vdwg.mxu0
    %3191 = vmatpush.bf16.msra.mxu0 0
    %3192 = vmatpush.bf16.msra.mxu0 0
    %3193 = vmatpush.bf16.msra.mxu0 0
    %3194 = vmatpush.bf16.msra.mxu0 0
    %3195 = vmatpush.bf16.msra.mxu0 0
    %3196 = vmatpush.bf16.msra.mxu0 0
    %3197 = vmatpush.bf16.msra.mxu0 %v3166
    %3198 = vmatpush.bf16.msra.mxu0 %v3163
    %3199 = vmatmul.bf16.gmra.mxu0 %v404
    %v3200 = vpop.f32.mrf.mxu0
    %v3201 = vadd.f32 0.0, %v3200
    %v3202 = vpop.f32.mrf.mxu0
    %3203 = vmatmul.bf16.gmra.mxu0 %v407
    %v3204 = vpop.f32.mrf.mxu0
    %v3205 = vadd.f32 0.0, %v3204
    %v3206 = vpop.f32.mrf.mxu0
    %3207 = vdwg.mxu0
    %3208 = vmatpush.bf16.msra.mxu0 0
    %3209 = vmatpush.bf16.msra.mxu0 0
    %3210 = vmatpush.bf16.msra.mxu0 0
    %3211 = vmatpush.bf16.msra.mxu0 0
    %3212 = vmatpush.bf16.msra.mxu0 0
    %3213 = vmatpush.bf16.msra.mxu0 0
    %3214 = vmatpush.bf16.msra.mxu0 %v3167
    %3215 = vmatpush.bf16.msra.mxu0 %v3164
    %3216 = vmatmul.bf16.gmra.mxu0 %v404
    %v3217 = vpop.f32.mrf.mxu0
    %v3218 = vadd.f32 0.0, %v3217
    %v3219 = vpop.f32.mrf.mxu0
    %3220 = vmatmul.bf16.gmra.mxu0 %v407
    %v3221 = vpop.f32.mrf.mxu0
    %v3222 = vadd.f32 0.0, %v3221
    %v3223 = vpop.f32.mrf.mxu0
    %3224 = vdwg.mxu0
    %v3231 = vrot.slane %v3184, 1
    %v3232 = vrot.slane %v3201, 1
    %v3233 = vrot.slane %v3218, 1
    %v3234 = vrot.slane %v3188, 1
    %v3235 = vrot.slane %v3205, 1
    %v3236 = vrot.slane %v3222, 1
    %v3243 = vadd.f32 %v3092, %v3231
    %v3244 = vadd.f32 %v3109, %v3232
    %v3245 = vadd.f32 %v3126, %v3233
    %v3246 = vadd.f32 %v3096, %v3234
    %v3247 = vadd.f32 %v3113, %v3235
    %v3248 = vadd.f32 %v3130, %v3236
    %s3249 = scalar_lea.vmem %s19, 96
    %v3250 = vld [vmem:[%s3249] sm:$0xff]
    %v3251 = vld [vmem:[%s3249 + $0x8] sm:$0xf]
    %v3252 = vld [vmem:[%s3249 + $0xc] sm:$0xff]
    %v3253 = vld [vmem:[%s3249 + $0x14] sm:$0xf]
    %v3254 = vld [vmem:[%s3249 + $0x18] sm:$0xff]
    %v3255 = vld [vmem:[%s3249 + $0x20] sm:$0xf]
    %v3256 = vld [vmem:[%s3249 + $0x24] sm:$0xff]
    %v3257 = vld [vmem:[%s3249 + $0x2c] sm:$0xf]
    %v3266 = vunpack.c.l.b16 %v3250
    %v3267 = vunpack.c.h.b16 %v3250
    %v3268 = vunpack.c.l.b16 %v3251
    %v3269 = vunpack.c.l.b16 %v3252
    %v3270 = vunpack.c.h.b16 %v3252
    %v3271 = vunpack.c.l.b16 %v3253
    %v3272 = vunpack.c.l.b16 %v3254
    %v3273 = vunpack.c.h.b16 %v3254
    %v3274 = vunpack.c.l.b16 %v3255
    %v3275 = vunpack.c.l.b16 %v3256
    %v3276 = vunpack.c.h.b16 %v3256
    %v3277 = vunpack.c.l.b16 %v3257
    %v3278 = vpack.c.b16 %v3269, %v3266
    %v3279 = vpack.c.b16 %v3270, %v3267
    %v3280 = vpack.c.b16 %v3271, %v3268
    %v3281 = vpack.c.b16 %v3275, %v3272
    %v3282 = vpack.c.b16 %v3276, %v3273
    %v3283 = vpack.c.b16 %v3277, %v3274
    %3290 = vmatpush.bf16.msra.mxu0 0
    %3291 = vmatpush.bf16.msra.mxu0 0
    %3292 = vmatpush.bf16.msra.mxu0 0
    %3293 = vmatpush.bf16.msra.mxu0 0
    %3294 = vmatpush.bf16.msra.mxu0 0
    %3295 = vmatpush.bf16.msra.mxu0 0
    %3296 = vmatpush.bf16.msra.mxu0 %v3281
    %3297 = vmatpush.bf16.msra.mxu0 %v3278
    %3298 = vmatmul.bf16.gmra.mxu0 %v404
    %v3299 = vpop.f32.mrf.mxu0
    %v3300 = vadd.f32 0.0, %v3299
    %v3301 = vpop.f32.mrf.mxu0
    %v3302 = vadd.f32 0.0, %v3301
    %3303 = vmatmul.bf16.gmra.mxu0 %v407
    %v3304 = vpop.f32.mrf.mxu0
    %v3305 = vadd.f32 0.0, %v3304
    %v3306 = vpop.f32.mrf.mxu0
    %v3307 = vadd.f32 0.0, %v3306
    %3308 = vdwg.mxu0
    %3309 = vmatpush.bf16.msra.mxu0 0
    %3310 = vmatpush.bf16.msra.mxu0 0
    %3311 = vmatpush.bf16.msra.mxu0 0
    %3312 = vmatpush.bf16.msra.mxu0 0
    %3313 = vmatpush.bf16.msra.mxu0 0
    %3314 = vmatpush.bf16.msra.mxu0 0
    %3315 = vmatpush.bf16.msra.mxu0 %v3282
    %3316 = vmatpush.bf16.msra.mxu0 %v3279
    %3317 = vmatmul.bf16.gmra.mxu0 %v404
    %v3318 = vpop.f32.mrf.mxu0
    %v3319 = vadd.f32 0.0, %v3318
    %v3320 = vpop.f32.mrf.mxu0
    %v3321 = vadd.f32 0.0, %v3320
    %3322 = vmatmul.bf16.gmra.mxu0 %v407
    %v3323 = vpop.f32.mrf.mxu0
    %v3324 = vadd.f32 0.0, %v3323
    %v3325 = vpop.f32.mrf.mxu0
    %v3326 = vadd.f32 0.0, %v3325
    %3327 = vdwg.mxu0
    %3328 = vmatpush.bf16.msra.mxu0 0
    %3329 = vmatpush.bf16.msra.mxu0 0
    %3330 = vmatpush.bf16.msra.mxu0 0
    %3331 = vmatpush.bf16.msra.mxu0 0
    %3332 = vmatpush.bf16.msra.mxu0 0
    %3333 = vmatpush.bf16.msra.mxu0 0
    %3334 = vmatpush.bf16.msra.mxu0 %v3283
    %3335 = vmatpush.bf16.msra.mxu0 %v3280
    %3336 = vmatmul.bf16.gmra.mxu0 %v404
    %v3337 = vpop.f32.mrf.mxu0
    %v3338 = vadd.f32 0.0, %v3337
    %v3339 = vpop.f32.mrf.mxu0
    %v3340 = vadd.f32 0.0, %v3339
    %3341 = vmatmul.bf16.gmra.mxu0 %v407
    %v3342 = vpop.f32.mrf.mxu0
    %v3343 = vadd.f32 0.0, %v3342
    %v3344 = vpop.f32.mrf.mxu0
    %v3345 = vadd.f32 0.0, %v3344
    %3346 = vdwg.mxu0
    %v3359 = vrot.slane %v3300, 2
    %v3360 = vrot.slane %v3302, 2
    %v3361 = vsel %vm1687, %v3359, %v3360
    %v3362 = vrot.slane %v3319, 2
    %v3363 = vrot.slane %v3321, 2
    %v3364 = vsel %vm1687, %v3362, %v3363
    %v3365 = vrot.slane %v3338, 2
    %v3366 = vrot.slane %v3340, 2
    %v3367 = vsel %vm1687, %v3365, %v3366
    %v3368 = vrot.slane %v3305, 2
    %v3369 = vrot.slane %v3307, 2
    %v3370 = vsel %vm1687, %v3368, %v3369
    %v3371 = vrot.slane %v3324, 2
    %v3372 = vrot.slane %v3326, 2
    %v3373 = vsel %vm1687, %v3371, %v3372
    %v3374 = vrot.slane %v3343, 2
    %v3375 = vrot.slane %v3345, 2
    %v3376 = vsel %vm1687, %v3374, %v3375
    %v3383 = vadd.f32 %v3243, %v3361
    %v3384 = vadd.f32 %v3244, %v3364
    %v3385 = vadd.f32 %v3245, %v3367
    %v3386 = vadd.f32 %v3246, %v3370
    %v3387 = vadd.f32 %v3247, %v3373
    %v3388 = vadd.f32 %v3248, %v3376
    %s3389 = scalar_lea.vmem %s19, 144
    %v3390 = vld [vmem:[%s3389] sm:$0xff]
    %v3391 = vld [vmem:[%s3389 + $0x8] sm:$0xf]
    %v3392 = vld [vmem:[%s3389 + $0xc] sm:$0xff]
    %v3393 = vld [vmem:[%s3389 + $0x14] sm:$0xf]
    %v3394 = vld [vmem:[%s3389 + $0x18] sm:$0xff]
    %v3395 = vld [vmem:[%s3389 + $0x20] sm:$0xf]
    %v3396 = vld [vmem:[%s3389 + $0x24] sm:$0xff]
    %v3397 = vld [vmem:[%s3389 + $0x2c] sm:$0xf]
    %v3406 = vunpack.c.l.b16 %v3390
    %v3407 = vunpack.c.h.b16 %v3390
    %v3408 = vunpack.c.l.b16 %v3391
    %v3409 = vunpack.c.l.b16 %v3392
    %v3410 = vunpack.c.h.b16 %v3392
    %v3411 = vunpack.c.l.b16 %v3393
    %v3412 = vunpack.c.l.b16 %v3394
    %v3413 = vunpack.c.h.b16 %v3394
    %v3414 = vunpack.c.l.b16 %v3395
    %v3415 = vunpack.c.l.b16 %v3396
    %v3416 = vunpack.c.h.b16 %v3396
    %v3417 = vunpack.c.l.b16 %v3397
    %v3418 = vpack.c.b16 %v3409, %v3406
    %v3419 = vpack.c.b16 %v3410, %v3407
    %v3420 = vpack.c.b16 %v3411, %v3408
    %v3421 = vpack.c.b16 %v3415, %v3412
    %v3422 = vpack.c.b16 %v3416, %v3413
    %v3423 = vpack.c.b16 %v3417, %v3414
    %3430 = vmatpush.bf16.msra.mxu0 0
    %3431 = vmatpush.bf16.msra.mxu0 0
    %3432 = vmatpush.bf16.msra.mxu0 0
    %3433 = vmatpush.bf16.msra.mxu0 0
    %3434 = vmatpush.bf16.msra.mxu0 0
    %3435 = vmatpush.bf16.msra.mxu0 0
    %3436 = vmatpush.bf16.msra.mxu0 %v3421
    %3437 = vmatpush.bf16.msra.mxu0 %v3418
    %3438 = vmatmul.bf16.gmra.mxu0 %v404
    %v3439 = vpop.f32.mrf.mxu0
    %v3440 = vadd.f32 0.0, %v3439
    %v3441 = vpop.f32.mrf.mxu0
    %v3442 = vadd.f32 0.0, %v3441
    %3443 = vmatmul.bf16.gmra.mxu0 %v407
    %v3444 = vpop.f32.mrf.mxu0
    %v3445 = vadd.f32 0.0, %v3444
    %v3446 = vpop.f32.mrf.mxu0
    %v3447 = vadd.f32 0.0, %v3446
    %3448 = vdwg.mxu0
    %3449 = vmatpush.bf16.msra.mxu0 0
    %3450 = vmatpush.bf16.msra.mxu0 0
    %3451 = vmatpush.bf16.msra.mxu0 0
    %3452 = vmatpush.bf16.msra.mxu0 0
    %3453 = vmatpush.bf16.msra.mxu0 0
    %3454 = vmatpush.bf16.msra.mxu0 0
    %3455 = vmatpush.bf16.msra.mxu0 %v3422
    %3456 = vmatpush.bf16.msra.mxu0 %v3419
    %3457 = vmatmul.bf16.gmra.mxu0 %v404
    %v3458 = vpop.f32.mrf.mxu0
    %v3459 = vadd.f32 0.0, %v3458
    %v3460 = vpop.f32.mrf.mxu0
    %v3461 = vadd.f32 0.0, %v3460
    %3462 = vmatmul.bf16.gmra.mxu0 %v407
    %v3463 = vpop.f32.mrf.mxu0
    %v3464 = vadd.f32 0.0, %v3463
    %v3465 = vpop.f32.mrf.mxu0
    %v3466 = vadd.f32 0.0, %v3465
    %3467 = vdwg.mxu0
    %3468 = vmatpush.bf16.msra.mxu0 0
    %3469 = vmatpush.bf16.msra.mxu0 0
    %3470 = vmatpush.bf16.msra.mxu0 0
    %3471 = vmatpush.bf16.msra.mxu0 0
    %3472 = vmatpush.bf16.msra.mxu0 0
    %3473 = vmatpush.bf16.msra.mxu0 0
    %3474 = vmatpush.bf16.msra.mxu0 %v3423
    %3475 = vmatpush.bf16.msra.mxu0 %v3420
    %3476 = vmatmul.bf16.gmra.mxu0 %v404
    %v3477 = vpop.f32.mrf.mxu0
    %v3478 = vadd.f32 0.0, %v3477
    %v3479 = vpop.f32.mrf.mxu0
    %v3480 = vadd.f32 0.0, %v3479
    %3481 = vmatmul.bf16.gmra.mxu0 %v407
    %v3482 = vpop.f32.mrf.mxu0
    %v3483 = vadd.f32 0.0, %v3482
    %v3484 = vpop.f32.mrf.mxu0
    %v3485 = vadd.f32 0.0, %v3484
    %3486 = vdwg.mxu0
    %v3499 = vrot.slane %v3440, 3
    %v3500 = vrot.slane %v3442, 3
    %v3501 = vsel %vm283, %v3499, %v3500
    %v3502 = vrot.slane %v3459, 3
    %v3503 = vrot.slane %v3461, 3
    %v3504 = vsel %vm283, %v3502, %v3503
    %v3505 = vrot.slane %v3478, 3
    %v3506 = vrot.slane %v3480, 3
    %v3507 = vsel %vm283, %v3505, %v3506
    %v3508 = vrot.slane %v3445, 3
    %v3509 = vrot.slane %v3447, 3
    %v3510 = vsel %vm283, %v3508, %v3509
    %v3511 = vrot.slane %v3464, 3
    %v3512 = vrot.slane %v3466, 3
    %v3513 = vsel %vm283, %v3511, %v3512
    %v3514 = vrot.slane %v3483, 3
    %v3515 = vrot.slane %v3485, 3
    %v3516 = vsel %vm283, %v3514, %v3515
    %v3523 = vadd.f32 %v3383, %v3501
    %v3524 = vadd.f32 %v3384, %v3504
    %v3525 = vadd.f32 %v3385, %v3507
    %v3526 = vadd.f32 %v3386, %v3510
    %v3527 = vadd.f32 %v3387, %v3513
    %v3528 = vadd.f32 %v3388, %v3516
    %s3529 = scalar_lea.vmem %s19, 192
    %v3530 = vld [vmem:[%s3529] sm:$0xff]
    %v3531 = vld [vmem:[%s3529 + $0x8] sm:$0xf]
    %v3532 = vld [vmem:[%s3529 + $0xc] sm:$0xff]
    %v3533 = vld [vmem:[%s3529 + $0x14] sm:$0xf]
    %v3534 = vld [vmem:[%s3529 + $0x18] sm:$0xff]
    %v3535 = vld [vmem:[%s3529 + $0x20] sm:$0xf]
    %v3536 = vld [vmem:[%s3529 + $0x24] sm:$0xff]
    %v3537 = vld [vmem:[%s3529 + $0x2c] sm:$0xf]
    %v3546 = vunpack.c.l.b16 %v3530
    %v3547 = vunpack.c.h.b16 %v3530
    %v3548 = vunpack.c.l.b16 %v3531
    %v3549 = vunpack.c.l.b16 %v3532
    %v3550 = vunpack.c.h.b16 %v3532
    %v3551 = vunpack.c.l.b16 %v3533
    %v3552 = vunpack.c.l.b16 %v3534
    %v3553 = vunpack.c.h.b16 %v3534
    %v3554 = vunpack.c.l.b16 %v3535
    %v3555 = vunpack.c.l.b16 %v3536
    %v3556 = vunpack.c.h.b16 %v3536
    %v3557 = vunpack.c.l.b16 %v3537
    %v3558 = vpack.c.b16 %v3549, %v3546
    %v3559 = vpack.c.b16 %v3550, %v3547
    %v3560 = vpack.c.b16 %v3551, %v3548
    %v3561 = vpack.c.b16 %v3555, %v3552
    %v3562 = vpack.c.b16 %v3556, %v3553
    %v3563 = vpack.c.b16 %v3557, %v3554
    %3570 = vmatpush.bf16.msra.mxu0 0
    %3571 = vmatpush.bf16.msra.mxu0 0
    %3572 = vmatpush.bf16.msra.mxu0 0
    %3573 = vmatpush.bf16.msra.mxu0 0
    %3574 = vmatpush.bf16.msra.mxu0 0
    %3575 = vmatpush.bf16.msra.mxu0 0
    %3576 = vmatpush.bf16.msra.mxu0 %v3561
    %3577 = vmatpush.bf16.msra.mxu0 %v3558
    %3578 = vmatmul.bf16.gmra.mxu0 %v404
    %v3579 = vpop.f32.mrf.mxu0
    %v3580 = vadd.f32 0.0, %v3579
    %v3581 = vpop.f32.mrf.mxu0
    %v3582 = vadd.f32 0.0, %v3581
    %3583 = vmatmul.bf16.gmra.mxu0 %v407
    %v3584 = vpop.f32.mrf.mxu0
    %v3585 = vadd.f32 0.0, %v3584
    %v3586 = vpop.f32.mrf.mxu0
    %v3587 = vadd.f32 0.0, %v3586
    %3588 = vdwg.mxu0
    %3589 = vmatpush.bf16.msra.mxu0 0
    %3590 = vmatpush.bf16.msra.mxu0 0
    %3591 = vmatpush.bf16.msra.mxu0 0
    %3592 = vmatpush.bf16.msra.mxu0 0
    %3593 = vmatpush.bf16.msra.mxu0 0
    %3594 = vmatpush.bf16.msra.mxu0 0
    %3595 = vmatpush.bf16.msra.mxu0 %v3562
    %3596 = vmatpush.bf16.msra.mxu0 %v3559
    %3597 = vmatmul.bf16.gmra.mxu0 %v404
    %v3598 = vpop.f32.mrf.mxu0
    %v3599 = vadd.f32 0.0, %v3598
    %v3600 = vpop.f32.mrf.mxu0
    %v3601 = vadd.f32 0.0, %v3600
    %3602 = vmatmul.bf16.gmra.mxu0 %v407
    %v3603 = vpop.f32.mrf.mxu0
    %v3604 = vadd.f32 0.0, %v3603
    %v3605 = vpop.f32.mrf.mxu0
    %v3606 = vadd.f32 0.0, %v3605
    %3607 = vdwg.mxu0
    %3608 = vmatpush.bf16.msra.mxu0 0
    %3609 = vmatpush.bf16.msra.mxu0 0
    %3610 = vmatpush.bf16.msra.mxu0 0
    %3611 = vmatpush.bf16.msra.mxu0 0
    %3612 = vmatpush.bf16.msra.mxu0 0
    %3613 = vmatpush.bf16.msra.mxu0 0
    %3614 = vmatpush.bf16.msra.mxu0 %v3563
    %3615 = vmatpush.bf16.msra.mxu0 %v3560
    %3616 = vmatmul.bf16.gmra.mxu0 %v404
    %v3617 = vpop.f32.mrf.mxu0
    %v3618 = vadd.f32 0.0, %v3617
    %v3619 = vpop.f32.mrf.mxu0
    %v3620 = vadd.f32 0.0, %v3619
    %3621 = vmatmul.bf16.gmra.mxu0 %v407
    %v3622 = vpop.f32.mrf.mxu0
    %v3623 = vadd.f32 0.0, %v3622
    %v3624 = vpop.f32.mrf.mxu0
    %v3625 = vadd.f32 0.0, %v3624
    %3626 = vdwg.mxu0
    %v3639 = vrot.slane %v3580, 4
    %v3640 = vrot.slane %v3582, 4
    %v3641 = vsel %vm2696, %v3639, %v3640
    %v3642 = vrot.slane %v3599, 4
    %v3643 = vrot.slane %v3601, 4
    %v3644 = vsel %vm2696, %v3642, %v3643
    %v3645 = vrot.slane %v3618, 4
    %v3646 = vrot.slane %v3620, 4
    %v3647 = vsel %vm2696, %v3645, %v3646
    %v3648 = vrot.slane %v3585, 4
    %v3649 = vrot.slane %v3587, 4
    %v3650 = vsel %vm2696, %v3648, %v3649
    %v3651 = vrot.slane %v3604, 4
    %v3652 = vrot.slane %v3606, 4
    %v3653 = vsel %vm2696, %v3651, %v3652
    %v3654 = vrot.slane %v3623, 4
    %v3655 = vrot.slane %v3625, 4
    %v3656 = vsel %vm2696, %v3654, %v3655
    %v3663 = vadd.f32 %v3523, %v3641
    %v3664 = vadd.f32 %v3524, %v3644
    %v3665 = vadd.f32 %v3525, %v3647
    %v3666 = vadd.f32 %v3526, %v3650
    %v3667 = vadd.f32 %v3527, %v3653
    %v3668 = vadd.f32 %v3528, %v3656
    %s3669 = scalar_lea.vmem %s19, 240
    %v3670 = vld [vmem:[%s3669] sm:$0xff]
    %v3671 = vld [vmem:[%s3669 + $0x8] sm:$0xf]
    %v3672 = vld [vmem:[%s3669 + $0xc] sm:$0xff]
    %v3673 = vld [vmem:[%s3669 + $0x14] sm:$0xf]
    %v3674 = vld [vmem:[%s3669 + $0x18] sm:$0xff]
    %v3675 = vld [vmem:[%s3669 + $0x20] sm:$0xf]
    %v3676 = vld [vmem:[%s3669 + $0x24] sm:$0xff]
    %v3677 = vld [vmem:[%s3669 + $0x2c] sm:$0xf]
    %v3686 = vunpack.c.l.b16 %v3670
    %v3687 = vunpack.c.h.b16 %v3670
    %v3688 = vunpack.c.l.b16 %v3671
    %v3689 = vunpack.c.l.b16 %v3672
    %v3690 = vunpack.c.h.b16 %v3672
    %v3691 = vunpack.c.l.b16 %v3673
    %v3692 = vunpack.c.l.b16 %v3674
    %v3693 = vunpack.c.h.b16 %v3674
    %v3694 = vunpack.c.l.b16 %v3675
    %v3695 = vunpack.c.l.b16 %v3676
    %v3696 = vunpack.c.h.b16 %v3676
    %v3697 = vunpack.c.l.b16 %v3677
    %v3698 = vpack.c.b16 %v3689, %v3686
    %v3699 = vpack.c.b16 %v3690, %v3687
    %v3700 = vpack.c.b16 %v3691, %v3688
    %v3701 = vpack.c.b16 %v3695, %v3692
    %v3702 = vpack.c.b16 %v3696, %v3693
    %v3703 = vpack.c.b16 %v3697, %v3694
    %3710 = vmatpush.bf16.msra.mxu0 0
    %3711 = vmatpush.bf16.msra.mxu0 0
    %3712 = vmatpush.bf16.msra.mxu0 0
    %3713 = vmatpush.bf16.msra.mxu0 0
    %3714 = vmatpush.bf16.msra.mxu0 0
    %3715 = vmatpush.bf16.msra.mxu0 0
    %3716 = vmatpush.bf16.msra.mxu0 %v3701
    %3717 = vmatpush.bf16.msra.mxu0 %v3698
    %3718 = vmatmul.bf16.gmra.mxu0 %v404
    %v3719 = vpop.f32.mrf.mxu0
    %v3720 = vadd.f32 0.0, %v3719
    %v3721 = vpop.f32.mrf.mxu0
    %v3722 = vadd.f32 0.0, %v3721
    %3723 = vmatmul.bf16.gmra.mxu0 %v407
    %v3724 = vpop.f32.mrf.mxu0
    %v3725 = vadd.f32 0.0, %v3724
    %v3726 = vpop.f32.mrf.mxu0
    %v3727 = vadd.f32 0.0, %v3726
    %3728 = vdwg.mxu0
    %3729 = vmatpush.bf16.msra.mxu0 0
    %3730 = vmatpush.bf16.msra.mxu0 0
    %3731 = vmatpush.bf16.msra.mxu0 0
    %3732 = vmatpush.bf16.msra.mxu0 0
    %3733 = vmatpush.bf16.msra.mxu0 0
    %3734 = vmatpush.bf16.msra.mxu0 0
    %3735 = vmatpush.bf16.msra.mxu0 %v3702
    %3736 = vmatpush.bf16.msra.mxu0 %v3699
    %3737 = vmatmul.bf16.gmra.mxu0 %v404
    %v3738 = vpop.f32.mrf.mxu0
    %v3739 = vadd.f32 0.0, %v3738
    %v3740 = vpop.f32.mrf.mxu0
    %v3741 = vadd.f32 0.0, %v3740
    %3742 = vmatmul.bf16.gmra.mxu0 %v407
    %v3743 = vpop.f32.mrf.mxu0
    %v3744 = vadd.f32 0.0, %v3743
    %v3745 = vpop.f32.mrf.mxu0
    %v3746 = vadd.f32 0.0, %v3745
    %3747 = vdwg.mxu0
    %3748 = vmatpush.bf16.msra.mxu0 0
    %3749 = vmatpush.bf16.msra.mxu0 0
    %3750 = vmatpush.bf16.msra.mxu0 0
    %3751 = vmatpush.bf16.msra.mxu0 0
    %3752 = vmatpush.bf16.msra.mxu0 0
    %3753 = vmatpush.bf16.msra.mxu0 0
    %3754 = vmatpush.bf16.msra.mxu0 %v3703
    %3755 = vmatpush.bf16.msra.mxu0 %v3700
    %3756 = vmatmul.bf16.gmra.mxu0 %v404
    %v3757 = vpop.f32.mrf.mxu0
    %v3758 = vadd.f32 0.0, %v3757
    %v3759 = vpop.f32.mrf.mxu0
    %v3760 = vadd.f32 0.0, %v3759
    %3761 = vmatmul.bf16.gmra.mxu0 %v407
    %v3762 = vpop.f32.mrf.mxu0
    %v3763 = vadd.f32 0.0, %v3762
    %v3764 = vpop.f32.mrf.mxu0
    %v3765 = vadd.f32 0.0, %v3764
    %3766 = vdwg.mxu0
    %vm3779 = vcmask 1042432
    %v3780 = vrot.slane %v3720, 5
    %v3781 = vrot.slane %v3722, 5
    %v3782 = vsel %vm3779, %v3780, %v3781
    %v3783 = vrot.slane %v3739, 5
    %v3784 = vrot.slane %v3741, 5
    %v3785 = vsel %vm3779, %v3783, %v3784
    %v3786 = vrot.slane %v3758, 5
    %v3787 = vrot.slane %v3760, 5
    %v3788 = vsel %vm3779, %v3786, %v3787
    %v3789 = vrot.slane %v3725, 5
    %v3790 = vrot.slane %v3727, 5
    %v3791 = vsel %vm3779, %v3789, %v3790
    %v3792 = vrot.slane %v3744, 5
    %v3793 = vrot.slane %v3746, 5
    %v3794 = vsel %vm3779, %v3792, %v3793
    %v3795 = vrot.slane %v3763, 5
    %v3796 = vrot.slane %v3765, 5
    %v3797 = vsel %vm3779, %v3795, %v3796
    %v3804 = vadd.f32 %v3663, %v3782
    %v3805 = vadd.f32 %v3664, %v3785
    %v3806 = vadd.f32 %v3665, %v3788
    %v3807 = vadd.f32 %v3666, %v3791
    %v3808 = vadd.f32 %v3667, %v3794
    %v3809 = vadd.f32 %v3668, %v3797
    %s3810 = scalar_lea.vmem %s19, 288
    %v3811 = vld [vmem:[%s3810] sm:$0xff]
    %v3812 = vld [vmem:[%s3810 + $0x8] sm:$0xf]
    %v3813 = vld [vmem:[%s3810 + $0xc] sm:$0xff]
    %v3814 = vld [vmem:[%s3810 + $0x14] sm:$0xf]
    %v3815 = vld [vmem:[%s3810 + $0x18] sm:$0xff]
    %v3816 = vld [vmem:[%s3810 + $0x20] sm:$0xf]
    %v3817 = vld [vmem:[%s3810 + $0x24] sm:$0xff]
    %v3818 = vld [vmem:[%s3810 + $0x2c] sm:$0xf]
    %v3827 = vunpack.c.l.b16 %v3811
    %v3828 = vunpack.c.h.b16 %v3811
    %v3829 = vunpack.c.l.b16 %v3812
    %v3830 = vunpack.c.l.b16 %v3813
    %v3831 = vunpack.c.h.b16 %v3813
    %v3832 = vunpack.c.l.b16 %v3814
    %v3833 = vunpack.c.l.b16 %v3815
    %v3834 = vunpack.c.h.b16 %v3815
    %v3835 = vunpack.c.l.b16 %v3816
    %v3836 = vunpack.c.l.b16 %v3817
    %v3837 = vunpack.c.h.b16 %v3817
    %v3838 = vunpack.c.l.b16 %v3818
    %v3839 = vpack.c.b16 %v3830, %v3827
    %v3840 = vpack.c.b16 %v3831, %v3828
    %v3841 = vpack.c.b16 %v3832, %v3829
    %v3842 = vpack.c.b16 %v3836, %v3833
    %v3843 = vpack.c.b16 %v3837, %v3834
    %v3844 = vpack.c.b16 %v3838, %v3835
    %3851 = vmatpush.bf16.msra.mxu0 0
    %3852 = vmatpush.bf16.msra.mxu0 0
    %3853 = vmatpush.bf16.msra.mxu0 0
    %3854 = vmatpush.bf16.msra.mxu0 0
    %3855 = vmatpush.bf16.msra.mxu0 0
    %3856 = vmatpush.bf16.msra.mxu0 0
    %3857 = vmatpush.bf16.msra.mxu0 %v3842
    %3858 = vmatpush.bf16.msra.mxu0 %v3839
    %3859 = vmatmul.bf16.gmra.mxu0 %v404
    %v3860 = vpop.f32.mrf.mxu0
    %v3861 = vadd.f32 0.0, %v3860
    %v3862 = vpop.f32.mrf.mxu0
    %v3863 = vadd.f32 0.0, %v3862
    %3864 = vmatmul.bf16.gmra.mxu0 %v407
    %v3865 = vpop.f32.mrf.mxu0
    %v3866 = vadd.f32 0.0, %v3865
    %v3867 = vpop.f32.mrf.mxu0
    %v3868 = vadd.f32 0.0, %v3867
    %3869 = vdwg.mxu0
    %3870 = vmatpush.bf16.msra.mxu0 0
    %3871 = vmatpush.bf16.msra.mxu0 0
    %3872 = vmatpush.bf16.msra.mxu0 0
    %3873 = vmatpush.bf16.msra.mxu0 0
    %3874 = vmatpush.bf16.msra.mxu0 0
    %3875 = vmatpush.bf16.msra.mxu0 0
    %3876 = vmatpush.bf16.msra.mxu0 %v3843
    %3877 = vmatpush.bf16.msra.mxu0 %v3840
    %3878 = vmatmul.bf16.gmra.mxu0 %v404
    %v3879 = vpop.f32.mrf.mxu0
    %v3880 = vadd.f32 0.0, %v3879
    %v3881 = vpop.f32.mrf.mxu0
    %v3882 = vadd.f32 0.0, %v3881
    %3883 = vmatmul.bf16.gmra.mxu0 %v407
    %v3884 = vpop.f32.mrf.mxu0
    %v3885 = vadd.f32 0.0, %v3884
    %v3886 = vpop.f32.mrf.mxu0
    %v3887 = vadd.f32 0.0, %v3886
    %3888 = vdwg.mxu0
    %3889 = vmatpush.bf16.msra.mxu0 0
    %3890 = vmatpush.bf16.msra.mxu0 0
    %3891 = vmatpush.bf16.msra.mxu0 0
    %3892 = vmatpush.bf16.msra.mxu0 0
    %3893 = vmatpush.bf16.msra.mxu0 0
    %3894 = vmatpush.bf16.msra.mxu0 0
    %3895 = vmatpush.bf16.msra.mxu0 %v3844
    %3896 = vmatpush.bf16.msra.mxu0 %v3841
    %3897 = vmatmul.bf16.gmra.mxu0 %v404
    %v3898 = vpop.f32.mrf.mxu0
    %v3899 = vadd.f32 0.0, %v3898
    %v3900 = vpop.f32.mrf.mxu0
    %v3901 = vadd.f32 0.0, %v3900
    %3902 = vmatmul.bf16.gmra.mxu0 %v407
    %v3903 = vpop.f32.mrf.mxu0
    %v3904 = vadd.f32 0.0, %v3903
    %v3905 = vpop.f32.mrf.mxu0
    %v3906 = vadd.f32 0.0, %v3905
    %3907 = vdwg.mxu0
    %vm3920 = vcmask 1041408
    %v3921 = vrot.slane %v3861, 6
    %v3922 = vrot.slane %v3863, 6
    %v3923 = vsel %vm3920, %v3921, %v3922
    %v3924 = vrot.slane %v3880, 6
    %v3925 = vrot.slane %v3882, 6
    %v3926 = vsel %vm3920, %v3924, %v3925
    %v3927 = vrot.slane %v3899, 6
    %v3928 = vrot.slane %v3901, 6
    %v3929 = vsel %vm3920, %v3927, %v3928
    %v3930 = vrot.slane %v3866, 6
    %v3931 = vrot.slane %v3868, 6
    %v3932 = vsel %vm3920, %v3930, %v3931
    %v3933 = vrot.slane %v3885, 6
    %v3934 = vrot.slane %v3887, 6
    %v3935 = vsel %vm3920, %v3933, %v3934
    %v3936 = vrot.slane %v3904, 6
    %v3937 = vrot.slane %v3906, 6
    %v3938 = vsel %vm3920, %v3936, %v3937
    %v3945 = vadd.f32 %v3804, %v3923
    %v3946 = vadd.f32 %v3805, %v3926
    %v3947 = vadd.f32 %v3806, %v3929
    %v3948 = vadd.f32 %v3807, %v3932
    %v3949 = vadd.f32 %v3808, %v3935
    %v3950 = vadd.f32 %v3809, %v3938
    %s3951 = scalar_lea.vmem %s19, 336
    %v3952 = vld [vmem:[%s3951] sm:$0xff]
    %v3953 = vld [vmem:[%s3951 + $0x8] sm:$0xf]
    %v3954 = vld [vmem:[%s3951 + $0xc] sm:$0xff]
    %v3955 = vld [vmem:[%s3951 + $0x14] sm:$0xf]
    %v3956 = vld [vmem:[%s3951 + $0x18] sm:$0xff]
    %v3957 = vld [vmem:[%s3951 + $0x20] sm:$0xf]
    %v3958 = vld [vmem:[%s3951 + $0x24] sm:$0xff]
    %v3959 = vld [vmem:[%s3951 + $0x2c] sm:$0xf]
    %v3968 = vunpack.c.l.b16 %v3952
    %v3969 = vunpack.c.h.b16 %v3952
    %v3970 = vunpack.c.l.b16 %v3953
    %v3971 = vunpack.c.l.b16 %v3954
    %v3972 = vunpack.c.h.b16 %v3954
    %v3973 = vunpack.c.l.b16 %v3955
    %v3974 = vunpack.c.l.b16 %v3956
    %v3975 = vunpack.c.h.b16 %v3956
    %v3976 = vunpack.c.l.b16 %v3957
    %v3977 = vunpack.c.l.b16 %v3958
    %v3978 = vunpack.c.h.b16 %v3958
    %v3979 = vunpack.c.l.b16 %v3959
    %v3980 = vpack.c.b16 %v3971, %v3968
    %v3981 = vpack.c.b16 %v3972, %v3969
    %v3982 = vpack.c.b16 %v3973, %v3970
    %v3983 = vpack.c.b16 %v3977, %v3974
    %v3984 = vpack.c.b16 %v3978, %v3975
    %v3985 = vpack.c.b16 %v3979, %v3976
    %3992 = vmatpush.bf16.msra.mxu0 0
    %3993 = vmatpush.bf16.msra.mxu0 0
    %3994 = vmatpush.bf16.msra.mxu0 0
    %3995 = vmatpush.bf16.msra.mxu0 0
    %3996 = vmatpush.bf16.msra.mxu0 0
    %3997 = vmatpush.bf16.msra.mxu0 0
    %3998 = vmatpush.bf16.msra.mxu0 %v3983
    %3999 = vmatpush.bf16.msra.mxu0 %v3980
    %4000 = vmatmul.bf16.gmra.mxu0 %v404
    %v4001 = vpop.f32.mrf.mxu0
    %v4002 = vadd.f32 0.0, %v4001
    %v4003 = vpop.f32.mrf.mxu0
    %v4004 = vadd.f32 0.0, %v4003
    %4005 = vmatmul.bf16.gmra.mxu0 %v407
    %v4006 = vpop.f32.mrf.mxu0
    %v4007 = vadd.f32 0.0, %v4006
    %v4008 = vpop.f32.mrf.mxu0
    %v4009 = vadd.f32 0.0, %v4008
    %4010 = vdwg.mxu0
    %4011 = vmatpush.bf16.msra.mxu0 0
    %4012 = vmatpush.bf16.msra.mxu0 0
    %4013 = vmatpush.bf16.msra.mxu0 0
    %4014 = vmatpush.bf16.msra.mxu0 0
    %4015 = vmatpush.bf16.msra.mxu0 0
    %4016 = vmatpush.bf16.msra.mxu0 0
    %4017 = vmatpush.bf16.msra.mxu0 %v3984
    %4018 = vmatpush.bf16.msra.mxu0 %v3981
    %4019 = vmatmul.bf16.gmra.mxu0 %v404
    %v4020 = vpop.f32.mrf.mxu0
    %v4021 = vadd.f32 0.0, %v4020
    %v4022 = vpop.f32.mrf.mxu0
    %v4023 = vadd.f32 0.0, %v4022
    %4024 = vmatmul.bf16.gmra.mxu0 %v407
    %v4025 = vpop.f32.mrf.mxu0
    %v4026 = vadd.f32 0.0, %v4025
    %v4027 = vpop.f32.mrf.mxu0
    %v4028 = vadd.f32 0.0, %v4027
    %4029 = vdwg.mxu0
    %4030 = vmatpush.bf16.msra.mxu0 0
    %4031 = vmatpush.bf16.msra.mxu0 0
    %4032 = vmatpush.bf16.msra.mxu0 0
    %4033 = vmatpush.bf16.msra.mxu0 0
    %4034 = vmatpush.bf16.msra.mxu0 0
    %4035 = vmatpush.bf16.msra.mxu0 0
    %4036 = vmatpush.bf16.msra.mxu0 %v3985
    %4037 = vmatpush.bf16.msra.mxu0 %v3982
    %4038 = vmatmul.bf16.gmra.mxu0 %v404
    %v4039 = vpop.f32.mrf.mxu0
    %v4040 = vadd.f32 0.0, %v4039
    %v4041 = vpop.f32.mrf.mxu0
    %v4042 = vadd.f32 0.0, %v4041
    %4043 = vmatmul.bf16.gmra.mxu0 %v407
    %v4044 = vpop.f32.mrf.mxu0
    %v4045 = vadd.f32 0.0, %v4044
    %v4046 = vpop.f32.mrf.mxu0
    %v4047 = vadd.f32 0.0, %v4046
    %4048 = vdwg.mxu0
    %vm4061 = vcmask 1040384
    %v4062 = vrot.slane %v4002, 7
    %v4063 = vrot.slane %v4004, 7
    %v4064 = vsel %vm4061, %v4062, %v4063
    %v4065 = vrot.slane %v4021, 7
    %v4066 = vrot.slane %v4023, 7
    %v4067 = vsel %vm4061, %v4065, %v4066
    %v4068 = vrot.slane %v4040, 7
    %v4069 = vrot.slane %v4042, 7
    %v4070 = vsel %vm4061, %v4068, %v4069
    %v4071 = vrot.slane %v4007, 7
    %v4072 = vrot.slane %v4009, 7
    %v4073 = vsel %vm4061, %v4071, %v4072
    %v4074 = vrot.slane %v4026, 7
    %v4075 = vrot.slane %v4028, 7
    %v4076 = vsel %vm4061, %v4074, %v4075
    %v4077 = vrot.slane %v4045, 7
    %v4078 = vrot.slane %v4047, 7
    %v4079 = vsel %vm4061, %v4077, %v4078
    %v4086 = vadd.f32 %v3945, %v4064
    %v4087 = vadd.f32 %v3946, %v4067
    %v4088 = vadd.f32 %v3947, %v4070
    %v4089 = vadd.f32 %v3948, %v4073
    %v4090 = vadd.f32 %v3949, %v4076
    %v4091 = vadd.f32 %v3950, %v4079
    %s4092 = scalar_lea.vmem %s19, 384
    %v4093 = vld [vmem:[%s4092] sm:$0xff]
    %v4094 = vld [vmem:[%s4092 + $0x8] sm:$0xf]
    %v4095 = vld [vmem:[%s4092 + $0xc] sm:$0xff]
    %v4096 = vld [vmem:[%s4092 + $0x14] sm:$0xf]
    %v4097 = vld [vmem:[%s4092 + $0x18] sm:$0xff]
    %v4098 = vld [vmem:[%s4092 + $0x20] sm:$0xf]
    %v4099 = vld [vmem:[%s4092 + $0x24] sm:$0xff]
    %v4100 = vld [vmem:[%s4092 + $0x2c] sm:$0xf]
    %v4109 = vunpack.c.l.b16 %v4093
    %v4110 = vunpack.c.h.b16 %v4093
    %v4111 = vunpack.c.l.b16 %v4094
    %v4112 = vunpack.c.l.b16 %v4095
    %v4113 = vunpack.c.h.b16 %v4095
    %v4114 = vunpack.c.l.b16 %v4096
    %v4115 = vunpack.c.l.b16 %v4097
    %v4116 = vunpack.c.h.b16 %v4097
    %v4117 = vunpack.c.l.b16 %v4098
    %v4118 = vunpack.c.l.b16 %v4099
    %v4119 = vunpack.c.h.b16 %v4099
    %v4120 = vunpack.c.l.b16 %v4100
    %v4121 = vpack.c.b16 %v4112, %v4109
    %v4122 = vpack.c.b16 %v4113, %v4110
    %v4123 = vpack.c.b16 %v4114, %v4111
    %v4124 = vpack.c.b16 %v4118, %v4115
    %v4125 = vpack.c.b16 %v4119, %v4116
    %v4126 = vpack.c.b16 %v4120, %v4117
    %4133 = vmatpush.bf16.msra.mxu0 0
    %4134 = vmatpush.bf16.msra.mxu0 0
    %4135 = vmatpush.bf16.msra.mxu0 0
    %4136 = vmatpush.bf16.msra.mxu0 0
    %4137 = vmatpush.bf16.msra.mxu0 0
    %4138 = vmatpush.bf16.msra.mxu0 0
    %4139 = vmatpush.bf16.msra.mxu0 %v4124
    %4140 = vmatpush.bf16.msra.mxu0 %v4121
    %4141 = vmatmul.bf16.gmra.mxu0 %v404
    %v4142 = vpop.f32.mrf.mxu0
    %v4143 = vpop.f32.mrf.mxu0
    %v4144 = vadd.f32 0.0, %v4143
    %4145 = vmatmul.bf16.gmra.mxu0 %v407
    %v4146 = vpop.f32.mrf.mxu0
    %v4147 = vpop.f32.mrf.mxu0
    %v4148 = vadd.f32 0.0, %v4147
    %4149 = vdwg.mxu0
    %4150 = vmatpush.bf16.msra.mxu0 0
    %4151 = vmatpush.bf16.msra.mxu0 0
    %4152 = vmatpush.bf16.msra.mxu0 0
    %4153 = vmatpush.bf16.msra.mxu0 0
    %4154 = vmatpush.bf16.msra.mxu0 0
    %4155 = vmatpush.bf16.msra.mxu0 0
    %4156 = vmatpush.bf16.msra.mxu0 %v4125
    %4157 = vmatpush.bf16.msra.mxu0 %v4122
    %4158 = vmatmul.bf16.gmra.mxu0 %v404
    %v4159 = vpop.f32.mrf.mxu0
    %v4160 = vpop.f32.mrf.mxu0
    %v4161 = vadd.f32 0.0, %v4160
    %4162 = vmatmul.bf16.gmra.mxu0 %v407
    %v4163 = vpop.f32.mrf.mxu0
    %v4164 = vpop.f32.mrf.mxu0
    %v4165 = vadd.f32 0.0, %v4164
    %4166 = vdwg.mxu0
    %4167 = vmatpush.bf16.msra.mxu0 0
    %4168 = vmatpush.bf16.msra.mxu0 0
    %4169 = vmatpush.bf16.msra.mxu0 0
    %4170 = vmatpush.bf16.msra.mxu0 0
    %4171 = vmatpush.bf16.msra.mxu0 0
    %4172 = vmatpush.bf16.msra.mxu0 0
    %4173 = vmatpush.bf16.msra.mxu0 %v4126
    %4174 = vmatpush.bf16.msra.mxu0 %v4123
    %4175 = vmatmul.bf16.gmra.mxu0 %v404
    %v4176 = vpop.f32.mrf.mxu0
    %v4177 = vpop.f32.mrf.mxu0
    %v4178 = vadd.f32 0.0, %v4177
    %4179 = vmatmul.bf16.gmra.mxu0 %v407
    %v4180 = vpop.f32.mrf.mxu0
    %v4181 = vpop.f32.mrf.mxu0
    %v4182 = vadd.f32 0.0, %v4181
    %4183 = vdwg.mxu0
    %v4184 = vadd.f32 %v4086, %v4144
    %v4185 = vadd.f32 %v4087, %v4161
    %v4186 = vadd.f32 %v4088, %v4178
    %v4187 = vadd.f32 %v4089, %v4148
    %v4188 = vadd.f32 %v4090, %v4165
    %v4189 = vadd.f32 %v4091, %v4182
    %s4190 = scalar_lea.vmem %s19, 432
    %v4191 = vld [vmem:[%s4190] sm:$0xff]
    %v4192 = vld [vmem:[%s4190 + $0x8] sm:$0xf]
    %v4193 = vld [vmem:[%s4190 + $0xc] sm:$0xff]
    %v4194 = vld [vmem:[%s4190 + $0x14] sm:$0xf]
    %v4195 = vld [vmem:[%s4190 + $0x18] sm:$0xff]
    %v4196 = vld [vmem:[%s4190 + $0x20] sm:$0xf]
    %v4197 = vld [vmem:[%s4190 + $0x24] sm:$0xff]
    %v4198 = vld [vmem:[%s4190 + $0x2c] sm:$0xf]
    %v4207 = vunpack.c.l.b16 %v4191
    %v4208 = vunpack.c.h.b16 %v4191
    %v4209 = vunpack.c.l.b16 %v4192
    %v4210 = vunpack.c.l.b16 %v4193
    %v4211 = vunpack.c.h.b16 %v4193
    %v4212 = vunpack.c.l.b16 %v4194
    %v4213 = vunpack.c.l.b16 %v4195
    %v4214 = vunpack.c.h.b16 %v4195
    %v4215 = vunpack.c.l.b16 %v4196
    %v4216 = vunpack.c.l.b16 %v4197
    %v4217 = vunpack.c.h.b16 %v4197
    %v4218 = vunpack.c.l.b16 %v4198
    %v4219 = vpack.c.b16 %v4210, %v4207
    %v4220 = vpack.c.b16 %v4211, %v4208
    %v4221 = vpack.c.b16 %v4212, %v4209
    %v4222 = vpack.c.b16 %v4216, %v4213
    %v4223 = vpack.c.b16 %v4217, %v4214
    %v4224 = vpack.c.b16 %v4218, %v4215
    %4231 = vmatpush.bf16.msra.mxu0 0
    %4232 = vmatpush.bf16.msra.mxu0 0
    %4233 = vmatpush.bf16.msra.mxu0 0
    %4234 = vmatpush.bf16.msra.mxu0 0
    %4235 = vmatpush.bf16.msra.mxu0 0
    %4236 = vmatpush.bf16.msra.mxu0 0
    %4237 = vmatpush.bf16.msra.mxu0 %v4222
    %4238 = vmatpush.bf16.msra.mxu0 %v4219
    %4239 = vmatmul.bf16.gmra.mxu0 %v404
    %v4240 = vpop.f32.mrf.mxu0
    %v4241 = vpop.f32.mrf.mxu0
    %v4242 = vadd.f32 0.0, %v4241
    %4243 = vmatmul.bf16.gmra.mxu0 %v407
    %v4244 = vpop.f32.mrf.mxu0
    %v4245 = vpop.f32.mrf.mxu0
    %v4246 = vadd.f32 0.0, %v4245
    %4247 = vdwg.mxu0
    %4248 = vmatpush.bf16.msra.mxu0 0
    %4249 = vmatpush.bf16.msra.mxu0 0
    %4250 = vmatpush.bf16.msra.mxu0 0
    %4251 = vmatpush.bf16.msra.mxu0 0
    %4252 = vmatpush.bf16.msra.mxu0 0
    %4253 = vmatpush.bf16.msra.mxu0 0
    %4254 = vmatpush.bf16.msra.mxu0 %v4223
    %4255 = vmatpush.bf16.msra.mxu0 %v4220
    %4256 = vmatmul.bf16.gmra.mxu0 %v404
    %v4257 = vpop.f32.mrf.mxu0
    %v4258 = vpop.f32.mrf.mxu0
    %v4259 = vadd.f32 0.0, %v4258
    %4260 = vmatmul.bf16.gmra.mxu0 %v407
    %v4261 = vpop.f32.mrf.mxu0
    %v4262 = vpop.f32.mrf.mxu0
    %v4263 = vadd.f32 0.0, %v4262
    %4264 = vdwg.mxu0
    %4265 = vmatpush.bf16.msra.mxu0 0
    %4266 = vmatpush.bf16.msra.mxu0 0
    %4267 = vmatpush.bf16.msra.mxu0 0
    %4268 = vmatpush.bf16.msra.mxu0 0
    %4269 = vmatpush.bf16.msra.mxu0 0
    %4270 = vmatpush.bf16.msra.mxu0 0
    %4271 = vmatpush.bf16.msra.mxu0 %v4224
    %4272 = vmatpush.bf16.msra.mxu0 %v4221
    %4273 = vmatmul.bf16.gmra.mxu0 %v404
    %v4274 = vpop.f32.mrf.mxu0
    %v4275 = vpop.f32.mrf.mxu0
    %v4276 = vadd.f32 0.0, %v4275
    %4277 = vmatmul.bf16.gmra.mxu0 %v407
    %v4278 = vpop.f32.mrf.mxu0
    %v4279 = vpop.f32.mrf.mxu0
    %v4280 = vadd.f32 0.0, %v4279
    %4281 = vdwg.mxu0
    %v4288 = vrot.slane %v4242, 1
    %v4289 = vrot.slane %v4259, 1
    %v4290 = vrot.slane %v4276, 1
    %v4291 = vrot.slane %v4246, 1
    %v4292 = vrot.slane %v4263, 1
    %v4293 = vrot.slane %v4280, 1
    %v4300 = vadd.f32 %v4184, %v4288
    %v4301 = vadd.f32 %v4185, %v4289
    %v4302 = vadd.f32 %v4186, %v4290
    %v4303 = vadd.f32 %v4187, %v4291
    %v4304 = vadd.f32 %v4188, %v4292
    %v4305 = vadd.f32 %v4189, %v4293
    %v4306 = vsel %vm797, %v4300, -inf
    %v4307 = vrot.slane %v4306, 4
    %v4308 = vmax.f32 %v4306, %v4307
    %v4309 = vrot.slane %v4308, 2
    %v4310 = vmax.f32 %v4308, %v4309
    %v4311 = vrot.slane %v4310, 1
    %v4312 = vmax.f32 %v4310, %v4311
    %v4313 = vsel %vm797, %v4301, -inf
    %v4314 = vrot.slane %v4313, 4
    %v4315 = vmax.f32 %v4313, %v4314
    %v4316 = vrot.slane %v4315, 2
    %v4317 = vmax.f32 %v4315, %v4316
    %v4318 = vrot.slane %v4317, 1
    %v4319 = vmax.f32 %v4317, %v4318
    %v4320 = vsel %vm857, %v4302, -inf
    %v4321 = vrot.slane %v4320, 4
    %v4322 = vmax.f32 %v4320, %v4321
    %v4323 = vrot.slane %v4322, 2
    %v4324 = vmax.f32 %v4322, %v4323
    %v4325 = vrot.slane %v4324, 1
    %v4326 = vmax.f32 %v4324, %v4325
    %v4327 = vsel %vm797, %v4303, -inf
    %v4328 = vrot.slane %v4327, 4
    %v4329 = vmax.f32 %v4327, %v4328
    %v4330 = vrot.slane %v4329, 2
    %v4331 = vmax.f32 %v4329, %v4330
    %v4332 = vrot.slane %v4331, 1
    %v4333 = vmax.f32 %v4331, %v4332
    %v4334 = vsel %vm797, %v4304, -inf
    %v4335 = vrot.slane %v4334, 4
    %v4336 = vmax.f32 %v4334, %v4335
    %v4337 = vrot.slane %v4336, 2
    %v4338 = vmax.f32 %v4336, %v4337
    %v4339 = vrot.slane %v4338, 1
    %v4340 = vmax.f32 %v4338, %v4339
    %v4341 = vsel %vm857, %v4305, -inf
    %v4342 = vrot.slane %v4341, 4
    %v4343 = vmax.f32 %v4341, %v4342
    %v4344 = vrot.slane %v4343, 2
    %v4345 = vmax.f32 %v4343, %v4344
    %v4346 = vrot.slane %v4345, 1
    %v4347 = vmax.f32 %v4345, %v4346
    %v4348 = vld [vmem:[%s20] sm:$0x7]
    %v4350 = vperm.slane %v4348, 0
    %v4351 = vperm.slane %v4348, 1
    %v4352 = vperm.slane %v4348, 2
    %v4356 = vadd.f32 %v4312, %v4350
    %v4357 = vadd.f32 %v4319, %v4351
    %v4358 = vadd.f32 %v4326, %v4352
    %v4359 = vadd.f32 %v4333, %v4350
    %v4360 = vadd.f32 %v4340, %v4351
    %v4361 = vadd.f32 %v4347, %v4352
    %v4362 = vmul.f32 %v4356, %v311
    %v4363 = vmul.f32 %v4357, %v331
    %v4364 = vmul.f32 %v4358, %v351
    %v4365 = vmul.f32 %v4359, %v529
    %v4366 = vmul.f32 %v4360, %v530
    %v4367 = vmul.f32 %v4361, %v531
    %v4368 = vpack.c.bf16 %v4362, %v4362
    %v4369 = vpack.c.bf16 %v4363, %v4363
    %v4370 = vpack.c.bf16 %v4364, %v4364
    %v4371 = vpack.c.bf16 %v4365, %v4365
    %v4372 = vpack.c.bf16 %v4366, %v4366
    %v4373 = vpack.c.bf16 %v4367, %v4367
    %v4374 = vld [vmem:[%s21] sm:$0xf]
    %v4375 = vld [vmem:[%s21 + $0x4] sm:$0xf]
    %v4376 = vld [vmem:[%s21 + $0x8] sm:$0xf]
    %v4377 = vld [vmem:[%s21 + $0xc] sm:$0xf]
    %v4378 = vld [vmem:[%s21 + $0x10] sm:$0xf]
    %v4379 = vld [vmem:[%s21 + $0x14] sm:$0xf]
    %v4380 = vld [vmem:[%s21 + $0x18] sm:$0xf]
    %v4381 = vld [vmem:[%s21 + $0x1c] sm:$0xf]
    %v4382 = vld [vmem:[%s21 + $0x20] sm:$0xf]
    %v4383 = vld [vmem:[%s21 + $0x24] sm:$0xf]
    %v4384 = vld [vmem:[%s21 + $0x28] sm:$0xf]
    %v4385 = vld [vmem:[%s21 + $0x2c] sm:$0xf]
    %v4386 = vld [vmem:[%s21 + $0x30] sm:$0xf]
    %v4387 = vld [vmem:[%s21 + $0x34] sm:$0xf]
    %v4388 = vld [vmem:[%s21 + $0x38] sm:$0xf]
    %v4389 = vld [vmem:[%s21 + $0x3c] sm:$0xf]
    %v4390 = vld [vmem:[%s21 + $0x40] sm:$0xf]
    %v4391 = vld [vmem:[%s21 + $0x44] sm:$0xf]
    %v4392 = vld [vmem:[%s21 + $0x48] sm:$0xf]
    %v4393 = vld [vmem:[%s21 + $0x4c] sm:$0xf]
    %v4394 = vld [vmem:[%s21 + $0x50] sm:$0xf]
    %v4395 = vld [vmem:[%s21 + $0x54] sm:$0xf]
    %v4396 = vld [vmem:[%s21 + $0x58] sm:$0xf]
    %v4397 = vld [vmem:[%s21 + $0x5c] sm:$0xf]
    %v4398 = vld [vmem:[%s21 + $0x60] sm:$0xf]
    %v4399 = vld [vmem:[%s21 + $0x64] sm:$0xf]
    %v4400 = vld [vmem:[%s21 + $0x68] sm:$0xf]
    %v4401 = vld [vmem:[%s21 + $0x6c] sm:$0xf]
    %v4402 = vld [vmem:[%s21 + $0x70] sm:$0xf]
    %v4403 = vld [vmem:[%s21 + $0x74] sm:$0xf]
    %v4404 = vld [vmem:[%s21 + $0x78] sm:$0xf]
    %v4405 = vld [vmem:[%s21 + $0x7c] sm:$0xf]
    %v4406 = vld [vmem:[%s21 + $0x80] sm:$0xf]
    %v4407 = vld [vmem:[%s21 + $0x84] sm:$0xf]
    %v4408 = vld [vmem:[%s21 + $0x88] sm:$0xf]
    %v4409 = vld [vmem:[%s21 + $0x8c] sm:$0xf]
    %v4410 = vld [vmem:[%s21 + $0x90] sm:$0xf]
    %v4411 = vld [vmem:[%s21 + $0x94] sm:$0xf]
    %v4412 = vld [vmem:[%s21 + $0x98] sm:$0xf]
    %v4413 = vld [vmem:[%s21 + $0x9c] sm:$0xf]
    %v4420 = vunpack.c.l.b16 %v4368
    %v4421 = vunpack.c.l.b16 %v4369
    %v4422 = vunpack.c.l.b16 %v4370
    %v4423 = vunpack.c.l.b16 %v4371
    %v4424 = vunpack.c.l.b16 %v4372
    %v4425 = vunpack.c.l.b16 %v4373
    %v4426 = vrot.slane %v4423, 7
    %v4427 = vsel %vm970, %v4426, %v4420
    %v4428 = vrot.slane %v4424, 7
    %v4429 = vsel %vm970, %v4428, %v4421
    %v4430 = vrot.slane %v4425, 7
    %v4431 = vsel %vm970, %v4430, %v4422
    %v4432 = vpack.c.b16 %v4427, %v4427
    %v4433 = vpack.c.b16 %v4429, %v4429
    %v4434 = vpack.c.b16 %v4431, %v4431
    %v4477 = vunpack.c.l.b16 %v4374
    %v4478 = vunpack.c.l.b16 %v4375
    %v4479 = vunpack.c.l.b16 %v4376
    %v4480 = vunpack.c.l.b16 %v4377
    %v4481 = vunpack.c.l.b16 %v4378
    %v4482 = vunpack.c.l.b16 %v4379
    %v4483 = vunpack.c.l.b16 %v4380
    %v4484 = vunpack.c.l.b16 %v4381
    %v4485 = vunpack.c.l.b16 %v4382
    %v4486 = vunpack.c.l.b16 %v4383
    %v4487 = vunpack.c.l.b16 %v4384
    %v4488 = vunpack.c.l.b16 %v4385
    %v4489 = vunpack.c.l.b16 %v4386
    %v4490 = vunpack.c.l.b16 %v4387
    %v4491 = vunpack.c.l.b16 %v4388
    %v4492 = vunpack.c.l.b16 %v4389
    %v4493 = vunpack.c.l.b16 %v4390
    %v4494 = vunpack.c.l.b16 %v4391
    %v4495 = vunpack.c.l.b16 %v4392
    %v4496 = vunpack.c.l.b16 %v4393
    %v4497 = vunpack.c.l.b16 %v4394
    %v4498 = vunpack.c.l.b16 %v4395
    %v4499 = vunpack.c.l.b16 %v4396
    %v4500 = vunpack.c.l.b16 %v4397
    %v4501 = vunpack.c.l.b16 %v4398
    %v4502 = vunpack.c.l.b16 %v4399
    %v4503 = vunpack.c.l.b16 %v4400
    %v4504 = vunpack.c.l.b16 %v4401
    %v4505 = vunpack.c.l.b16 %v4402
    %v4506 = vunpack.c.l.b16 %v4403
    %v4507 = vunpack.c.l.b16 %v4404
    %v4508 = vunpack.c.l.b16 %v4405
    %v4509 = vunpack.c.l.b16 %v4406
    %v4510 = vunpack.c.l.b16 %v4407
    %v4511 = vunpack.c.l.b16 %v4408
    %v4512 = vunpack.c.l.b16 %v4409
    %v4513 = vunpack.c.l.b16 %v4410
    %v4514 = vunpack.c.l.b16 %v4411
    %v4515 = vunpack.c.l.b16 %v4412
    %v4516 = vunpack.c.l.b16 %v4413
    %v4517 = vpack.c.b16 %v4478, %v4477
    %v4518 = vpack.c.b16 %v4480, %v4479
    %v4519 = vpack.c.b16 %v4482, %v4481
    %v4520 = vpack.c.b16 %v4484, %v4483
    %v4521 = vpack.c.b16 %v4486, %v4485
    %v4522 = vpack.c.b16 %v4488, %v4487
    %v4523 = vpack.c.b16 %v4490, %v4489
    %v4524 = vpack.c.b16 %v4492, %v4491
    %v4525 = vpack.c.b16 %v4494, %v4493
    %v4526 = vpack.c.b16 %v4496, %v4495
    %v4527 = vpack.c.b16 %v4498, %v4497
    %v4528 = vpack.c.b16 %v4500, %v4499
    %v4529 = vpack.c.b16 %v4502, %v4501
    %v4530 = vpack.c.b16 %v4504, %v4503
    %v4531 = vpack.c.b16 %v4506, %v4505
    %v4532 = vpack.c.b16 %v4508, %v4507
    %v4533 = vpack.c.b16 %v4510, %v4509
    %v4534 = vpack.c.b16 %v4512, %v4511
    %v4535 = vpack.c.b16 %v4514, %v4513
    %v4536 = vpack.c.b16 %v4516, %v4515
    %v4558 = vsel %vm227, %v4434, 0
    %4560 = vmatpush.bf16.msra.mxu0 %v4524
    %4561 = vmatpush.bf16.msra.mxu0 %v4523
    %4562 = vmatpush.bf16.msra.mxu0 %v4522
    %4563 = vmatpush.bf16.msra.mxu0 %v4521
    %4564 = vmatpush.bf16.msra.mxu0 %v4520
    %4565 = vmatpush.bf16.msra.mxu0 %v4519
    %4566 = vmatpush.bf16.msra.mxu0 %v4518
    %4567 = vmatpush.bf16.msra.mxu0 %v4517
    %4568 = vmatmul.bf16.gmra.mxu0 %v4432
    %v4569 = vpop.f32.mrf.mxu0
    %v4570 = vadd.f32 0.0, %v4569
    %v4571 = vpop.f32.mrf.mxu0
    %4572 = vdwg.mxu0
    %4573 = vmatpush.bf16.msra.mxu0 %v4532
    %4574 = vmatpush.bf16.msra.mxu0 %v4531
    %4575 = vmatpush.bf16.msra.mxu0 %v4530
    %4576 = vmatpush.bf16.msra.mxu0 %v4529
    %4577 = vmatpush.bf16.msra.mxu0 %v4528
    %4578 = vmatpush.bf16.msra.mxu0 %v4527
    %4579 = vmatpush.bf16.msra.mxu0 %v4526
    %4580 = vmatpush.bf16.msra.mxu0 %v4525
    %4581 = vmatmul.bf16.gmra.mxu0 %v4433
    %v4582 = vpop.f32.mrf.mxu0
    %v4583 = vadd.f32 %v4570, %v4582
    %v4584 = vpop.f32.mrf.mxu0
    %4585 = vdwg.mxu0
    %4586 = vmatpush.bf16.msra.mxu0 0
    %4587 = vmatpush.bf16.msra.mxu0 0
    %4588 = vmatpush.bf16.msra.mxu0 0
    %4589 = vmatpush.bf16.msra.mxu0 0
    %4590 = vmatpush.bf16.msra.mxu0 %v4536
    %4591 = vmatpush.bf16.msra.mxu0 %v4535
    %4592 = vmatpush.bf16.msra.mxu0 %v4534
    %4593 = vmatpush.bf16.msra.mxu0 %v4533
    %4594 = vmatmul.bf16.gmra.mxu0 %v4558
    %v4595 = vpop.f32.mrf.mxu0
    %v4596 = vadd.f32 %v4583, %v4595
    %v4597 = vpop.f32.mrf.mxu0
    %4598 = vdwg.mxu0
    %v4599 = vadd.f32 %v3041, %v4596
    %v4600 = vld [vmem:[%s22] sm:$0x1]
    %v4602 = vperm.slane %v4600, 0
    %v4604 = vadd.f32 %v4599, %v4602
    %v4605 = vld [vmem:[%s23] sm:$0x1]
    %v4607 = vperm.slane %v4605, 0
    %v4609 = vmul.f32 %v4604, %v4607
    %v4610 = vld [vmem:[%s24] sm:$0x1]
    %v4612 = vperm.slane %v4610, 0
    %v4614 = vadd.f32 %v4609, %v4612
    %v4615 = vmax.f32 %v4614, 0.0
    %v4616 = vld [vmem:[%s25] sm:$0x1]
    %v4618 = vperm.slane %v4616, 0
    %v4620 = vmul.f32 %v4615, %v4618
    %vm4621 = vcmask 517120
    %v4622 = vsel %vm4621, %v4620, 0.0
    %4623 = vadd.xlane.f32.xlu0 %v4622
    %v4624 = vpop.xlane.xlu0 %4623
    %v4625 = vld [vmem:[#allocation2] sm:$0x1]
    %v4627 = vperm.slane %v4625, 0
    %v4629 = vadd.f32 %v4624, %v4627
    %v4630 = vxor.u32 %v4629, 2147483648
    %v4631 = vmul.f32 %v4630, 1.442695
    %v4632 = vpow.pop %v4631
    %v4633 = vadd.f32 %v4632, 1.0
    %v4634 = vrcp.pop %v4633
    %v4635 = vmul.f32 %v4633, %v4634
    %v4636 = vsub.f32 1.0, %v4635
    %v4637 = vmul.f32 %v4634, %v4636
    %v4638 = vadd.f32 %v4634, %v4637
    %vm4639 = vweird.f32 %v4633
    %vm4640 = vweird.f32 %v4634
    %vm4641 = vmor %vm4639, %vm4640
    %v4642 = vsel %vm4641, %v4634, %v4638
    %v4643 = vand.u32 2147483647, %v4633
    %vm4644 = vcmp.eq.f32.partialorder %v4643, 8.507059e+37
    %v4645 = vand.u32 %v4633, 2147483648
    %v4646 = vor.u32 1.1754944e-38, %v4645
    %v4647 = vsel %vm4644, %v4646, %v4642
    %v4648 = vmul.f32 1.0, %v4647
    %vm4649 = vcmask 1024
    %4650 = vst.msk [vmem:[%s27] sm:$0x3] %vm4649, %v4648
    // Predicated region
    $region134: #{tpu_custom_call.1} parent=1 // pred_check
      _
    $region135: #{tpu_custom_call.1} parent=1 // pred_check_branch
      %4652 = sbr.rel (0) target = $region137
    $region136: #{tpu_custom_call.1} parent=1 // pred_region
      _
    $region137: #{tpu_custom_call.1} parent=1 // pred_fallthru
      _
    // Predicated region
    $region138: #{tpu_custom_call.1} parent=1 // pred_check
      _
    $region139: #{tpu_custom_call.1} parent=1 // pred_check_branch
      %4654 = sbr.rel (0) target = $region141
    $region140: #{tpu_custom_call.1} parent=1 // pred_region
      _
    $region141: #{tpu_custom_call.1} parent=1 // pred_fallthru
      _
    %4655 = vsyncpa [#allocation4], 1
    %4656 = vsyncpa [#allocation6], 1
    %4657 = vsyncpa [#allocation9], 1
    %4658 = vsyncpa [#allocation12], 1

</llo_original>
